<compile_context>
chip_gen: v6e
topology: v6e:2x2x1
jax: 0.10.0
libtpu: 0.0.40
codegen_flags: <defaults>
</compile_context>

<pallas_src>
import functools

import jax
import jax.numpy as jnp
from jax import lax
from jax.experimental import pallas as pl
from jax.experimental.pallas import tpu as pltpu


def _round_up(x, m):
    return ((x + m - 1) // m) * m


# ---------------------------------------------------------------------------
# Fused encoder + decoder kernel (single invocation, no grid).
# ---------------------------------------------------------------------------
def seq2seq_kernel(src_oh_ref, tgt_oh_ref, tf_ref, w_ref, b_ref,
                   out_ref, enc_pre_ref, dec_pre_ref,
                   *, V, H, Gp, Vp, rows):
    f32, bf16 = jnp.float32, jnp.bfloat16
    Tsrc, Bp, _ = enc_pre_ref.shape
    T = out_ref.shape[0]
    C = Gp + Vp
    rA, rB, rC, rD, rE = rows  # enc_table, enc_whh, dec_table, dec_ctx_w, dec_whhfc

    # Loop-invariant iotas (JAX does not CSE broadcast_in_dim -> hoist once).
    onehot_iota = lax.broadcasted_iota(jnp.int32, (Bp, V), 1).astype(f32)
    argmax_iota = lax.broadcasted_iota(jnp.int32, (Bp, Vp), 1).astype(f32)

    def gru_gates(gi, gh, h_prev):
        # Merged r/z sigmoid: one EUP launch over the contiguous [0, 2H) lanes.
        rz = jax.nn.sigmoid(gi[:, 0:2 * H] + gh[:, 0:2 * H])
        r = rz[:, 0:H]
        z = rz[:, H:2 * H]
        n = jnp.tanh(gi[:, 2 * H:3 * H] + r * gh[:, 2 * H:3 * H])
        return (1.0 - z) * n + z * h_prev

    # ------------------- encoder -------------------------------------------
    # Batched input-side matmul for ALL source steps (off the serial chain).
    enc_tab = w_ref[rA:rA + V, 0:Gp]                       # (V, Gp) bf16
    enc_gi = jnp.dot(src_oh_ref[...], enc_tab,
                     preferred_element_type=f32) + b_ref[0:1, 0:Gp]  # + enc b_ih
    enc_pre_ref[...] = enc_gi.reshape(Tsrc, Bp, Gp)

    enc_whh = w_ref[rB:rB + H, 0:Gp]                       # (H, Gp) bf16
    enc_bhh = b_ref[1:2, 0:Gp]

    h = jnp.zeros((Bp, H), f32)
    for t in range(Tsrc):                                  # static, unrolled
        gi = enc_pre_ref[t]                                # (Bp, Gp), b_ih included
        gh = jnp.dot(h.astype(bf16), enc_whh,
                     preferred_element_type=f32) + enc_bhh
        h = gru_gates(gi, gh, h)

    # ------------------- decoder warm-up ------------------------------------
    ctx = h                                                # context == final enc hidden
    ctx_bf = ctx.astype(bf16)
    dec_tab = w_ref[rC:rC + V, :]                          # (V, C)  [emb@W_ih_e | emb@fcW_e]
    dec_ctx_w = w_ref[rD:rD + H, :]                        # (H, C)  [W_ih_c    | fcW_c   ]
    dec_whhfc = w_ref[rE:rE + H, :]                        # (H, C)  [W_hh      | fcW_h   ]
    dec_bhh = b_ref[2:3, 0:Gp]

    # Loop-invariant context contributions + (dec b_ih | fc bias) in one row.
    bias_cat = jnp.dot(ctx_bf, dec_ctx_w,
                       preferred_element_type=f32) + b_ref[3:4, :]     # (Bp, C)

    # Batched token-side matmul for all teacher-forced decoder inputs.
    tgt_fused = jnp.dot(tgt_oh_ref[...], dec_tab, preferred_element_type=f32)
    dec_pre_ref[...] = tgt_fused.reshape(T, Bp, C) + bias_cat[None]

    # Warm-up: hidden-side gates for step 0 (fc half of this matmul is unused).
    fused_h = jnp.dot(ctx_bf, dec_whhfc, preferred_element_type=f32)
    gh = fused_h[:, 0:Gp] + dec_bhh

    # ------------------- decoder loop ----------------------------------------
    h_dec = ctx
    for t in range(T):                                     # static, unrolled
        fused_tok = dec_pre_ref[t]                         # (Bp, C): [gates+bias | fc+bias]
        h_dec = gru_gates(fused_tok[:, 0:Gp], gh, h_dec)

        # ONE 256-wide matmul on h_dec: this step's logits + next step's gh.
        fused_h = jnp.dot(h_dec.astype(bf16), dec_whhfc,
                          preferred_element_type=f32)      # (Bp, C)
        pred = fused_tok[:, Gp:C] + fused_h[:, Gp:C]       # (Bp, Vp)
        out_ref[t] = pred                                  # full (8,128) tile store
        gh = fused_h[:, 0:Gp] + dec_bhh

        if t + 1 < T:
            @pl.when(tf_ref[t] == 0)
            def _():
                # Greedy feedback only when teacher forcing is off: overwrite
                # the precomputed row for step t+1 (padded cols hold -1e30).
                maxv = jnp.max(pred, axis=1, keepdims=True)
                top1 = jnp.min(jnp.where(pred == maxv, argmax_iota, float(Vp)),
                               axis=1, keepdims=True)      # (Bp, 1) f32
                oh = (onehot_iota == top1).astype(f32).astype(bf16)
                nxt = jnp.dot(oh, dec_tab,
                              preferred_element_type=f32) + bias_cat
                dec_pre_ref[t + 1] = nxt


# ---------------------------------------------------------------------------
# Wrapper: weight folding / packing, one-hot layout, teacher-forcing flags.
# ---------------------------------------------------------------------------
def _pad_to(w, rows, cols):
    return jnp.pad(w, ((0, rows - w.shape[0]), (0, cols - w.shape[1])))


def _prepare_weights(params, Gp, Vp):
    f32, bf16 = jnp.float32, jnp.bfloat16
    V, _ = params["enc_emb"].shape
    H = params["enc_whh"].shape[0]
    C = Gp + Vp
    Vr = _round_up(V, 16)      # keep bf16 row-block starts 16-sublane aligned
    Hr = _round_up(H, 16)

    enc_table = params["enc_emb"] @ params["enc_wih"]        # (V, 3H)
    dec_tab_g = params["dec_emb"] @ params["dec_wih_e"]      # (V, 3H)
    dec_tab_f = params["dec_emb"] @ params["dec_fcw_e"]      # (V, V)

    blocks = [
        _pad_to(enc_table, Vr, C),                                          # rA
        _pad_to(params["enc_whh"], Hr, C),                                  # rB
        jnp.concatenate([_pad_to(dec_tab_g, Vr, Gp),
                         _pad_to(dec_tab_f, Vr, Vp)], axis=1),              # rC
        jnp.concatenate([_pad_to(params["dec_wih_c"], Hr, Gp),
                         _pad_to(params["dec_fcw_c"], Hr, Vp)], axis=1),    # rD
        jnp.concatenate([_pad_to(params["dec_whh"], Hr, Gp),
                         _pad_to(params["dec_fcw_h"], Hr, Vp)], axis=1),    # rE
    ]
    w_slab = jnp.concatenate(blocks, axis=0).astype(bf16)    # (2Vr+3Hr, C)
    rows = (0, Vr, Vr + Hr, 2 * Vr + Hr, 2 * Vr + 2 * Hr)

    # Bias slab (8, C) f32. Padded vocab columns of the fc bias are -1e30 so
    # the in-kernel argmax never selects them.
    fcb = jnp.full((1, Vp), -1e30, f32).at[:, :V].set(params["dec_fcb"])
    zero_v = jnp.zeros((1, Vp), f32)
    b_rows = jnp.concatenate([
        jnp.concatenate([_pad_to(params["enc_bih"], 1, Gp), zero_v], axis=1),
        jnp.concatenate([_pad_to(params["enc_bhh"], 1, Gp), zero_v], axis=1),
        jnp.concatenate([_pad_to(params["dec_bhh"], 1, Gp), zero_v], axis=1),
        jnp.concatenate([_pad_to(params["dec_bih"], 1, Gp), fcb], axis=1),
    ], axis=0)
    b_slab = jnp.pad(b_rows, ((0, 4), (0, 0))).astype(f32)   # (8, C)
    return w_slab, b_slab, rows


def _onehot_time_major(tokens, Bp, V):
    """(B, L) int tokens -> (L*Bp, V) bf16 one-hots, time-major, batch padded."""
    B, L = tokens.shape
    tm = jnp.transpose(tokens.astype(jnp.int32), (1, 0))     # (L, B)
    tm = jnp.pad(tm, ((0, 0), (0, Bp - B)))
    oh = jax.nn.one_hot(tm, V, dtype=jnp.bfloat16)           # (L, Bp, V)
    return oh.reshape(L * Bp, V)


@jax.jit
def seq2seq_forward(params, source, target, teacher_forcing_ratio, tf_key):
    """source, target: (B, T+1) int tokens. Returns logits (B, V, T)."""
    B, Tp1 = source.shape
    T = Tp1 - 1
    Tsrc = Tp1
    V = params["enc_emb"].shape[0]
    H = params["enc_whh"].shape[0]

    Bp = _round_up(max(B, 8), 8)               # sublane-full batch
    Gp = _round_up(max(3 * H, 128), 128)       # lane-full gate width
    Vp = _round_up(max(V, 128), 128)           # lane-full vocab width
    C = Gp + Vp

    w_slab, b_slab, rows = _prepare_weights(params, Gp, Vp)
    src_oh = _onehot_time_major(source, Bp, V)               # (Tsrc*Bp, V)
    tgt_oh = _onehot_time_major(target[:, :T], Bp, V)        # (T*Bp, V)
    # TODO(synk): PyTorch draws random.random() on the host per step; here the
    # per-step Bernoulli teacher-forcing flags are drawn with jax.random instead.
    tf_flags = (jax.random.uniform(tf_key, (T,)) < teacher_forcing_ratio).astype(jnp.int32)

    kernel = functools.partial(seq2seq_kernel, V=V, H=H, Gp=Gp, Vp=Vp, rows=rows)
    vmem = pl.BlockSpec(memory_space=pltpu.MemorySpace.VMEM)
    smem = pl.BlockSpec(memory_space=pltpu.MemorySpace.SMEM)

    out = pl.pallas_call(
        kernel,
        out_shape=jax.ShapeDtypeStruct((T, Bp, Vp), jnp.float32),
        in_specs=[vmem, vmem, smem, vmem, vmem],
        out_specs=vmem,
        scratch_shapes=[pltpu.VMEM((Tsrc, Bp, Gp), jnp.float32),
                        pltpu.VMEM((T, Bp, C), jnp.float32)],
    )(src_oh, tgt_oh, tf_flags, w_slab, b_slab)

    # (T, Bp, Vp) time-major, padded  ->  (B, V, T) PyTorch convention.
    return jnp.transpose(out[:, :B, :V], (1, 2, 0))


# ---------------------------------------------------------------------------
# Parameters in the (in_dim, out_dim) pre-transposed layout; gate order [r|z|n].
# ---------------------------------------------------------------------------
def init_params(key, V=32, E=16, H=32):
    ks = jax.random.split(key, 15)
    s = 0.1
    n = lambda k, shp: (s * jax.random.normal(k, shp)).astype(jnp.float32)
    return {
        # encoder: Embedding(V,E) + GRU(E,H)
        "enc_emb": n(ks[0], (V, E)),
        "enc_wih": n(ks[1], (E, 3 * H)),
        "enc_whh": n(ks[2], (H, 3 * H)),
        "enc_bih": n(ks[3], (1, 3 * H)),
        "enc_bhh": n(ks[4], (1, 3 * H)),
        # decoder: Embedding(V,E) + GRU(E+H, H) + Linear(E+2H, V)
        "dec_emb": n(ks[5], (V, E)),
        "dec_wih_e": n(ks[6], (E, 3 * H)),   # input-weight split: embedded part
        "dec_wih_c": n(ks[7], (H, 3 * H)),   #                     context part
        "dec_whh": n(ks[8], (H, 3 * H)),
        "dec_bih": n(ks[9], (1, 3 * H)),
        "dec_bhh": n(ks[10], (1, 3 * H)),
        "dec_fcw_e": n(ks[11], (E, V)),      # fc_out split: embedded / hidden / context
        "dec_fcw_h": n(ks[12], (H, V)),
        "dec_fcw_c": n(ks[13], (H, V)),
        "dec_fcb": n(ks[14], (1, V)),
    }


if __name__ == "__main__":
    key = jax.random.PRNGKey(0)
    kp, ksrc, ktgt, ktf = jax.random.split(key, 4)

    B, T, V, E, H = 2, 8, 32, 16, 32
    params = init_params(kp, V=V, E=E, H=H)
    source = jax.random.randint(ksrc, (B, T + 1), 0, V, dtype=jnp.int32)
    target = jax.random.randint(ktgt, (B, T + 1), 0, V, dtype=jnp.int32)

    outputs = seq2seq_forward(params, source, target, 0.5, ktf)
    outputs = jax.block_until_ready(outputs)
    assert outputs.shape == (B, V, T), outputs.shape
    assert outputs.dtype == jnp.float32
    assert bool(jnp.all(jnp.isfinite(outputs)))

    print("KERNEL_OK")
</pallas_src>

<mosaic_0001>
module attributes {stable_mosaic.version = 11 : i64} {
  func.func @seq2seq_kernel(%arg0: memref<72x32xbf16, #tpu.memory_space<vmem>>, %arg1: memref<64x32xbf16, #tpu.memory_space<vmem>>, %arg2: memref<8xi32, #tpu.memory_space<smem>>, %arg3: memref<160x256xbf16, #tpu.memory_space<vmem>>, %arg4: memref<8x256xf32, #tpu.memory_space<vmem>>, %arg5: memref<8x8x128xf32, #tpu.memory_space<vmem>>, %arg6: memref<9x8x128xf32, #tpu.memory_space<vmem>>, %arg7: memref<8x8x256xf32, #tpu.memory_space<vmem>>) attributes {dimension_semantics = [], scalar_prefetch = 0 : i64, scratch_operands = 2 : i64, tpu.core_type = #tpu.core_type<tc>} {
    %0 = tpu.iota {dimensions = array<i32: 1>} : vector<8x32xi32>
    %1 = arith.sitofp %0 : vector<8x32xi32> to vector<8x32xf32>
    %2 = tpu.iota {dimensions = array<i32: 1>} : vector<8x128xi32>
    %3 = arith.sitofp %2 : vector<8x128xi32> to vector<8x128xf32>
    %c0 = arith.constant 0 : index
    %c0_0 = arith.constant 0 : index
    %4 = vector.load %arg3[%c0, %c0_0] : memref<160x256xbf16, #tpu.memory_space<vmem>>, vector<32x128xbf16>
    %c0_1 = arith.constant 0 : index
    %c0_2 = arith.constant 0 : index
    %5 = vector.load %arg0[%c0_1, %c0_2] : memref<72x32xbf16, #tpu.memory_space<vmem>>, vector<72x32xbf16>
    %cst = arith.constant dense<0.000000e+00> : vector<72x128xf32>
    %6 = tpu.matmul %5, %4, %cst {dimension_numbers = #tpu.dot_dimension_numbers<[1], [0], [0], [1], [0, 0, 1, 1], [], []>} : vector<72x32xbf16>, vector<32x128xbf16>, vector<72x128xf32> -> vector<72x128xf32>
    %c0_3 = arith.constant 0 : index
    %c0_4 = arith.constant 0 : index
    %7 = vector.load %arg4[%c0_3, %c0_4] : memref<8x256xf32, #tpu.memory_space<vmem>>, vector<1x128xf32>
    %8 = vector.broadcast %7 : vector<1x128xf32> to vector<72x128xf32>
    %9 = arith.addf %6, %8 : vector<72x128xf32>
    %10 = vector.shape_cast %9 : vector<72x128xf32> to vector<9x8x128xf32>
    %c0_5 = arith.constant 0 : index
    %c0_6 = arith.constant 0 : index
    %c0_7 = arith.constant 0 : index
    %11 = vector.load %arg6[%c0_5, %c0_6, %c0_7] : memref<9x8x128xf32, #tpu.memory_space<vmem>>, vector<9x8x128xf32>
    tpu.vector_store %arg6[%c0_5, %c0_6, %c0_7], %10 {strides = array<i32>} : memref<9x8x128xf32, #tpu.memory_space<vmem>>, vector<9x8x128xf32>,
    %c32 = arith.constant 32 : index
    %c0_8 = arith.constant 0 : index
    %12 = vector.load %arg3[%c32, %c0_8] : memref<160x256xbf16, #tpu.memory_space<vmem>>, vector<32x128xbf16>
    %c1 = arith.constant 1 : index
    %c0_9 = arith.constant 0 : index
    %13 = vector.load %arg4[%c1, %c0_9] : memref<8x256xf32, #tpu.memory_space<vmem>>, vector<1x128xf32>
    %cst_10 = arith.constant 0.000000e+00 : f32
    %14 = vector.broadcast %cst_10 : f32 to vector<8x32xf32>
    %c0_11 = arith.constant 0 : index
    %c0_12 = arith.constant 0 : index
    %c0_13 = arith.constant 0 : index
    %15 = vector.load %arg6[%c0_11, %c0_12, %c0_13] : memref<9x8x128xf32, #tpu.memory_space<vmem>>, vector<1x8x128xf32>
    %16 = vector.shape_cast %15 : vector<1x8x128xf32> to vector<8x128xf32>
    %17 = arith.truncf %14 : vector<8x32xf32> to vector<8x32xbf16>
    %cst_14 = arith.constant dense<0.000000e+00> : vector<8x128xf32>
    %18 = tpu.matmul %17, %12, %cst_14 {dimension_numbers = #tpu.dot_dimension_numbers<[1], [0], [0], [1], [0, 0, 1, 1], [], []>} : vector<8x32xbf16>, vector<32x128xbf16>, vector<8x128xf32> -> vector<8x128xf32>
    %19 = vector.broadcast %13 : vector<1x128xf32> to vector<8x128xf32>
    %20 = arith.addf %18, %19 : vector<8x128xf32>
    %21 = vector.extract_strided_slice %16 {offsets = [0, 0], sizes = [8, 64], strides = [1, 1]} : vector<8x128xf32> to vector<8x64xf32>
    %22 = vector.extract_strided_slice %20 {offsets = [0, 0], sizes = [8, 64], strides = [1, 1]} : vector<8x128xf32> to vector<8x64xf32>
    %23 = arith.addf %21, %22 : vector<8x64xf32>
    %24 = arith.negf %23 : vector<8x64xf32>
    %25 = math.exp %24 : vector<8x64xf32>
    %cst_15 = arith.constant 1.000000e+00 : f32
    %26 = vector.broadcast %cst_15 : f32 to vector<8x64xf32>
    %27 = arith.addf %26, %25 : vector<8x64xf32>
    %28 = arith.divf %26, %27 : vector<8x64xf32>
    %29 = vector.extract_strided_slice %28 {offsets = [0, 0], sizes = [8, 32], strides = [1, 1]} : vector<8x64xf32> to vector<8x32xf32>
    %30 = vector.extract_strided_slice %28 {offsets = [0, 32], sizes = [8, 32], strides = [1, 1]} : vector<8x64xf32> to vector<8x32xf32>
    %31 = vector.extract_strided_slice %16 {offsets = [0, 64], sizes = [8, 32], strides = [1, 1]} : vector<8x128xf32> to vector<8x32xf32>
    %32 = vector.extract_strided_slice %20 {offsets = [0, 64], sizes = [8, 32], strides = [1, 1]} : vector<8x128xf32> to vector<8x32xf32>
    %33 = arith.mulf %29, %32 : vector<8x32xf32>
    %34 = arith.addf %31, %33 : vector<8x32xf32>
    %35 = math.tanh %34 : vector<8x32xf32>
    %cst_16 = arith.constant 1.000000e+00 : f32
    %36 = vector.broadcast %cst_16 : f32 to vector<8x32xf32>
    %37 = arith.subf %36, %30 : vector<8x32xf32>
    %38 = arith.mulf %37, %35 : vector<8x32xf32>
    %39 = arith.mulf %30, %14 : vector<8x32xf32>
    %40 = arith.addf %38, %39 : vector<8x32xf32>
    %c1_17 = arith.constant 1 : index
    %c0_18 = arith.constant 0 : index
    %c0_19 = arith.constant 0 : index
    %41 = vector.load %arg6[%c1_17, %c0_18, %c0_19] : memref<9x8x128xf32, #tpu.memory_space<vmem>>, vector<1x8x128xf32>
    %42 = vector.shape_cast %41 : vector<1x8x128xf32> to vector<8x128xf32>
    %43 = arith.truncf %40 : vector<8x32xf32> to vector<8x32xbf16>
    %cst_20 = arith.constant dense<0.000000e+00> : vector<8x128xf32>
    %44 = tpu.matmul %43, %12, %cst_20 {dimension_numbers = #tpu.dot_dimension_numbers<[1], [0], [0], [1], [0, 0, 1, 1], [], []>} : vector<8x32xbf16>, vector<32x128xbf16>, vector<8x128xf32> -> vector<8x128xf32>
    %45 = vector.broadcast %13 : vector<1x128xf32> to vector<8x128xf32>
    %46 = arith.addf %44, %45 : vector<8x128xf32>
    %47 = vector.extract_strided_slice %42 {offsets = [0, 0], sizes = [8, 64], strides = [1, 1]} : vector<8x128xf32> to vector<8x64xf32>
    %48 = vector.extract_strided_slice %46 {offsets = [0, 0], sizes = [8, 64], strides = [1, 1]} : vector<8x128xf32> to vector<8x64xf32>
    %49 = arith.addf %47, %48 : vector<8x64xf32>
    %50 = arith.negf %49 : vector<8x64xf32>
    %51 = math.exp %50 : vector<8x64xf32>
    %cst_21 = arith.constant 1.000000e+00 : f32
    %52 = vector.broadcast %cst_21 : f32 to vector<8x64xf32>
    %53 = arith.addf %52, %51 : vector<8x64xf32>
    %54 = arith.divf %52, %53 : vector<8x64xf32>
    %55 = vector.extract_strided_slice %54 {offsets = [0, 0], sizes = [8, 32], strides = [1, 1]} : vector<8x64xf32> to vector<8x32xf32>
    %56 = vector.extract_strided_slice %54 {offsets = [0, 32], sizes = [8, 32], strides = [1, 1]} : vector<8x64xf32> to vector<8x32xf32>
    %57 = vector.extract_strided_slice %42 {offsets = [0, 64], sizes = [8, 32], strides = [1, 1]} : vector<8x128xf32> to vector<8x32xf32>
    %58 = vector.extract_strided_slice %46 {offsets = [0, 64], sizes = [8, 32], strides = [1, 1]} : vector<8x128xf32> to vector<8x32xf32>
    %59 = arith.mulf %55, %58 : vector<8x32xf32>
    %60 = arith.addf %57, %59 : vector<8x32xf32>
    %61 = math.tanh %60 : vector<8x32xf32>
    %cst_22 = arith.constant 1.000000e+00 : f32
    %62 = vector.broadcast %cst_22 : f32 to vector<8x32xf32>
    %63 = arith.subf %62, %56 : vector<8x32xf32>
    %64 = arith.mulf %63, %61 : vector<8x32xf32>
    %65 = arith.mulf %56, %40 : vector<8x32xf32>
    %66 = arith.addf %64, %65 : vector<8x32xf32>
    %c2 = arith.constant 2 : index
    %c0_23 = arith.constant 0 : index
    %c0_24 = arith.constant 0 : index
    %67 = vector.load %arg6[%c2, %c0_23, %c0_24] : memref<9x8x128xf32, #tpu.memory_space<vmem>>, vector<1x8x128xf32>
    %68 = vector.shape_cast %67 : vector<1x8x128xf32> to vector<8x128xf32>
    %69 = arith.truncf %66 : vector<8x32xf32> to vector<8x32xbf16>
    %cst_25 = arith.constant dense<0.000000e+00> : vector<8x128xf32>
    %70 = tpu.matmul %69, %12, %cst_25 {dimension_numbers = #tpu.dot_dimension_numbers<[1], [0], [0], [1], [0, 0, 1, 1], [], []>} : vector<8x32xbf16>, vector<32x128xbf16>, vector<8x128xf32> -> vector<8x128xf32>
    %71 = vector.broadcast %13 : vector<1x128xf32> to vector<8x128xf32>
    %72 = arith.addf %70, %71 : vector<8x128xf32>
    %73 = vector.extract_strided_slice %68 {offsets = [0, 0], sizes = [8, 64], strides = [1, 1]} : vector<8x128xf32> to vector<8x64xf32>
    %74 = vector.extract_strided_slice %72 {offsets = [0, 0], sizes = [8, 64], strides = [1, 1]} : vector<8x128xf32> to vector<8x64xf32>
    %75 = arith.addf %73, %74 : vector<8x64xf32>
    %76 = arith.negf %75 : vector<8x64xf32>
    %77 = math.exp %76 : vector<8x64xf32>
    %cst_26 = arith.constant 1.000000e+00 : f32
    %78 = vector.broadcast %cst_26 : f32 to vector<8x64xf32>
    %79 = arith.addf %78, %77 : vector<8x64xf32>
    %80 = arith.divf %78, %79 : vector<8x64xf32>
    %81 = vector.extract_strided_slice %80 {offsets = [0, 0], sizes = [8, 32], strides = [1, 1]} : vector<8x64xf32> to vector<8x32xf32>
    %82 = vector.extract_strided_slice %80 {offsets = [0, 32], sizes = [8, 32], strides = [1, 1]} : vector<8x64xf32> to vector<8x32xf32>
    %83 = vector.extract_strided_slice %68 {offsets = [0, 64], sizes = [8, 32], strides = [1, 1]} : vector<8x128xf32> to vector<8x32xf32>
    %84 = vector.extract_strided_slice %72 {offsets = [0, 64], sizes = [8, 32], strides = [1, 1]} : vector<8x128xf32> to vector<8x32xf32>
    %85 = arith.mulf %81, %84 : vector<8x32xf32>
    %86 = arith.addf %83, %85 : vector<8x32xf32>
    %87 = math.tanh %86 : vector<8x32xf32>
    %cst_27 = arith.constant 1.000000e+00 : f32
    %88 = vector.broadcast %cst_27 : f32 to vector<8x32xf32>
    %89 = arith.subf %88, %82 : vector<8x32xf32>
    %90 = arith.mulf %89, %87 : vector<8x32xf32>
    %91 = arith.mulf %82, %66 : vector<8x32xf32>
    %92 = arith.addf %90, %91 : vector<8x32xf32>
    %c3 = arith.constant 3 : index
    %c0_28 = arith.constant 0 : index
    %c0_29 = arith.constant 0 : index
    %93 = vector.load %arg6[%c3, %c0_28, %c0_29] : memref<9x8x128xf32, #tpu.memory_space<vmem>>, vector<1x8x128xf32>
    %94 = vector.shape_cast %93 : vector<1x8x128xf32> to vector<8x128xf32>
    %95 = arith.truncf %92 : vector<8x32xf32> to vector<8x32xbf16>
    %cst_30 = arith.constant dense<0.000000e+00> : vector<8x128xf32>
    %96 = tpu.matmul %95, %12, %cst_30 {dimension_numbers = #tpu.dot_dimension_numbers<[1], [0], [0], [1], [0, 0, 1, 1], [], []>} : vector<8x32xbf16>, vector<32x128xbf16>, vector<8x128xf32> -> vector<8x128xf32>
    %97 = vector.broadcast %13 : vector<1x128xf32> to vector<8x128xf32>
    %98 = arith.addf %96, %97 : vector<8x128xf32>
    %99 = vector.extract_strided_slice %94 {offsets = [0, 0], sizes = [8, 64], strides = [1, 1]} : vector<8x128xf32> to vector<8x64xf32>
    %100 = vector.extract_strided_slice %98 {offsets = [0, 0], sizes = [8, 64], strides = [1, 1]} : vector<8x128xf32> to vector<8x64xf32>
    %101 = arith.addf %99, %100 : vector<8x64xf32>
    %102 = arith.negf %101 : vector<8x64xf32>
    %103 = math.exp %102 : vector<8x64xf32>
    %cst_31 = arith.constant 1.000000e+00 : f32
    %104 = vector.broadcast %cst_31 : f32 to vector<8x64xf32>
    %105 = arith.addf %104, %103 : vector<8x64xf32>
    %106 = arith.divf %104, %105 : vector<8x64xf32>
    %107 = vector.extract_strided_slice %106 {offsets = [0, 0], sizes = [8, 32], strides = [1, 1]} : vector<8x64xf32> to vector<8x32xf32>
    %108 = vector.extract_strided_slice %106 {offsets = [0, 32], sizes = [8, 32], strides = [1, 1]} : vector<8x64xf32> to vector<8x32xf32>
    %109 = vector.extract_strided_slice %94 {offsets = [0, 64], sizes = [8, 32], strides = [1, 1]} : vector<8x128xf32> to vector<8x32xf32>
    %110 = vector.extract_strided_slice %98 {offsets = [0, 64], sizes = [8, 32], strides = [1, 1]} : vector<8x128xf32> to vector<8x32xf32>
    %111 = arith.mulf %107, %110 : vector<8x32xf32>
    %112 = arith.addf %109, %111 : vector<8x32xf32>
    %113 = math.tanh %112 : vector<8x32xf32>
    %cst_32 = arith.constant 1.000000e+00 : f32
    %114 = vector.broadcast %cst_32 : f32 to vector<8x32xf32>
    %115 = arith.subf %114, %108 : vector<8x32xf32>
    %116 = arith.mulf %115, %113 : vector<8x32xf32>
    %117 = arith.mulf %108, %92 : vector<8x32xf32>
    %118 = arith.addf %116, %117 : vector<8x32xf32>
    %c4 = arith.constant 4 : index
    %c0_33 = arith.constant 0 : index
    %c0_34 = arith.constant 0 : index
    %119 = vector.load %arg6[%c4, %c0_33, %c0_34] : memref<9x8x128xf32, #tpu.memory_space<vmem>>, vector<1x8x128xf32>
    %120 = vector.shape_cast %119 : vector<1x8x128xf32> to vector<8x128xf32>
    %121 = arith.truncf %118 : vector<8x32xf32> to vector<8x32xbf16>
    %cst_35 = arith.constant dense<0.000000e+00> : vector<8x128xf32>
    %122 = tpu.matmul %121, %12, %cst_35 {dimension_numbers = #tpu.dot_dimension_numbers<[1], [0], [0], [1], [0, 0, 1, 1], [], []>} : vector<8x32xbf16>, vector<32x128xbf16>, vector<8x128xf32> -> vector<8x128xf32>
    %123 = vector.broadcast %13 : vector<1x128xf32> to vector<8x128xf32>
    %124 = arith.addf %122, %123 : vector<8x128xf32>
    %125 = vector.extract_strided_slice %120 {offsets = [0, 0], sizes = [8, 64], strides = [1, 1]} : vector<8x128xf32> to vector<8x64xf32>
    %126 = vector.extract_strided_slice %124 {offsets = [0, 0], sizes = [8, 64], strides = [1, 1]} : vector<8x128xf32> to vector<8x64xf32>
    %127 = arith.addf %125, %126 : vector<8x64xf32>
    %128 = arith.negf %127 : vector<8x64xf32>
    %129 = math.exp %128 : vector<8x64xf32>
    %cst_36 = arith.constant 1.000000e+00 : f32
    %130 = vector.broadcast %cst_36 : f32 to vector<8x64xf32>
    %131 = arith.addf %130, %129 : vector<8x64xf32>
    %132 = arith.divf %130, %131 : vector<8x64xf32>
    %133 = vector.extract_strided_slice %132 {offsets = [0, 0], sizes = [8, 32], strides = [1, 1]} : vector<8x64xf32> to vector<8x32xf32>
    %134 = vector.extract_strided_slice %132 {offsets = [0, 32], sizes = [8, 32], strides = [1, 1]} : vector<8x64xf32> to vector<8x32xf32>
    %135 = vector.extract_strided_slice %120 {offsets = [0, 64], sizes = [8, 32], strides = [1, 1]} : vector<8x128xf32> to vector<8x32xf32>
    %136 = vector.extract_strided_slice %124 {offsets = [0, 64], sizes = [8, 32], strides = [1, 1]} : vector<8x128xf32> to vector<8x32xf32>
    %137 = arith.mulf %133, %136 : vector<8x32xf32>
    %138 = arith.addf %135, %137 : vector<8x32xf32>
    %139 = math.tanh %138 : vector<8x32xf32>
    %cst_37 = arith.constant 1.000000e+00 : f32
    %140 = vector.broadcast %cst_37 : f32 to vector<8x32xf32>
    %141 = arith.subf %140, %134 : vector<8x32xf32>
    %142 = arith.mulf %141, %139 : vector<8x32xf32>
    %143 = arith.mulf %134, %118 : vector<8x32xf32>
    %144 = arith.addf %142, %143 : vector<8x32xf32>
    %c5 = arith.constant 5 : index
    %c0_38 = arith.constant 0 : index
    %c0_39 = arith.constant 0 : index
    %145 = vector.load %arg6[%c5, %c0_38, %c0_39] : memref<9x8x128xf32, #tpu.memory_space<vmem>>, vector<1x8x128xf32>
    %146 = vector.shape_cast %145 : vector<1x8x128xf32> to vector<8x128xf32>
    %147 = arith.truncf %144 : vector<8x32xf32> to vector<8x32xbf16>
    %cst_40 = arith.constant dense<0.000000e+00> : vector<8x128xf32>
    %148 = tpu.matmul %147, %12, %cst_40 {dimension_numbers = #tpu.dot_dimension_numbers<[1], [0], [0], [1], [0, 0, 1, 1], [], []>} : vector<8x32xbf16>, vector<32x128xbf16>, vector<8x128xf32> -> vector<8x128xf32>
    %149 = vector.broadcast %13 : vector<1x128xf32> to vector<8x128xf32>
    %150 = arith.addf %148, %149 : vector<8x128xf32>
    %151 = vector.extract_strided_slice %146 {offsets = [0, 0], sizes = [8, 64], strides = [1, 1]} : vector<8x128xf32> to vector<8x64xf32>
    %152 = vector.extract_strided_slice %150 {offsets = [0, 0], sizes = [8, 64], strides = [1, 1]} : vector<8x128xf32> to vector<8x64xf32>
    %153 = arith.addf %151, %152 : vector<8x64xf32>
    %154 = arith.negf %153 : vector<8x64xf32>
    %155 = math.exp %154 : vector<8x64xf32>
    %cst_41 = arith.constant 1.000000e+00 : f32
    %156 = vector.broadcast %cst_41 : f32 to vector<8x64xf32>
    %157 = arith.addf %156, %155 : vector<8x64xf32>
    %158 = arith.divf %156, %157 : vector<8x64xf32>
    %159 = vector.extract_strided_slice %158 {offsets = [0, 0], sizes = [8, 32], strides = [1, 1]} : vector<8x64xf32> to vector<8x32xf32>
    %160 = vector.extract_strided_slice %158 {offsets = [0, 32], sizes = [8, 32], strides = [1, 1]} : vector<8x64xf32> to vector<8x32xf32>
    %161 = vector.extract_strided_slice %146 {offsets = [0, 64], sizes = [8, 32], strides = [1, 1]} : vector<8x128xf32> to vector<8x32xf32>
    %162 = vector.extract_strided_slice %150 {offsets = [0, 64], sizes = [8, 32], strides = [1, 1]} : vector<8x128xf32> to vector<8x32xf32>
    %163 = arith.mulf %159, %162 : vector<8x32xf32>
    %164 = arith.addf %161, %163 : vector<8x32xf32>
    %165 = math.tanh %164 : vector<8x32xf32>
    %cst_42 = arith.constant 1.000000e+00 : f32
    %166 = vector.broadcast %cst_42 : f32 to vector<8x32xf32>
    %167 = arith.subf %166, %160 : vector<8x32xf32>
    %168 = arith.mulf %167, %165 : vector<8x32xf32>
    %169 = arith.mulf %160, %144 : vector<8x32xf32>
    %170 = arith.addf %168, %169 : vector<8x32xf32>
    %c6 = arith.constant 6 : index
    %c0_43 = arith.constant 0 : index
    %c0_44 = arith.constant 0 : index
    %171 = vector.load %arg6[%c6, %c0_43, %c0_44] : memref<9x8x128xf32, #tpu.memory_space<vmem>>, vector<1x8x128xf32>
    %172 = vector.shape_cast %171 : vector<1x8x128xf32> to vector<8x128xf32>
    %173 = arith.truncf %170 : vector<8x32xf32> to vector<8x32xbf16>
    %cst_45 = arith.constant dense<0.000000e+00> : vector<8x128xf32>
    %174 = tpu.matmul %173, %12, %cst_45 {dimension_numbers = #tpu.dot_dimension_numbers<[1], [0], [0], [1], [0, 0, 1, 1], [], []>} : vector<8x32xbf16>, vector<32x128xbf16>, vector<8x128xf32> -> vector<8x128xf32>
    %175 = vector.broadcast %13 : vector<1x128xf32> to vector<8x128xf32>
    %176 = arith.addf %174, %175 : vector<8x128xf32>
    %177 = vector.extract_strided_slice %172 {offsets = [0, 0], sizes = [8, 64], strides = [1, 1]} : vector<8x128xf32> to vector<8x64xf32>
    %178 = vector.extract_strided_slice %176 {offsets = [0, 0], sizes = [8, 64], strides = [1, 1]} : vector<8x128xf32> to vector<8x64xf32>
    %179 = arith.addf %177, %178 : vector<8x64xf32>
    %180 = arith.negf %179 : vector<8x64xf32>
    %181 = math.exp %180 : vector<8x64xf32>
    %cst_46 = arith.constant 1.000000e+00 : f32
    %182 = vector.broadcast %cst_46 : f32 to vector<8x64xf32>
    %183 = arith.addf %182, %181 : vector<8x64xf32>
    %184 = arith.divf %182, %183 : vector<8x64xf32>
    %185 = vector.extract_strided_slice %184 {offsets = [0, 0], sizes = [8, 32], strides = [1, 1]} : vector<8x64xf32> to vector<8x32xf32>
    %186 = vector.extract_strided_slice %184 {offsets = [0, 32], sizes = [8, 32], strides = [1, 1]} : vector<8x64xf32> to vector<8x32xf32>
    %187 = vector.extract_strided_slice %172 {offsets = [0, 64], sizes = [8, 32], strides = [1, 1]} : vector<8x128xf32> to vector<8x32xf32>
    %188 = vector.extract_strided_slice %176 {offsets = [0, 64], sizes = [8, 32], strides = [1, 1]} : vector<8x128xf32> to vector<8x32xf32>
    %189 = arith.mulf %185, %188 : vector<8x32xf32>
    %190 = arith.addf %187, %189 : vector<8x32xf32>
    %191 = math.tanh %190 : vector<8x32xf32>
    %cst_47 = arith.constant 1.000000e+00 : f32
    %192 = vector.broadcast %cst_47 : f32 to vector<8x32xf32>
    %193 = arith.subf %192, %186 : vector<8x32xf32>
    %194 = arith.mulf %193, %191 : vector<8x32xf32>
    %195 = arith.mulf %186, %170 : vector<8x32xf32>
    %196 = arith.addf %194, %195 : vector<8x32xf32>
    %c7 = arith.constant 7 : index
    %c0_48 = arith.constant 0 : index
    %c0_49 = arith.constant 0 : index
    %197 = vector.load %arg6[%c7, %c0_48, %c0_49] : memref<9x8x128xf32, #tpu.memory_space<vmem>>, vector<1x8x128xf32>
    %198 = vector.shape_cast %197 : vector<1x8x128xf32> to vector<8x128xf32>
    %199 = arith.truncf %196 : vector<8x32xf32> to vector<8x32xbf16>
    %cst_50 = arith.constant dense<0.000000e+00> : vector<8x128xf32>
    %200 = tpu.matmul %199, %12, %cst_50 {dimension_numbers = #tpu.dot_dimension_numbers<[1], [0], [0], [1], [0, 0, 1, 1], [], []>} : vector<8x32xbf16>, vector<32x128xbf16>, vector<8x128xf32> -> vector<8x128xf32>
    %201 = vector.broadcast %13 : vector<1x128xf32> to vector<8x128xf32>
    %202 = arith.addf %200, %201 : vector<8x128xf32>
    %203 = vector.extract_strided_slice %198 {offsets = [0, 0], sizes = [8, 64], strides = [1, 1]} : vector<8x128xf32> to vector<8x64xf32>
    %204 = vector.extract_strided_slice %202 {offsets = [0, 0], sizes = [8, 64], strides = [1, 1]} : vector<8x128xf32> to vector<8x64xf32>
    %205 = arith.addf %203, %204 : vector<8x64xf32>
    %206 = arith.negf %205 : vector<8x64xf32>
    %207 = math.exp %206 : vector<8x64xf32>
    %cst_51 = arith.constant 1.000000e+00 : f32
    %208 = vector.broadcast %cst_51 : f32 to vector<8x64xf32>
    %209 = arith.addf %208, %207 : vector<8x64xf32>
    %210 = arith.divf %208, %209 : vector<8x64xf32>
    %211 = vector.extract_strided_slice %210 {offsets = [0, 0], sizes = [8, 32], strides = [1, 1]} : vector<8x64xf32> to vector<8x32xf32>
    %212 = vector.extract_strided_slice %210 {offsets = [0, 32], sizes = [8, 32], strides = [1, 1]} : vector<8x64xf32> to vector<8x32xf32>
    %213 = vector.extract_strided_slice %198 {offsets = [0, 64], sizes = [8, 32], strides = [1, 1]} : vector<8x128xf32> to vector<8x32xf32>
    %214 = vector.extract_strided_slice %202 {offsets = [0, 64], sizes = [8, 32], strides = [1, 1]} : vector<8x128xf32> to vector<8x32xf32>
    %215 = arith.mulf %211, %214 : vector<8x32xf32>
    %216 = arith.addf %213, %215 : vector<8x32xf32>
    %217 = math.tanh %216 : vector<8x32xf32>
    %cst_52 = arith.constant 1.000000e+00 : f32
    %218 = vector.broadcast %cst_52 : f32 to vector<8x32xf32>
    %219 = arith.subf %218, %212 : vector<8x32xf32>
    %220 = arith.mulf %219, %217 : vector<8x32xf32>
    %221 = arith.mulf %212, %196 : vector<8x32xf32>
    %222 = arith.addf %220, %221 : vector<8x32xf32>
    %c8 = arith.constant 8 : index
    %c0_53 = arith.constant 0 : index
    %c0_54 = arith.constant 0 : index
    %223 = vector.load %arg6[%c8, %c0_53, %c0_54] : memref<9x8x128xf32, #tpu.memory_space<vmem>>, vector<1x8x128xf32>
    %224 = vector.shape_cast %223 : vector<1x8x128xf32> to vector<8x128xf32>
    %225 = arith.truncf %222 : vector<8x32xf32> to vector<8x32xbf16>
    %cst_55 = arith.constant dense<0.000000e+00> : vector<8x128xf32>
    %226 = tpu.matmul %225, %12, %cst_55 {dimension_numbers = #tpu.dot_dimension_numbers<[1], [0], [0], [1], [0, 0, 1, 1], [], []>} : vector<8x32xbf16>, vector<32x128xbf16>, vector<8x128xf32> -> vector<8x128xf32>
    %227 = vector.broadcast %13 : vector<1x128xf32> to vector<8x128xf32>
    %228 = arith.addf %226, %227 : vector<8x128xf32>
    %229 = vector.extract_strided_slice %224 {offsets = [0, 0], sizes = [8, 64], strides = [1, 1]} : vector<8x128xf32> to vector<8x64xf32>
    %230 = vector.extract_strided_slice %228 {offsets = [0, 0], sizes = [8, 64], strides = [1, 1]} : vector<8x128xf32> to vector<8x64xf32>
    %231 = arith.addf %229, %230 : vector<8x64xf32>
    %232 = arith.negf %231 : vector<8x64xf32>
    %233 = math.exp %232 : vector<8x64xf32>
    %cst_56 = arith.constant 1.000000e+00 : f32
    %234 = vector.broadcast %cst_56 : f32 to vector<8x64xf32>
    %235 = arith.addf %234, %233 : vector<8x64xf32>
    %236 = arith.divf %234, %235 : vector<8x64xf32>
    %237 = vector.extract_strided_slice %236 {offsets = [0, 0], sizes = [8, 32], strides = [1, 1]} : vector<8x64xf32> to vector<8x32xf32>
    %238 = vector.extract_strided_slice %236 {offsets = [0, 32], sizes = [8, 32], strides = [1, 1]} : vector<8x64xf32> to vector<8x32xf32>
    %239 = vector.extract_strided_slice %224 {offsets = [0, 64], sizes = [8, 32], strides = [1, 1]} : vector<8x128xf32> to vector<8x32xf32>
    %240 = vector.extract_strided_slice %228 {offsets = [0, 64], sizes = [8, 32], strides = [1, 1]} : vector<8x128xf32> to vector<8x32xf32>
    %241 = arith.mulf %237, %240 : vector<8x32xf32>
    %242 = arith.addf %239, %241 : vector<8x32xf32>
    %243 = math.tanh %242 : vector<8x32xf32>
    %cst_57 = arith.constant 1.000000e+00 : f32
    %244 = vector.broadcast %cst_57 : f32 to vector<8x32xf32>
    %245 = arith.subf %244, %238 : vector<8x32xf32>
    %246 = arith.mulf %245, %243 : vector<8x32xf32>
    %247 = arith.mulf %238, %222 : vector<8x32xf32>
    %248 = arith.addf %246, %247 : vector<8x32xf32>
    %249 = arith.truncf %248 : vector<8x32xf32> to vector<8x32xbf16>
    %c64 = arith.constant 64 : index
    %c0_58 = arith.constant 0 : index
    %250 = vector.load %arg3[%c64, %c0_58] : memref<160x256xbf16, #tpu.memory_space<vmem>>, vector<32x256xbf16>
    %c96 = arith.constant 96 : index
    %c0_59 = arith.constant 0 : index
    %251 = vector.load %arg3[%c96, %c0_59] : memref<160x256xbf16, #tpu.memory_space<vmem>>, vector<32x256xbf16>
    %c128 = arith.constant 128 : index
    %c0_60 = arith.constant 0 : index
    %252 = vector.load %arg3[%c128, %c0_60] : memref<160x256xbf16, #tpu.memory_space<vmem>>, vector<32x256xbf16>
    %c2_61 = arith.constant 2 : index
    %c0_62 = arith.constant 0 : index
    %253 = vector.load %arg4[%c2_61, %c0_62] : memref<8x256xf32, #tpu.memory_space<vmem>>, vector<1x128xf32>
    %cst_63 = arith.constant dense<0.000000e+00> : vector<8x256xf32>
    %254 = tpu.matmul %249, %251, %cst_63 {dimension_numbers = #tpu.dot_dimension_numbers<[1], [0], [0], [1], [0, 0, 1, 1], [], []>} : vector<8x32xbf16>, vector<32x256xbf16>, vector<8x256xf32> -> vector<8x256xf32>
    %c3_64 = arith.constant 3 : index
    %c0_65 = arith.constant 0 : index
    %255 = vector.load %arg4[%c3_64, %c0_65] : memref<8x256xf32, #tpu.memory_space<vmem>>, vector<1x256xf32>
    %256 = vector.broadcast %255 : vector<1x256xf32> to vector<8x256xf32>
    %257 = arith.addf %254, %256 : vector<8x256xf32>
    %c0_66 = arith.constant 0 : index
    %c0_67 = arith.constant 0 : index
    %258 = vector.load %arg1[%c0_66, %c0_67] : memref<64x32xbf16, #tpu.memory_space<vmem>>, vector<64x32xbf16>
    %cst_68 = arith.constant dense<0.000000e+00> : vector<64x256xf32>
    %259 = tpu.matmul %258, %250, %cst_68 {dimension_numbers = #tpu.dot_dimension_numbers<[1], [0], [0], [1], [0, 0, 1, 1], [], []>} : vector<64x32xbf16>, vector<32x256xbf16>, vector<64x256xf32> -> vector<64x256xf32>
    %260 = vector.shape_cast %259 : vector<64x256xf32> to vector<8x8x256xf32>
    %261 = vector.shape_cast %257 : vector<8x256xf32> to vector<1x8x256xf32>
    %262 = vector.broadcast %261 : vector<1x8x256xf32> to vector<8x8x256xf32>
    %263 = arith.addf %260, %262 : vector<8x8x256xf32>
    %c0_69 = arith.constant 0 : index
    %c0_70 = arith.constant 0 : index
    %c0_71 = arith.constant 0 : index
    %264 = vector.load %arg7[%c0_69, %c0_70, %c0_71] : memref<8x8x256xf32, #tpu.memory_space<vmem>>, vector<8x8x256xf32>
    tpu.vector_store %arg7[%c0_69, %c0_70, %c0_71], %263 {strides = array<i32>} : memref<8x8x256xf32, #tpu.memory_space<vmem>>, vector<8x8x256xf32>,
    %cst_72 = arith.constant dense<0.000000e+00> : vector<8x256xf32>
    %265 = tpu.matmul %249, %252, %cst_72 {dimension_numbers = #tpu.dot_dimension_numbers<[1], [0], [0], [1], [0, 0, 1, 1], [], []>} : vector<8x32xbf16>, vector<32x256xbf16>, vector<8x256xf32> -> vector<8x256xf32>
    %266 = vector.extract_strided_slice %265 {offsets = [0, 0], sizes = [8, 128], strides = [1, 1]} : vector<8x256xf32> to vector<8x128xf32>
    %267 = vector.broadcast %253 : vector<1x128xf32> to vector<8x128xf32>
    %268 = arith.addf %266, %267 : vector<8x128xf32>
    %c0_73 = arith.constant 0 : index
    %c0_74 = arith.constant 0 : index
    %c0_75 = arith.constant 0 : index
    %269 = vector.load %arg7[%c0_73, %c0_74, %c0_75] : memref<8x8x256xf32, #tpu.memory_space<vmem>>, vector<1x8x256xf32>
    %270 = vector.shape_cast %269 : vector<1x8x256xf32> to vector<8x256xf32>
    %271 = vector.extract_strided_slice %270 {offsets = [0, 0], sizes = [8, 128], strides = [1, 1]} : vector<8x256xf32> to vector<8x128xf32>
    %272 = vector.extract_strided_slice %271 {offsets = [0, 0], sizes = [8, 64], strides = [1, 1]} : vector<8x128xf32> to vector<8x64xf32>
    %273 = vector.extract_strided_slice %268 {offsets = [0, 0], sizes = [8, 64], strides = [1, 1]} : vector<8x128xf32> to vector<8x64xf32>
    %274 = arith.addf %272, %273 : vector<8x64xf32>
    %275 = arith.negf %274 : vector<8x64xf32>
    %276 = math.exp %275 : vector<8x64xf32>
    %cst_76 = arith.constant 1.000000e+00 : f32
    %277 = vector.broadcast %cst_76 : f32 to vector<8x64xf32>
    %278 = arith.addf %277, %276 : vector<8x64xf32>
    %279 = arith.divf %277, %278 : vector<8x64xf32>
    %280 = vector.extract_strided_slice %279 {offsets = [0, 0], sizes = [8, 32], strides = [1, 1]} : vector<8x64xf32> to vector<8x32xf32>
    %281 = vector.extract_strided_slice %279 {offsets = [0, 32], sizes = [8, 32], strides = [1, 1]} : vector<8x64xf32> to vector<8x32xf32>
    %282 = vector.extract_strided_slice %271 {offsets = [0, 64], sizes = [8, 32], strides = [1, 1]} : vector<8x128xf32> to vector<8x32xf32>
    %283 = vector.extract_strided_slice %268 {offsets = [0, 64], sizes = [8, 32], strides = [1, 1]} : vector<8x128xf32> to vector<8x32xf32>
    %284 = arith.mulf %280, %283 : vector<8x32xf32>
    %285 = arith.addf %282, %284 : vector<8x32xf32>
    %286 = math.tanh %285 : vector<8x32xf32>
    %cst_77 = arith.constant 1.000000e+00 : f32
    %287 = vector.broadcast %cst_77 : f32 to vector<8x32xf32>
    %288 = arith.subf %287, %281 : vector<8x32xf32>
    %289 = arith.mulf %288, %286 : vector<8x32xf32>
    %290 = arith.mulf %281, %248 : vector<8x32xf32>
    %291 = arith.addf %289, %290 : vector<8x32xf32>
    %292 = arith.truncf %291 : vector<8x32xf32> to vector<8x32xbf16>
    %cst_78 = arith.constant dense<0.000000e+00> : vector<8x256xf32>
    %293 = tpu.matmul %292, %252, %cst_78 {dimension_numbers = #tpu.dot_dimension_numbers<[1], [0], [0], [1], [0, 0, 1, 1], [], []>} : vector<8x32xbf16>, vector<32x256xbf16>, vector<8x256xf32> -> vector<8x256xf32>
    %294 = vector.extract_strided_slice %270 {offsets = [0, 128], sizes = [8, 128], strides = [1, 1]} : vector<8x256xf32> to vector<8x128xf32>
    %295 = vector.extract_strided_slice %293 {offsets = [0, 128], sizes = [8, 128], strides = [1, 1]} : vector<8x256xf32> to vector<8x128xf32>
    %296 = arith.addf %294, %295 : vector<8x128xf32>
    %c0_79 = arith.constant 0 : index
    %c0_80 = arith.constant 0 : index
    %c0_81 = arith.constant 0 : index
    %297 = vector.load %arg5[%c0_79, %c0_80, %c0_81] : memref<8x8x128xf32, #tpu.memory_space<vmem>>, vector<1x8x128xf32>
    %298 = vector.shape_cast %297 : vector<1x8x128xf32> to vector<8x128xf32>
    %299 = vector.shape_cast %296 : vector<8x128xf32> to vector<1x8x128xf32>
    tpu.vector_store %arg5[%c0_79, %c0_80, %c0_81], %299 {strides = array<i32>} : memref<8x8x128xf32, #tpu.memory_space<vmem>>, vector<1x8x128xf32>,
    %300 = vector.extract_strided_slice %293 {offsets = [0, 0], sizes = [8, 128], strides = [1, 1]} : vector<8x256xf32> to vector<8x128xf32>
    %301 = vector.broadcast %253 : vector<1x128xf32> to vector<8x128xf32>
    %302 = arith.addf %300, %301 : vector<8x128xf32>
    %c0_82 = arith.constant 0 : index
    %303 = memref.load %arg2[%c0_82] : memref<8xi32, #tpu.memory_space<smem>>
    %c0_i32 = arith.constant 0 : i32
    %304 = arith.cmpi eq, %303, %c0_i32 : i32
    %305 = arith.extui %304 : i1 to i32
    %c0_i32_83 = arith.constant 0 : i32
    %306 = arith.cmpi ne, %305, %c0_i32_83 : i32
    scf.if %306 {
      %cst_165 = arith.constant dense<0xFF800000> : vector<8xf32>
      %566 = vector.multi_reduction <maximumf>, %296, %cst_165 [1] : vector<8x128xf32> to vector<8xf32>
      %567 = vector.shape_cast %566 : vector<8xf32> to vector<8x1xf32>
      %568 = vector.broadcast %567 : vector<8x1xf32> to vector<8x128xf32>
      %569 = arith.cmpf oeq, %296, %568 : vector<8x128xf32>
      %cst_166 = arith.constant 1.280000e+02 : f32
      %570 = vector.broadcast %cst_166 : f32 to vector<8x128xf32>
      %571 = arith.select %569, %3, %570 : vector<8x128xi1>, vector<8x128xf32>
      %cst_167 = arith.constant dense<0x7F800000> : vector<8xf32>
      %572 = vector.multi_reduction <minimumf>, %571, %cst_167 [1] : vector<8x128xf32> to vector<8xf32>
      %573 = vector.shape_cast %572 : vector<8xf32> to vector<8x1xf32>
      %574 = vector.broadcast %573 : vector<8x1xf32> to vector<8x32xf32>
      %575 = arith.cmpf oeq, %1, %574 : vector<8x32xf32>
      %576 = arith.extui %575 : vector<8x32xi1> to vector<8x32xi32>
      %577 = arith.sitofp %576 : vector<8x32xi32> to vector<8x32xf32>
      %578 = arith.truncf %577 : vector<8x32xf32> to vector<8x32xbf16>
      %cst_168 = arith.constant dense<0.000000e+00> : vector<8x256xf32>
      %579 = tpu.matmul %578, %250, %cst_168 {dimension_numbers = #tpu.dot_dimension_numbers<[1], [0], [0], [1], [0, 0, 1, 1], [], []>} : vector<8x32xbf16>, vector<32x256xbf16>, vector<8x256xf32> -> vector<8x256xf32>
      %580 = arith.addf %579, %257 : vector<8x256xf32>
      %c1_169 = arith.constant 1 : index
      %c0_170 = arith.constant 0 : index
      %c0_171 = arith.constant 0 : index
      %581 = vector.load %arg7[%c1_169, %c0_170, %c0_171] : memref<8x8x256xf32, #tpu.memory_space<vmem>>, vector<1x8x256xf32>
      %582 = vector.shape_cast %581 : vector<1x8x256xf32> to vector<8x256xf32>
      %583 = vector.shape_cast %580 : vector<8x256xf32> to vector<1x8x256xf32>
      tpu.vector_store %arg7[%c1_169, %c0_170, %c0_171], %583 {strides = array<i32>} : memref<8x8x256xf32, #tpu.memory_space<vmem>>, vector<1x8x256xf32>,
    } else {
    }
    %c1_84 = arith.constant 1 : index
    %c0_85 = arith.constant 0 : index
    %c0_86 = arith.constant 0 : index
    %307 = vector.load %arg7[%c1_84, %c0_85, %c0_86] : memref<8x8x256xf32, #tpu.memory_space<vmem>>, vector<1x8x256xf32>
    %308 = vector.shape_cast %307 : vector<1x8x256xf32> to vector<8x256xf32>
    %309 = vector.extract_strided_slice %308 {offsets = [0, 0], sizes = [8, 128], strides = [1, 1]} : vector<8x256xf32> to vector<8x128xf32>
    %310 = vector.extract_strided_slice %309 {offsets = [0, 0], sizes = [8, 64], strides = [1, 1]} : vector<8x128xf32> to vector<8x64xf32>
    %311 = vector.extract_strided_slice %302 {offsets = [0, 0], sizes = [8, 64], strides = [1, 1]} : vector<8x128xf32> to vector<8x64xf32>
    %312 = arith.addf %310, %311 : vector<8x64xf32>
    %313 = arith.negf %312 : vector<8x64xf32>
    %314 = math.exp %313 : vector<8x64xf32>
    %cst_87 = arith.constant 1.000000e+00 : f32
    %315 = vector.broadcast %cst_87 : f32 to vector<8x64xf32>
    %316 = arith.addf %315, %314 : vector<8x64xf32>
    %317 = arith.divf %315, %316 : vector<8x64xf32>
    %318 = vector.extract_strided_slice %317 {offsets = [0, 0], sizes = [8, 32], strides = [1, 1]} : vector<8x64xf32> to vector<8x32xf32>
    %319 = vector.extract_strided_slice %317 {offsets = [0, 32], sizes = [8, 32], strides = [1, 1]} : vector<8x64xf32> to vector<8x32xf32>
    %320 = vector.extract_strided_slice %309 {offsets = [0, 64], sizes = [8, 32], strides = [1, 1]} : vector<8x128xf32> to vector<8x32xf32>
    %321 = vector.extract_strided_slice %302 {offsets = [0, 64], sizes = [8, 32], strides = [1, 1]} : vector<8x128xf32> to vector<8x32xf32>
    %322 = arith.mulf %318, %321 : vector<8x32xf32>
    %323 = arith.addf %320, %322 : vector<8x32xf32>
    %324 = math.tanh %323 : vector<8x32xf32>
    %cst_88 = arith.constant 1.000000e+00 : f32
    %325 = vector.broadcast %cst_88 : f32 to vector<8x32xf32>
    %326 = arith.subf %325, %319 : vector<8x32xf32>
    %327 = arith.mulf %326, %324 : vector<8x32xf32>
    %328 = arith.mulf %319, %291 : vector<8x32xf32>
    %329 = arith.addf %327, %328 : vector<8x32xf32>
    %330 = arith.truncf %329 : vector<8x32xf32> to vector<8x32xbf16>
    %cst_89 = arith.constant dense<0.000000e+00> : vector<8x256xf32>
    %331 = tpu.matmul %330, %252, %cst_89 {dimension_numbers = #tpu.dot_dimension_numbers<[1], [0], [0], [1], [0, 0, 1, 1], [], []>} : vector<8x32xbf16>, vector<32x256xbf16>, vector<8x256xf32> -> vector<8x256xf32>
    %332 = vector.extract_strided_slice %308 {offsets = [0, 128], sizes = [8, 128], strides = [1, 1]} : vector<8x256xf32> to vector<8x128xf32>
    %333 = vector.extract_strided_slice %331 {offsets = [0, 128], sizes = [8, 128], strides = [1, 1]} : vector<8x256xf32> to vector<8x128xf32>
    %334 = arith.addf %332, %333 : vector<8x128xf32>
    %c1_90 = arith.constant 1 : index
    %c0_91 = arith.constant 0 : index
    %c0_92 = arith.constant 0 : index
    %335 = vector.load %arg5[%c1_90, %c0_91, %c0_92] : memref<8x8x128xf32, #tpu.memory_space<vmem>>, vector<1x8x128xf32>
    %336 = vector.shape_cast %335 : vector<1x8x128xf32> to vector<8x128xf32>
    %337 = vector.shape_cast %334 : vector<8x128xf32> to vector<1x8x128xf32>
    tpu.vector_store %arg5[%c1_90, %c0_91, %c0_92], %337 {strides = array<i32>} : memref<8x8x128xf32, #tpu.memory_space<vmem>>, vector<1x8x128xf32>,
    %338 = vector.extract_strided_slice %331 {offsets = [0, 0], sizes = [8, 128], strides = [1, 1]} : vector<8x256xf32> to vector<8x128xf32>
    %339 = vector.broadcast %253 : vector<1x128xf32> to vector<8x128xf32>
    %340 = arith.addf %338, %339 : vector<8x128xf32>
    %c1_93 = arith.constant 1 : index
    %341 = memref.load %arg2[%c1_93] : memref<8xi32, #tpu.memory_space<smem>>
    %c0_i32_94 = arith.constant 0 : i32
    %342 = arith.cmpi eq, %341, %c0_i32_94 : i32
    %343 = arith.extui %342 : i1 to i32
    %c0_i32_95 = arith.constant 0 : i32
    %344 = arith.cmpi ne, %343, %c0_i32_95 : i32
    scf.if %344 {
      %cst_165 = arith.constant dense<0xFF800000> : vector<8xf32>
      %566 = vector.multi_reduction <maximumf>, %334, %cst_165 [1] : vector<8x128xf32> to vector<8xf32>
      %567 = vector.shape_cast %566 : vector<8xf32> to vector<8x1xf32>
      %568 = vector.broadcast %567 : vector<8x1xf32> to vector<8x128xf32>
      %569 = arith.cmpf oeq, %334, %568 : vector<8x128xf32>
      %cst_166 = arith.constant 1.280000e+02 : f32
      %570 = vector.broadcast %cst_166 : f32 to vector<8x128xf32>
      %571 = arith.select %569, %3, %570 : vector<8x128xi1>, vector<8x128xf32>
      %cst_167 = arith.constant dense<0x7F800000> : vector<8xf32>
      %572 = vector.multi_reduction <minimumf>, %571, %cst_167 [1] : vector<8x128xf32> to vector<8xf32>
      %573 = vector.shape_cast %572 : vector<8xf32> to vector<8x1xf32>
      %574 = vector.broadcast %573 : vector<8x1xf32> to vector<8x32xf32>
      %575 = arith.cmpf oeq, %1, %574 : vector<8x32xf32>
      %576 = arith.extui %575 : vector<8x32xi1> to vector<8x32xi32>
      %577 = arith.sitofp %576 : vector<8x32xi32> to vector<8x32xf32>
      %578 = arith.truncf %577 : vector<8x32xf32> to vector<8x32xbf16>
      %cst_168 = arith.constant dense<0.000000e+00> : vector<8x256xf32>
      %579 = tpu.matmul %578, %250, %cst_168 {dimension_numbers = #tpu.dot_dimension_numbers<[1], [0], [0], [1], [0, 0, 1, 1], [], []>} : vector<8x32xbf16>, vector<32x256xbf16>, vector<8x256xf32> -> vector<8x256xf32>
      %580 = arith.addf %579, %257 : vector<8x256xf32>
      %c2_169 = arith.constant 2 : index
      %c0_170 = arith.constant 0 : index
      %c0_171 = arith.constant 0 : index
      %581 = vector.load %arg7[%c2_169, %c0_170, %c0_171] : memref<8x8x256xf32, #tpu.memory_space<vmem>>, vector<1x8x256xf32>
      %582 = vector.shape_cast %581 : vector<1x8x256xf32> to vector<8x256xf32>
      %583 = vector.shape_cast %580 : vector<8x256xf32> to vector<1x8x256xf32>
      tpu.vector_store %arg7[%c2_169, %c0_170, %c0_171], %583 {strides = array<i32>} : memref<8x8x256xf32, #tpu.memory_space<vmem>>, vector<1x8x256xf32>,
    } else {
    }
    %c2_96 = arith.constant 2 : index
    %c0_97 = arith.constant 0 : index
    %c0_98 = arith.constant 0 : index
    %345 = vector.load %arg7[%c2_96, %c0_97, %c0_98] : memref<8x8x256xf32, #tpu.memory_space<vmem>>, vector<1x8x256xf32>
    %346 = vector.shape_cast %345 : vector<1x8x256xf32> to vector<8x256xf32>
    %347 = vector.extract_strided_slice %346 {offsets = [0, 0], sizes = [8, 128], strides = [1, 1]} : vector<8x256xf32> to vector<8x128xf32>
    %348 = vector.extract_strided_slice %347 {offsets = [0, 0], sizes = [8, 64], strides = [1, 1]} : vector<8x128xf32> to vector<8x64xf32>
    %349 = vector.extract_strided_slice %340 {offsets = [0, 0], sizes = [8, 64], strides = [1, 1]} : vector<8x128xf32> to vector<8x64xf32>
    %350 = arith.addf %348, %349 : vector<8x64xf32>
    %351 = arith.negf %350 : vector<8x64xf32>
    %352 = math.exp %351 : vector<8x64xf32>
    %cst_99 = arith.constant 1.000000e+00 : f32
    %353 = vector.broadcast %cst_99 : f32 to vector<8x64xf32>
    %354 = arith.addf %353, %352 : vector<8x64xf32>
    %355 = arith.divf %353, %354 : vector<8x64xf32>
    %356 = vector.extract_strided_slice %355 {offsets = [0, 0], sizes = [8, 32], strides = [1, 1]} : vector<8x64xf32> to vector<8x32xf32>
    %357 = vector.extract_strided_slice %355 {offsets = [0, 32], sizes = [8, 32], strides = [1, 1]} : vector<8x64xf32> to vector<8x32xf32>
    %358 = vector.extract_strided_slice %347 {offsets = [0, 64], sizes = [8, 32], strides = [1, 1]} : vector<8x128xf32> to vector<8x32xf32>
    %359 = vector.extract_strided_slice %340 {offsets = [0, 64], sizes = [8, 32], strides = [1, 1]} : vector<8x128xf32> to vector<8x32xf32>
    %360 = arith.mulf %356, %359 : vector<8x32xf32>
    %361 = arith.addf %358, %360 : vector<8x32xf32>
    %362 = math.tanh %361 : vector<8x32xf32>
    %cst_100 = arith.constant 1.000000e+00 : f32
    %363 = vector.broadcast %cst_100 : f32 to vector<8x32xf32>
    %364 = arith.subf %363, %357 : vector<8x32xf32>
    %365 = arith.mulf %364, %362 : vector<8x32xf32>
    %366 = arith.mulf %357, %329 : vector<8x32xf32>
    %367 = arith.addf %365, %366 : vector<8x32xf32>
    %368 = arith.truncf %367 : vector<8x32xf32> to vector<8x32xbf16>
    %cst_101 = arith.constant dense<0.000000e+00> : vector<8x256xf32>
    %369 = tpu.matmul %368, %252, %cst_101 {dimension_numbers = #tpu.dot_dimension_numbers<[1], [0], [0], [1], [0, 0, 1, 1], [], []>} : vector<8x32xbf16>, vector<32x256xbf16>, vector<8x256xf32> -> vector<8x256xf32>
    %370 = vector.extract_strided_slice %346 {offsets = [0, 128], sizes = [8, 128], strides = [1, 1]} : vector<8x256xf32> to vector<8x128xf32>
    %371 = vector.extract_strided_slice %369 {offsets = [0, 128], sizes = [8, 128], strides = [1, 1]} : vector<8x256xf32> to vector<8x128xf32>
    %372 = arith.addf %370, %371 : vector<8x128xf32>
    %c2_102 = arith.constant 2 : index
    %c0_103 = arith.constant 0 : index
    %c0_104 = arith.constant 0 : index
    %373 = vector.load %arg5[%c2_102, %c0_103, %c0_104] : memref<8x8x128xf32, #tpu.memory_space<vmem>>, vector<1x8x128xf32>
    %374 = vector.shape_cast %373 : vector<1x8x128xf32> to vector<8x128xf32>
    %375 = vector.shape_cast %372 : vector<8x128xf32> to vector<1x8x128xf32>
    tpu.vector_store %arg5[%c2_102, %c0_103, %c0_104], %375 {strides = array<i32>} : memref<8x8x128xf32, #tpu.memory_space<vmem>>, vector<1x8x128xf32>,
    %376 = vector.extract_strided_slice %369 {offsets = [0, 0], sizes = [8, 128], strides = [1, 1]} : vector<8x256xf32> to vector<8x128xf32>
    %377 = vector.broadcast %253 : vector<1x128xf32> to vector<8x128xf32>
    %378 = arith.addf %376, %377 : vector<8x128xf32>
    %c2_105 = arith.constant 2 : index
    %379 = memref.load %arg2[%c2_105] : memref<8xi32, #tpu.memory_space<smem>>
    %c0_i32_106 = arith.constant 0 : i32
    %380 = arith.cmpi eq, %379, %c0_i32_106 : i32
    %381 = arith.extui %380 : i1 to i32
    %c0_i32_107 = arith.constant 0 : i32
    %382 = arith.cmpi ne, %381, %c0_i32_107 : i32
    scf.if %382 {
      %cst_165 = arith.constant dense<0xFF800000> : vector<8xf32>
      %566 = vector.multi_reduction <maximumf>, %372, %cst_165 [1] : vector<8x128xf32> to vector<8xf32>
      %567 = vector.shape_cast %566 : vector<8xf32> to vector<8x1xf32>
      %568 = vector.broadcast %567 : vector<8x1xf32> to vector<8x128xf32>
      %569 = arith.cmpf oeq, %372, %568 : vector<8x128xf32>
      %cst_166 = arith.constant 1.280000e+02 : f32
      %570 = vector.broadcast %cst_166 : f32 to vector<8x128xf32>
      %571 = arith.select %569, %3, %570 : vector<8x128xi1>, vector<8x128xf32>
      %cst_167 = arith.constant dense<0x7F800000> : vector<8xf32>
      %572 = vector.multi_reduction <minimumf>, %571, %cst_167 [1] : vector<8x128xf32> to vector<8xf32>
      %573 = vector.shape_cast %572 : vector<8xf32> to vector<8x1xf32>
      %574 = vector.broadcast %573 : vector<8x1xf32> to vector<8x32xf32>
      %575 = arith.cmpf oeq, %1, %574 : vector<8x32xf32>
      %576 = arith.extui %575 : vector<8x32xi1> to vector<8x32xi32>
      %577 = arith.sitofp %576 : vector<8x32xi32> to vector<8x32xf32>
      %578 = arith.truncf %577 : vector<8x32xf32> to vector<8x32xbf16>
      %cst_168 = arith.constant dense<0.000000e+00> : vector<8x256xf32>
      %579 = tpu.matmul %578, %250, %cst_168 {dimension_numbers = #tpu.dot_dimension_numbers<[1], [0], [0], [1], [0, 0, 1, 1], [], []>} : vector<8x32xbf16>, vector<32x256xbf16>, vector<8x256xf32> -> vector<8x256xf32>
      %580 = arith.addf %579, %257 : vector<8x256xf32>
      %c3_169 = arith.constant 3 : index
      %c0_170 = arith.constant 0 : index
      %c0_171 = arith.constant 0 : index
      %581 = vector.load %arg7[%c3_169, %c0_170, %c0_171] : memref<8x8x256xf32, #tpu.memory_space<vmem>>, vector<1x8x256xf32>
      %582 = vector.shape_cast %581 : vector<1x8x256xf32> to vector<8x256xf32>
      %583 = vector.shape_cast %580 : vector<8x256xf32> to vector<1x8x256xf32>
      tpu.vector_store %arg7[%c3_169, %c0_170, %c0_171], %583 {strides = array<i32>} : memref<8x8x256xf32, #tpu.memory_space<vmem>>, vector<1x8x256xf32>,
    } else {
    }
    %c3_108 = arith.constant 3 : index
    %c0_109 = arith.constant 0 : index
    %c0_110 = arith.constant 0 : index
    %383 = vector.load %arg7[%c3_108, %c0_109, %c0_110] : memref<8x8x256xf32, #tpu.memory_space<vmem>>, vector<1x8x256xf32>
    %384 = vector.shape_cast %383 : vector<1x8x256xf32> to vector<8x256xf32>
    %385 = vector.extract_strided_slice %384 {offsets = [0, 0], sizes = [8, 128], strides = [1, 1]} : vector<8x256xf32> to vector<8x128xf32>
    %386 = vector.extract_strided_slice %385 {offsets = [0, 0], sizes = [8, 64], strides = [1, 1]} : vector<8x128xf32> to vector<8x64xf32>
    %387 = vector.extract_strided_slice %378 {offsets = [0, 0], sizes = [8, 64], strides = [1, 1]} : vector<8x128xf32> to vector<8x64xf32>
    %388 = arith.addf %386, %387 : vector<8x64xf32>
    %389 = arith.negf %388 : vector<8x64xf32>
    %390 = math.exp %389 : vector<8x64xf32>
    %cst_111 = arith.constant 1.000000e+00 : f32
    %391 = vector.broadcast %cst_111 : f32 to vector<8x64xf32>
    %392 = arith.addf %391, %390 : vector<8x64xf32>
    %393 = arith.divf %391, %392 : vector<8x64xf32>
    %394 = vector.extract_strided_slice %393 {offsets = [0, 0], sizes = [8, 32], strides = [1, 1]} : vector<8x64xf32> to vector<8x32xf32>
    %395 = vector.extract_strided_slice %393 {offsets = [0, 32], sizes = [8, 32], strides = [1, 1]} : vector<8x64xf32> to vector<8x32xf32>
    %396 = vector.extract_strided_slice %385 {offsets = [0, 64], sizes = [8, 32], strides = [1, 1]} : vector<8x128xf32> to vector<8x32xf32>
    %397 = vector.extract_strided_slice %378 {offsets = [0, 64], sizes = [8, 32], strides = [1, 1]} : vector<8x128xf32> to vector<8x32xf32>
    %398 = arith.mulf %394, %397 : vector<8x32xf32>
    %399 = arith.addf %396, %398 : vector<8x32xf32>
    %400 = math.tanh %399 : vector<8x32xf32>
    %cst_112 = arith.constant 1.000000e+00 : f32
    %401 = vector.broadcast %cst_112 : f32 to vector<8x32xf32>
    %402 = arith.subf %401, %395 : vector<8x32xf32>
    %403 = arith.mulf %402, %400 : vector<8x32xf32>
    %404 = arith.mulf %395, %367 : vector<8x32xf32>
    %405 = arith.addf %403, %404 : vector<8x32xf32>
    %406 = arith.truncf %405 : vector<8x32xf32> to vector<8x32xbf16>
    %cst_113 = arith.constant dense<0.000000e+00> : vector<8x256xf32>
    %407 = tpu.matmul %406, %252, %cst_113 {dimension_numbers = #tpu.dot_dimension_numbers<[1], [0], [0], [1], [0, 0, 1, 1], [], []>} : vector<8x32xbf16>, vector<32x256xbf16>, vector<8x256xf32> -> vector<8x256xf32>
    %408 = vector.extract_strided_slice %384 {offsets = [0, 128], sizes = [8, 128], strides = [1, 1]} : vector<8x256xf32> to vector<8x128xf32>
    %409 = vector.extract_strided_slice %407 {offsets = [0, 128], sizes = [8, 128], strides = [1, 1]} : vector<8x256xf32> to vector<8x128xf32>
    %410 = arith.addf %408, %409 : vector<8x128xf32>
    %c3_114 = arith.constant 3 : index
    %c0_115 = arith.constant 0 : index
    %c0_116 = arith.constant 0 : index
    %411 = vector.load %arg5[%c3_114, %c0_115, %c0_116] : memref<8x8x128xf32, #tpu.memory_space<vmem>>, vector<1x8x128xf32>
    %412 = vector.shape_cast %411 : vector<1x8x128xf32> to vector<8x128xf32>
    %413 = vector.shape_cast %410 : vector<8x128xf32> to vector<1x8x128xf32>
    tpu.vector_store %arg5[%c3_114, %c0_115, %c0_116], %413 {strides = array<i32>} : memref<8x8x128xf32, #tpu.memory_space<vmem>>, vector<1x8x128xf32>,
    %414 = vector.extract_strided_slice %407 {offsets = [0, 0], sizes = [8, 128], strides = [1, 1]} : vector<8x256xf32> to vector<8x128xf32>
    %415 = vector.broadcast %253 : vector<1x128xf32> to vector<8x128xf32>
    %416 = arith.addf %414, %415 : vector<8x128xf32>
    %c3_117 = arith.constant 3 : index
    %417 = memref.load %arg2[%c3_117] : memref<8xi32, #tpu.memory_space<smem>>
    %c0_i32_118 = arith.constant 0 : i32
    %418 = arith.cmpi eq, %417, %c0_i32_118 : i32
    %419 = arith.extui %418 : i1 to i32
    %c0_i32_119 = arith.constant 0 : i32
    %420 = arith.cmpi ne, %419, %c0_i32_119 : i32
    scf.if %420 {
      %cst_165 = arith.constant dense<0xFF800000> : vector<8xf32>
      %566 = vector.multi_reduction <maximumf>, %410, %cst_165 [1] : vector<8x128xf32> to vector<8xf32>
      %567 = vector.shape_cast %566 : vector<8xf32> to vector<8x1xf32>
      %568 = vector.broadcast %567 : vector<8x1xf32> to vector<8x128xf32>
      %569 = arith.cmpf oeq, %410, %568 : vector<8x128xf32>
      %cst_166 = arith.constant 1.280000e+02 : f32
      %570 = vector.broadcast %cst_166 : f32 to vector<8x128xf32>
      %571 = arith.select %569, %3, %570 : vector<8x128xi1>, vector<8x128xf32>
      %cst_167 = arith.constant dense<0x7F800000> : vector<8xf32>
      %572 = vector.multi_reduction <minimumf>, %571, %cst_167 [1] : vector<8x128xf32> to vector<8xf32>
      %573 = vector.shape_cast %572 : vector<8xf32> to vector<8x1xf32>
      %574 = vector.broadcast %573 : vector<8x1xf32> to vector<8x32xf32>
      %575 = arith.cmpf oeq, %1, %574 : vector<8x32xf32>
      %576 = arith.extui %575 : vector<8x32xi1> to vector<8x32xi32>
      %577 = arith.sitofp %576 : vector<8x32xi32> to vector<8x32xf32>
      %578 = arith.truncf %577 : vector<8x32xf32> to vector<8x32xbf16>
      %cst_168 = arith.constant dense<0.000000e+00> : vector<8x256xf32>
      %579 = tpu.matmul %578, %250, %cst_168 {dimension_numbers = #tpu.dot_dimension_numbers<[1], [0], [0], [1], [0, 0, 1, 1], [], []>} : vector<8x32xbf16>, vector<32x256xbf16>, vector<8x256xf32> -> vector<8x256xf32>
      %580 = arith.addf %579, %257 : vector<8x256xf32>
      %c4_169 = arith.constant 4 : index
      %c0_170 = arith.constant 0 : index
      %c0_171 = arith.constant 0 : index
      %581 = vector.load %arg7[%c4_169, %c0_170, %c0_171] : memref<8x8x256xf32, #tpu.memory_space<vmem>>, vector<1x8x256xf32>
      %582 = vector.shape_cast %581 : vector<1x8x256xf32> to vector<8x256xf32>
      %583 = vector.shape_cast %580 : vector<8x256xf32> to vector<1x8x256xf32>
      tpu.vector_store %arg7[%c4_169, %c0_170, %c0_171], %583 {strides = array<i32>} : memref<8x8x256xf32, #tpu.memory_space<vmem>>, vector<1x8x256xf32>,
    } else {
    }
    %c4_120 = arith.constant 4 : index
    %c0_121 = arith.constant 0 : index
    %c0_122 = arith.constant 0 : index
    %421 = vector.load %arg7[%c4_120, %c0_121, %c0_122] : memref<8x8x256xf32, #tpu.memory_space<vmem>>, vector<1x8x256xf32>
    %422 = vector.shape_cast %421 : vector<1x8x256xf32> to vector<8x256xf32>
    %423 = vector.extract_strided_slice %422 {offsets = [0, 0], sizes = [8, 128], strides = [1, 1]} : vector<8x256xf32> to vector<8x128xf32>
    %424 = vector.extract_strided_slice %423 {offsets = [0, 0], sizes = [8, 64], strides = [1, 1]} : vector<8x128xf32> to vector<8x64xf32>
    %425 = vector.extract_strided_slice %416 {offsets = [0, 0], sizes = [8, 64], strides = [1, 1]} : vector<8x128xf32> to vector<8x64xf32>
    %426 = arith.addf %424, %425 : vector<8x64xf32>
    %427 = arith.negf %426 : vector<8x64xf32>
    %428 = math.exp %427 : vector<8x64xf32>
    %cst_123 = arith.constant 1.000000e+00 : f32
    %429 = vector.broadcast %cst_123 : f32 to vector<8x64xf32>
    %430 = arith.addf %429, %428 : vector<8x64xf32>
    %431 = arith.divf %429, %430 : vector<8x64xf32>
    %432 = vector.extract_strided_slice %431 {offsets = [0, 0], sizes = [8, 32], strides = [1, 1]} : vector<8x64xf32> to vector<8x32xf32>
    %433 = vector.extract_strided_slice %431 {offsets = [0, 32], sizes = [8, 32], strides = [1, 1]} : vector<8x64xf32> to vector<8x32xf32>
    %434 = vector.extract_strided_slice %423 {offsets = [0, 64], sizes = [8, 32], strides = [1, 1]} : vector<8x128xf32> to vector<8x32xf32>
    %435 = vector.extract_strided_slice %416 {offsets = [0, 64], sizes = [8, 32], strides = [1, 1]} : vector<8x128xf32> to vector<8x32xf32>
    %436 = arith.mulf %432, %435 : vector<8x32xf32>
    %437 = arith.addf %434, %436 : vector<8x32xf32>
    %438 = math.tanh %437 : vector<8x32xf32>
    %cst_124 = arith.constant 1.000000e+00 : f32
    %439 = vector.broadcast %cst_124 : f32 to vector<8x32xf32>
    %440 = arith.subf %439, %433 : vector<8x32xf32>
    %441 = arith.mulf %440, %438 : vector<8x32xf32>
    %442 = arith.mulf %433, %405 : vector<8x32xf32>
    %443 = arith.addf %441, %442 : vector<8x32xf32>
    %444 = arith.truncf %443 : vector<8x32xf32> to vector<8x32xbf16>
    %cst_125 = arith.constant dense<0.000000e+00> : vector<8x256xf32>
    %445 = tpu.matmul %444, %252, %cst_125 {dimension_numbers = #tpu.dot_dimension_numbers<[1], [0], [0], [1], [0, 0, 1, 1], [], []>} : vector<8x32xbf16>, vector<32x256xbf16>, vector<8x256xf32> -> vector<8x256xf32>
    %446 = vector.extract_strided_slice %422 {offsets = [0, 128], sizes = [8, 128], strides = [1, 1]} : vector<8x256xf32> to vector<8x128xf32>
    %447 = vector.extract_strided_slice %445 {offsets = [0, 128], sizes = [8, 128], strides = [1, 1]} : vector<8x256xf32> to vector<8x128xf32>
    %448 = arith.addf %446, %447 : vector<8x128xf32>
    %c4_126 = arith.constant 4 : index
    %c0_127 = arith.constant 0 : index
    %c0_128 = arith.constant 0 : index
    %449 = vector.load %arg5[%c4_126, %c0_127, %c0_128] : memref<8x8x128xf32, #tpu.memory_space<vmem>>, vector<1x8x128xf32>
    %450 = vector.shape_cast %449 : vector<1x8x128xf32> to vector<8x128xf32>
    %451 = vector.shape_cast %448 : vector<8x128xf32> to vector<1x8x128xf32>
    tpu.vector_store %arg5[%c4_126, %c0_127, %c0_128], %451 {strides = array<i32>} : memref<8x8x128xf32, #tpu.memory_space<vmem>>, vector<1x8x128xf32>,
    %452 = vector.extract_strided_slice %445 {offsets = [0, 0], sizes = [8, 128], strides = [1, 1]} : vector<8x256xf32> to vector<8x128xf32>
    %453 = vector.broadcast %253 : vector<1x128xf32> to vector<8x128xf32>
    %454 = arith.addf %452, %453 : vector<8x128xf32>
    %c4_129 = arith.constant 4 : index
    %455 = memref.load %arg2[%c4_129] : memref<8xi32, #tpu.memory_space<smem>>
    %c0_i32_130 = arith.constant 0 : i32
    %456 = arith.cmpi eq, %455, %c0_i32_130 : i32
    %457 = arith.extui %456 : i1 to i32
    %c0_i32_131 = arith.constant 0 : i32
    %458 = arith.cmpi ne, %457, %c0_i32_131 : i32
    scf.if %458 {
      %cst_165 = arith.constant dense<0xFF800000> : vector<8xf32>
      %566 = vector.multi_reduction <maximumf>, %448, %cst_165 [1] : vector<8x128xf32> to vector<8xf32>
      %567 = vector.shape_cast %566 : vector<8xf32> to vector<8x1xf32>
      %568 = vector.broadcast %567 : vector<8x1xf32> to vector<8x128xf32>
      %569 = arith.cmpf oeq, %448, %568 : vector<8x128xf32>
      %cst_166 = arith.constant 1.280000e+02 : f32
      %570 = vector.broadcast %cst_166 : f32 to vector<8x128xf32>
      %571 = arith.select %569, %3, %570 : vector<8x128xi1>, vector<8x128xf32>
      %cst_167 = arith.constant dense<0x7F800000> : vector<8xf32>
      %572 = vector.multi_reduction <minimumf>, %571, %cst_167 [1] : vector<8x128xf32> to vector<8xf32>
      %573 = vector.shape_cast %572 : vector<8xf32> to vector<8x1xf32>
      %574 = vector.broadcast %573 : vector<8x1xf32> to vector<8x32xf32>
      %575 = arith.cmpf oeq, %1, %574 : vector<8x32xf32>
      %576 = arith.extui %575 : vector<8x32xi1> to vector<8x32xi32>
      %577 = arith.sitofp %576 : vector<8x32xi32> to vector<8x32xf32>
      %578 = arith.truncf %577 : vector<8x32xf32> to vector<8x32xbf16>
      %cst_168 = arith.constant dense<0.000000e+00> : vector<8x256xf32>
      %579 = tpu.matmul %578, %250, %cst_168 {dimension_numbers = #tpu.dot_dimension_numbers<[1], [0], [0], [1], [0, 0, 1, 1], [], []>} : vector<8x32xbf16>, vector<32x256xbf16>, vector<8x256xf32> -> vector<8x256xf32>
      %580 = arith.addf %579, %257 : vector<8x256xf32>
      %c5_169 = arith.constant 5 : index
      %c0_170 = arith.constant 0 : index
      %c0_171 = arith.constant 0 : index
      %581 = vector.load %arg7[%c5_169, %c0_170, %c0_171] : memref<8x8x256xf32, #tpu.memory_space<vmem>>, vector<1x8x256xf32>
      %582 = vector.shape_cast %581 : vector<1x8x256xf32> to vector<8x256xf32>
      %583 = vector.shape_cast %580 : vector<8x256xf32> to vector<1x8x256xf32>
      tpu.vector_store %arg7[%c5_169, %c0_170, %c0_171], %583 {strides = array<i32>} : memref<8x8x256xf32, #tpu.memory_space<vmem>>, vector<1x8x256xf32>,
    } else {
    }
    %c5_132 = arith.constant 5 : index
    %c0_133 = arith.constant 0 : index
    %c0_134 = arith.constant 0 : index
    %459 = vector.load %arg7[%c5_132, %c0_133, %c0_134] : memref<8x8x256xf32, #tpu.memory_space<vmem>>, vector<1x8x256xf32>
    %460 = vector.shape_cast %459 : vector<1x8x256xf32> to vector<8x256xf32>
    %461 = vector.extract_strided_slice %460 {offsets = [0, 0], sizes = [8, 128], strides = [1, 1]} : vector<8x256xf32> to vector<8x128xf32>
    %462 = vector.extract_strided_slice %461 {offsets = [0, 0], sizes = [8, 64], strides = [1, 1]} : vector<8x128xf32> to vector<8x64xf32>
    %463 = vector.extract_strided_slice %454 {offsets = [0, 0], sizes = [8, 64], strides = [1, 1]} : vector<8x128xf32> to vector<8x64xf32>
    %464 = arith.addf %462, %463 : vector<8x64xf32>
    %465 = arith.negf %464 : vector<8x64xf32>
    %466 = math.exp %465 : vector<8x64xf32>
    %cst_135 = arith.constant 1.000000e+00 : f32
    %467 = vector.broadcast %cst_135 : f32 to vector<8x64xf32>
    %468 = arith.addf %467, %466 : vector<8x64xf32>
    %469 = arith.divf %467, %468 : vector<8x64xf32>
    %470 = vector.extract_strided_slice %469 {offsets = [0, 0], sizes = [8, 32], strides = [1, 1]} : vector<8x64xf32> to vector<8x32xf32>
    %471 = vector.extract_strided_slice %469 {offsets = [0, 32], sizes = [8, 32], strides = [1, 1]} : vector<8x64xf32> to vector<8x32xf32>
    %472 = vector.extract_strided_slice %461 {offsets = [0, 64], sizes = [8, 32], strides = [1, 1]} : vector<8x128xf32> to vector<8x32xf32>
    %473 = vector.extract_strided_slice %454 {offsets = [0, 64], sizes = [8, 32], strides = [1, 1]} : vector<8x128xf32> to vector<8x32xf32>
    %474 = arith.mulf %470, %473 : vector<8x32xf32>
    %475 = arith.addf %472, %474 : vector<8x32xf32>
    %476 = math.tanh %475 : vector<8x32xf32>
    %cst_136 = arith.constant 1.000000e+00 : f32
    %477 = vector.broadcast %cst_136 : f32 to vector<8x32xf32>
    %478 = arith.subf %477, %471 : vector<8x32xf32>
    %479 = arith.mulf %478, %476 : vector<8x32xf32>
    %480 = arith.mulf %471, %443 : vector<8x32xf32>
    %481 = arith.addf %479, %480 : vector<8x32xf32>
    %482 = arith.truncf %481 : vector<8x32xf32> to vector<8x32xbf16>
    %cst_137 = arith.constant dense<0.000000e+00> : vector<8x256xf32>
    %483 = tpu.matmul %482, %252, %cst_137 {dimension_numbers = #tpu.dot_dimension_numbers<[1], [0], [0], [1], [0, 0, 1, 1], [], []>} : vector<8x32xbf16>, vector<32x256xbf16>, vector<8x256xf32> -> vector<8x256xf32>
    %484 = vector.extract_strided_slice %460 {offsets = [0, 128], sizes = [8, 128], strides = [1, 1]} : vector<8x256xf32> to vector<8x128xf32>
    %485 = vector.extract_strided_slice %483 {offsets = [0, 128], sizes = [8, 128], strides = [1, 1]} : vector<8x256xf32> to vector<8x128xf32>
    %486 = arith.addf %484, %485 : vector<8x128xf32>
    %c5_138 = arith.constant 5 : index
    %c0_139 = arith.constant 0 : index
    %c0_140 = arith.constant 0 : index
    %487 = vector.load %arg5[%c5_138, %c0_139, %c0_140] : memref<8x8x128xf32, #tpu.memory_space<vmem>>, vector<1x8x128xf32>
    %488 = vector.shape_cast %487 : vector<1x8x128xf32> to vector<8x128xf32>
    %489 = vector.shape_cast %486 : vector<8x128xf32> to vector<1x8x128xf32>
    tpu.vector_store %arg5[%c5_138, %c0_139, %c0_140], %489 {strides = array<i32>} : memref<8x8x128xf32, #tpu.memory_space<vmem>>, vector<1x8x128xf32>,
    %490 = vector.extract_strided_slice %483 {offsets = [0, 0], sizes = [8, 128], strides = [1, 1]} : vector<8x256xf32> to vector<8x128xf32>
    %491 = vector.broadcast %253 : vector<1x128xf32> to vector<8x128xf32>
    %492 = arith.addf %490, %491 : vector<8x128xf32>
    %c5_141 = arith.constant 5 : index
    %493 = memref.load %arg2[%c5_141] : memref<8xi32, #tpu.memory_space<smem>>
    %c0_i32_142 = arith.constant 0 : i32
    %494 = arith.cmpi eq, %493, %c0_i32_142 : i32
    %495 = arith.extui %494 : i1 to i32
    %c0_i32_143 = arith.constant 0 : i32
    %496 = arith.cmpi ne, %495, %c0_i32_143 : i32
    scf.if %496 {
      %cst_165 = arith.constant dense<0xFF800000> : vector<8xf32>
      %566 = vector.multi_reduction <maximumf>, %486, %cst_165 [1] : vector<8x128xf32> to vector<8xf32>
      %567 = vector.shape_cast %566 : vector<8xf32> to vector<8x1xf32>
      %568 = vector.broadcast %567 : vector<8x1xf32> to vector<8x128xf32>
      %569 = arith.cmpf oeq, %486, %568 : vector<8x128xf32>
      %cst_166 = arith.constant 1.280000e+02 : f32
      %570 = vector.broadcast %cst_166 : f32 to vector<8x128xf32>
      %571 = arith.select %569, %3, %570 : vector<8x128xi1>, vector<8x128xf32>
      %cst_167 = arith.constant dense<0x7F800000> : vector<8xf32>
      %572 = vector.multi_reduction <minimumf>, %571, %cst_167 [1] : vector<8x128xf32> to vector<8xf32>
      %573 = vector.shape_cast %572 : vector<8xf32> to vector<8x1xf32>
      %574 = vector.broadcast %573 : vector<8x1xf32> to vector<8x32xf32>
      %575 = arith.cmpf oeq, %1, %574 : vector<8x32xf32>
      %576 = arith.extui %575 : vector<8x32xi1> to vector<8x32xi32>
      %577 = arith.sitofp %576 : vector<8x32xi32> to vector<8x32xf32>
      %578 = arith.truncf %577 : vector<8x32xf32> to vector<8x32xbf16>
      %cst_168 = arith.constant dense<0.000000e+00> : vector<8x256xf32>
      %579 = tpu.matmul %578, %250, %cst_168 {dimension_numbers = #tpu.dot_dimension_numbers<[1], [0], [0], [1], [0, 0, 1, 1], [], []>} : vector<8x32xbf16>, vector<32x256xbf16>, vector<8x256xf32> -> vector<8x256xf32>
      %580 = arith.addf %579, %257 : vector<8x256xf32>
      %c6_169 = arith.constant 6 : index
      %c0_170 = arith.constant 0 : index
      %c0_171 = arith.constant 0 : index
      %581 = vector.load %arg7[%c6_169, %c0_170, %c0_171] : memref<8x8x256xf32, #tpu.memory_space<vmem>>, vector<1x8x256xf32>
      %582 = vector.shape_cast %581 : vector<1x8x256xf32> to vector<8x256xf32>
      %583 = vector.shape_cast %580 : vector<8x256xf32> to vector<1x8x256xf32>
      tpu.vector_store %arg7[%c6_169, %c0_170, %c0_171], %583 {strides = array<i32>} : memref<8x8x256xf32, #tpu.memory_space<vmem>>, vector<1x8x256xf32>,
    } else {
    }
    %c6_144 = arith.constant 6 : index
    %c0_145 = arith.constant 0 : index
    %c0_146 = arith.constant 0 : index
    %497 = vector.load %arg7[%c6_144, %c0_145, %c0_146] : memref<8x8x256xf32, #tpu.memory_space<vmem>>, vector<1x8x256xf32>
    %498 = vector.shape_cast %497 : vector<1x8x256xf32> to vector<8x256xf32>
    %499 = vector.extract_strided_slice %498 {offsets = [0, 0], sizes = [8, 128], strides = [1, 1]} : vector<8x256xf32> to vector<8x128xf32>
    %500 = vector.extract_strided_slice %499 {offsets = [0, 0], sizes = [8, 64], strides = [1, 1]} : vector<8x128xf32> to vector<8x64xf32>
    %501 = vector.extract_strided_slice %492 {offsets = [0, 0], sizes = [8, 64], strides = [1, 1]} : vector<8x128xf32> to vector<8x64xf32>
    %502 = arith.addf %500, %501 : vector<8x64xf32>
    %503 = arith.negf %502 : vector<8x64xf32>
    %504 = math.exp %503 : vector<8x64xf32>
    %cst_147 = arith.constant 1.000000e+00 : f32
    %505 = vector.broadcast %cst_147 : f32 to vector<8x64xf32>
    %506 = arith.addf %505, %504 : vector<8x64xf32>
    %507 = arith.divf %505, %506 : vector<8x64xf32>
    %508 = vector.extract_strided_slice %507 {offsets = [0, 0], sizes = [8, 32], strides = [1, 1]} : vector<8x64xf32> to vector<8x32xf32>
    %509 = vector.extract_strided_slice %507 {offsets = [0, 32], sizes = [8, 32], strides = [1, 1]} : vector<8x64xf32> to vector<8x32xf32>
    %510 = vector.extract_strided_slice %499 {offsets = [0, 64], sizes = [8, 32], strides = [1, 1]} : vector<8x128xf32> to vector<8x32xf32>
    %511 = vector.extract_strided_slice %492 {offsets = [0, 64], sizes = [8, 32], strides = [1, 1]} : vector<8x128xf32> to vector<8x32xf32>
    %512 = arith.mulf %508, %511 : vector<8x32xf32>
    %513 = arith.addf %510, %512 : vector<8x32xf32>
    %514 = math.tanh %513 : vector<8x32xf32>
    %cst_148 = arith.constant 1.000000e+00 : f32
    %515 = vector.broadcast %cst_148 : f32 to vector<8x32xf32>
    %516 = arith.subf %515, %509 : vector<8x32xf32>
    %517 = arith.mulf %516, %514 : vector<8x32xf32>
    %518 = arith.mulf %509, %481 : vector<8x32xf32>
    %519 = arith.addf %517, %518 : vector<8x32xf32>
    %520 = arith.truncf %519 : vector<8x32xf32> to vector<8x32xbf16>
    %cst_149 = arith.constant dense<0.000000e+00> : vector<8x256xf32>
    %521 = tpu.matmul %520, %252, %cst_149 {dimension_numbers = #tpu.dot_dimension_numbers<[1], [0], [0], [1], [0, 0, 1, 1], [], []>} : vector<8x32xbf16>, vector<32x256xbf16>, vector<8x256xf32> -> vector<8x256xf32>
    %522 = vector.extract_strided_slice %498 {offsets = [0, 128], sizes = [8, 128], strides = [1, 1]} : vector<8x256xf32> to vector<8x128xf32>
    %523 = vector.extract_strided_slice %521 {offsets = [0, 128], sizes = [8, 128], strides = [1, 1]} : vector<8x256xf32> to vector<8x128xf32>
    %524 = arith.addf %522, %523 : vector<8x128xf32>
    %c6_150 = arith.constant 6 : index
    %c0_151 = arith.constant 0 : index
    %c0_152 = arith.constant 0 : index
    %525 = vector.load %arg5[%c6_150, %c0_151, %c0_152] : memref<8x8x128xf32, #tpu.memory_space<vmem>>, vector<1x8x128xf32>
    %526 = vector.shape_cast %525 : vector<1x8x128xf32> to vector<8x128xf32>
    %527 = vector.shape_cast %524 : vector<8x128xf32> to vector<1x8x128xf32>
    tpu.vector_store %arg5[%c6_150, %c0_151, %c0_152], %527 {strides = array<i32>} : memref<8x8x128xf32, #tpu.memory_space<vmem>>, vector<1x8x128xf32>,
    %528 = vector.extract_strided_slice %521 {offsets = [0, 0], sizes = [8, 128], strides = [1, 1]} : vector<8x256xf32> to vector<8x128xf32>
    %529 = vector.broadcast %253 : vector<1x128xf32> to vector<8x128xf32>
    %530 = arith.addf %528, %529 : vector<8x128xf32>
    %c6_153 = arith.constant 6 : index
    %531 = memref.load %arg2[%c6_153] : memref<8xi32, #tpu.memory_space<smem>>
    %c0_i32_154 = arith.constant 0 : i32
    %532 = arith.cmpi eq, %531, %c0_i32_154 : i32
    %533 = arith.extui %532 : i1 to i32
    %c0_i32_155 = arith.constant 0 : i32
    %534 = arith.cmpi ne, %533, %c0_i32_155 : i32
    scf.if %534 {
      %cst_165 = arith.constant dense<0xFF800000> : vector<8xf32>
      %566 = vector.multi_reduction <maximumf>, %524, %cst_165 [1] : vector<8x128xf32> to vector<8xf32>
      %567 = vector.shape_cast %566 : vector<8xf32> to vector<8x1xf32>
      %568 = vector.broadcast %567 : vector<8x1xf32> to vector<8x128xf32>
      %569 = arith.cmpf oeq, %524, %568 : vector<8x128xf32>
      %cst_166 = arith.constant 1.280000e+02 : f32
      %570 = vector.broadcast %cst_166 : f32 to vector<8x128xf32>
      %571 = arith.select %569, %3, %570 : vector<8x128xi1>, vector<8x128xf32>
      %cst_167 = arith.constant dense<0x7F800000> : vector<8xf32>
      %572 = vector.multi_reduction <minimumf>, %571, %cst_167 [1] : vector<8x128xf32> to vector<8xf32>
      %573 = vector.shape_cast %572 : vector<8xf32> to vector<8x1xf32>
      %574 = vector.broadcast %573 : vector<8x1xf32> to vector<8x32xf32>
      %575 = arith.cmpf oeq, %1, %574 : vector<8x32xf32>
      %576 = arith.extui %575 : vector<8x32xi1> to vector<8x32xi32>
      %577 = arith.sitofp %576 : vector<8x32xi32> to vector<8x32xf32>
      %578 = arith.truncf %577 : vector<8x32xf32> to vector<8x32xbf16>
      %cst_168 = arith.constant dense<0.000000e+00> : vector<8x256xf32>
      %579 = tpu.matmul %578, %250, %cst_168 {dimension_numbers = #tpu.dot_dimension_numbers<[1], [0], [0], [1], [0, 0, 1, 1], [], []>} : vector<8x32xbf16>, vector<32x256xbf16>, vector<8x256xf32> -> vector<8x256xf32>
      %580 = arith.addf %579, %257 : vector<8x256xf32>
      %c7_169 = arith.constant 7 : index
      %c0_170 = arith.constant 0 : index
      %c0_171 = arith.constant 0 : index
      %581 = vector.load %arg7[%c7_169, %c0_170, %c0_171] : memref<8x8x256xf32, #tpu.memory_space<vmem>>, vector<1x8x256xf32>
      %582 = vector.shape_cast %581 : vector<1x8x256xf32> to vector<8x256xf32>
      %583 = vector.shape_cast %580 : vector<8x256xf32> to vector<1x8x256xf32>
      tpu.vector_store %arg7[%c7_169, %c0_170, %c0_171], %583 {strides = array<i32>} : memref<8x8x256xf32, #tpu.memory_space<vmem>>, vector<1x8x256xf32>,
    } else {
    }
    %c7_156 = arith.constant 7 : index
    %c0_157 = arith.constant 0 : index
    %c0_158 = arith.constant 0 : index
    %535 = vector.load %arg7[%c7_156, %c0_157, %c0_158] : memref<8x8x256xf32, #tpu.memory_space<vmem>>, vector<1x8x256xf32>
    %536 = vector.shape_cast %535 : vector<1x8x256xf32> to vector<8x256xf32>
    %537 = vector.extract_strided_slice %536 {offsets = [0, 0], sizes = [8, 128], strides = [1, 1]} : vector<8x256xf32> to vector<8x128xf32>
    %538 = vector.extract_strided_slice %537 {offsets = [0, 0], sizes = [8, 64], strides = [1, 1]} : vector<8x128xf32> to vector<8x64xf32>
    %539 = vector.extract_strided_slice %530 {offsets = [0, 0], sizes = [8, 64], strides = [1, 1]} : vector<8x128xf32> to vector<8x64xf32>
    %540 = arith.addf %538, %539 : vector<8x64xf32>
    %541 = arith.negf %540 : vector<8x64xf32>
    %542 = math.exp %541 : vector<8x64xf32>
    %cst_159 = arith.constant 1.000000e+00 : f32
    %543 = vector.broadcast %cst_159 : f32 to vector<8x64xf32>
    %544 = arith.addf %543, %542 : vector<8x64xf32>
    %545 = arith.divf %543, %544 : vector<8x64xf32>
    %546 = vector.extract_strided_slice %545 {offsets = [0, 0], sizes = [8, 32], strides = [1, 1]} : vector<8x64xf32> to vector<8x32xf32>
    %547 = vector.extract_strided_slice %545 {offsets = [0, 32], sizes = [8, 32], strides = [1, 1]} : vector<8x64xf32> to vector<8x32xf32>
    %548 = vector.extract_strided_slice %537 {offsets = [0, 64], sizes = [8, 32], strides = [1, 1]} : vector<8x128xf32> to vector<8x32xf32>
    %549 = vector.extract_strided_slice %530 {offsets = [0, 64], sizes = [8, 32], strides = [1, 1]} : vector<8x128xf32> to vector<8x32xf32>
    %550 = arith.mulf %546, %549 : vector<8x32xf32>
    %551 = arith.addf %548, %550 : vector<8x32xf32>
    %552 = math.tanh %551 : vector<8x32xf32>
    %cst_160 = arith.constant 1.000000e+00 : f32
    %553 = vector.broadcast %cst_160 : f32 to vector<8x32xf32>
    %554 = arith.subf %553, %547 : vector<8x32xf32>
    %555 = arith.mulf %554, %552 : vector<8x32xf32>
    %556 = arith.mulf %547, %519 : vector<8x32xf32>
    %557 = arith.addf %555, %556 : vector<8x32xf32>
    %558 = arith.truncf %557 : vector<8x32xf32> to vector<8x32xbf16>
    %cst_161 = arith.constant dense<0.000000e+00> : vector<8x256xf32>
    %559 = tpu.matmul %558, %252, %cst_161 {dimension_numbers = #tpu.dot_dimension_numbers<[1], [0], [0], [1], [0, 0, 1, 1], [], []>} : vector<8x32xbf16>, vector<32x256xbf16>, vector<8x256xf32> -> vector<8x256xf32>
    %560 = vector.extract_strided_slice %536 {offsets = [0, 128], sizes = [8, 128], strides = [1, 1]} : vector<8x256xf32> to vector<8x128xf32>
    %561 = vector.extract_strided_slice %559 {offsets = [0, 128], sizes = [8, 128], strides = [1, 1]} : vector<8x256xf32> to vector<8x128xf32>
    %562 = arith.addf %560, %561 : vector<8x128xf32>
    %c7_162 = arith.constant 7 : index
    %c0_163 = arith.constant 0 : index
    %c0_164 = arith.constant 0 : index
    %563 = vector.load %arg5[%c7_162, %c0_163, %c0_164] : memref<8x8x128xf32, #tpu.memory_space<vmem>>, vector<1x8x128xf32>
    %564 = vector.shape_cast %563 : vector<1x8x128xf32> to vector<8x128xf32>
    %565 = vector.shape_cast %562 : vector<8x128xf32> to vector<1x8x128xf32>
    tpu.vector_store %arg5[%c7_162, %c0_163, %c0_164], %565 {strides = array<i32>} : memref<8x8x128xf32, #tpu.memory_space<vmem>>, vector<1x8x128xf32>,
    return
  }
}

</mosaic_0001>

<llo_original>
// kernel: seq2seq_forward.1
$region0: #{seq2seq_forward.1}
  #allocation0 [shape = 'u32[]', space=smem, size = 0x4, offset = 0x4, fixed_abs, tag = 'smem constant byte address 0x4 - core index']
  #allocation1 [shape = 'u32[144,128]{1,0:T(1,128)}', space=vmem, size = 0x12000, scoped, tag = 'internal scratch']
  #allocation2 [shape = 'f32[9,8,128]{2,1,0:T(8,128)}', space=vmem, size = 0x9000, scoped, tag = 'scratch operand']
  #allocation3 [shape = 'f32[8,8,256]{2,1,0:T(8,128)}', space=vmem, size = 0x10000, scoped, tag = 'scratch operand']
  %s0 = inlined_call_operand.vmem [shape: bf16[72,32], index: 0, kind: input, shape index: {}]
  %s1 = inlined_call_operand.vmem [shape: bf16[64,32], index: 1, kind: input, shape index: {}]
  %s2 = inlined_call_operand.vmem [shape: s32[8], index: 2, kind: input, shape index: {}]
  %s3 = inlined_call_operand.vmem [shape: bf16[160,256], index: 3, kind: input, shape index: {}]
  %s4 = inlined_call_operand.vmem [shape: f32[8,256], index: 4, kind: input, shape index: {}]
  %s5 = inlined_call_operand.vmem [shape: f32[8,8,128], index: 5, kind: output, shape index: {}]
  %s6 = sld [smem:[#allocation0]]
  $region62: #{seq2seq_forward.1} parent=0
    _
  %s8 = ssub.s32 1, %s6
  %s9 = scalar_select 0, %s8, %s6
  $region1: #{seq2seq_forward.1} parent=0
    #allocation4 [shape = 'u8[512]{0}', space=smem, size = 0x200, scoped, tag = 'input window, operand 2, single buffered']
    #allocation5 [shape = 's32[1]{0}', space=sflag, size = 0x4, scoped, tag = 'scoped memory for seq2seq_forward.1']
    %10 = vsyncpa [#allocation5], 0
    // Predicated region
    $region2: #{seq2seq_forward.1} parent=1 // pred_check
      _
    $region3: #{seq2seq_forward.1} parent=1 // pred_check_branch
      %12 = sbr.rel (0) target = $region5
    $region4: #{seq2seq_forward.1} parent=1 // pred_region
      _
    $region5: #{seq2seq_forward.1} parent=1 // pred_fallthru
      _
    // Predicated region
    $region6: #{seq2seq_forward.1} parent=1 // pred_check
      _
    $region7: #{seq2seq_forward.1} parent=1 // pred_check_branch
      %14 = sbr.rel (0) target = $region9
    $region8: #{seq2seq_forward.1} parent=1 // pred_region
      _
    $region9: #{seq2seq_forward.1} parent=1 // pred_fallthru
      _
    // Predicated region
    $region10: #{seq2seq_forward.1} parent=1 // pred_check
      _
    $region11: #{seq2seq_forward.1} parent=1 // pred_check_branch
      %16 = sbr.rel (0) target = $region13
    $region12: #{seq2seq_forward.1} parent=1 // pred_region
      %s18 = ssub.s32 16, 16
      %19 = vsyncadd [#allocation5], %s18
      %s21 = sshll.u32 %s2, 4
      %s22 = int_to_ptr.vmem [resolvable:$true] %s21
      %24 = dma.vmem_to_smem %s22, 16, [#allocation4], [#allocation5]
    $region13: #{seq2seq_forward.1} parent=1 // pred_fallthru
      _
    // Predicated region
    $region14: #{seq2seq_forward.1} parent=1 // pred_check
      _
    $region15: #{seq2seq_forward.1} parent=1 // pred_check_branch
      %26 = sbr.rel (0) target = $region17
    $region16: #{seq2seq_forward.1} parent=1 // pred_region
      _
    $region17: #{seq2seq_forward.1} parent=1 // pred_fallthru
      _
    // Predicated region
    $region18: #{seq2seq_forward.1} parent=1 // pred_check
      _
    $region19: #{seq2seq_forward.1} parent=1 // pred_check_branch
      %28 = sbr.rel (0) target = $region21
    $region20: #{seq2seq_forward.1} parent=1 // pred_region
      _
    $region21: #{seq2seq_forward.1} parent=1 // pred_fallthru
      _
    // Predicated region
    $region22: #{seq2seq_forward.1} parent=1 // pred_check
      _
    $region23: #{seq2seq_forward.1} parent=1 // pred_check_branch
      %30 = sbr.rel (0) target = $region25
    $region24: #{seq2seq_forward.1} parent=1 // pred_region
      %31 = dma.done [#allocation5], 16
    $region25: #{seq2seq_forward.1} parent=1 // pred_fallthru
      _
    %32 = sfence
    %v34 = vlaneseq
    %v35 = vand.u32 %v34, 127
    %v36 = vcvt.s32.f32 %v35
    %v37 = vld [vmem:[%s3] sm:$0xf]
    %v38 = vld [vmem:[%s3 + $0x8] sm:$0xf]
    %v39 = vld [vmem:[%s3 + $0x10] sm:$0xf]
    %v40 = vld [vmem:[%s3 + $0x18] sm:$0xf]
    %v41 = vld [vmem:[%s0] sm:$0xf]
    %v42 = vld [vmem:[%s0 + $0x4] sm:$0xf]
    %v43 = vld [vmem:[%s0 + $0x8] sm:$0xf]
    %v44 = vld [vmem:[%s0 + $0xc] sm:$0xf]
    %v45 = vld [vmem:[%s0 + $0x10] sm:$0xf]
    %v46 = vld [vmem:[%s0 + $0x14] sm:$0xf]
    %v47 = vld [vmem:[%s0 + $0x18] sm:$0xf]
    %v48 = vld [vmem:[%s0 + $0x1c] sm:$0xf]
    %v49 = vld [vmem:[%s0 + $0x20] sm:$0xf]
    %v50 = vld [vmem:[%s4] ss:$0 sm:$0xff]
    %v60 = vunpack.c.l.b16 %v41
    %v61 = vunpack.c.l.b16 %v42
    %v62 = vunpack.c.l.b16 %v43
    %v63 = vunpack.c.l.b16 %v44
    %v64 = vunpack.c.l.b16 %v45
    %v65 = vunpack.c.l.b16 %v46
    %v66 = vunpack.c.l.b16 %v47
    %v67 = vunpack.c.l.b16 %v48
    %v68 = vunpack.c.l.b16 %v49
    %v69 = vpack.c.b16 %v61, %v60
    %v70 = vpack.c.b16 %v63, %v62
    %v71 = vpack.c.b16 %v65, %v64
    %v72 = vpack.c.b16 %v67, %v66
    %v73 = vpack.c.b16 %v68, %v68
    %v78 = vunpack.c.l.b16 %v37
    %v79 = vunpack.c.l.b16 %v38
    %v80 = vunpack.c.l.b16 %v39
    %v81 = vunpack.c.l.b16 %v40
    %v82 = vpack.c.b16 %v79, %v78
    %v83 = vpack.c.b16 %v81, %v80
    %vm86 = vcmask 261120
    %v88 = vsel %vm86, %v69, 0
    %v91 = vsel %vm86, %v70, 0
    %v94 = vsel %vm86, %v71, 0
    %v97 = vsel %vm86, %v72, 0
    %v100 = vsel %vm86, %v73, 0
    %102 = vmatprep.subr.bf16.mxu0 0
    %103 = vmatpush1.bf16.msra.mxu0 0
    %104 = vmatprep.subr.bf16.mxu0 0
    %105 = vmatpush1.bf16.msra.mxu0 0
    %106 = vmatprep.subr.bf16.mxu0 0
    %107 = vmatpush1.bf16.msra.mxu0 0
    %108 = vmatprep.subr.bf16.mxu0 0
    %109 = vmatpush1.bf16.msra.mxu0 0
    %110 = vmatprep.subr.bf16.mxu0 0
    %111 = vmatpush1.bf16.msra.mxu0 0
    %112 = vmatprep.subr.bf16.mxu0 0
    %113 = vmatpush1.bf16.msra.mxu0 0
    %114 = vmatprep.subr.bf16.mxu0 0
    %115 = vmatpush1.bf16.msra.mxu0 %v83
    %116 = vmatprep.subr.bf16.mxu0 0
    %117 = vmatpush1.bf16.msra.mxu0 %v82
    %118 = vmatprep.subr.bf16.mxu0 0
    %119 = vmatpush2.bf16.msra.mxu0 0
    %120 = vmatprep.subr.bf16.mxu0 0
    %121 = vmatpush2.bf16.msra.mxu0 0
    %122 = vmatprep.subr.bf16.mxu0 0
    %123 = vmatpush2.bf16.msra.mxu0 0
    %124 = vmatprep.subr.bf16.mxu0 0
    %125 = vmatpush2.bf16.msra.mxu0 0
    %126 = vmatprep.subr.bf16.mxu0 0
    %127 = vmatpush2.bf16.msra.mxu0 0
    %128 = vmatprep.subr.bf16.mxu0 0
    %129 = vmatpush2.bf16.msra.mxu0 0
    %130 = vmatprep.subr.bf16.mxu0 0
    %131 = vmatpush2.bf16.msra.mxu0 0
    %132 = vmatprep.subr.bf16.mxu0 0
    %133 = vmatpush2.bf16.msra.mxu0 0
    %134 = vmatprep.mubr.bf16.mxu0 0
    %135 = vmatmul.mubr.bf16.gmra.mxu0 %v88
    %v136 = vpop.f32.mrf.mxu0
    %v137 = vadd.f32 %v50, %v136
    %v138 = vpop.f32.mrf.mxu0
    %v139 = vpop.f32.mrf.mxu0
    %v140 = vadd.f32 %v50, %v139
    %v141 = vpop.f32.mrf.mxu0
    %142 = vmatprep.mubr.bf16.mxu0 0
    %143 = vmatmul.mubr.bf16.gmra.mxu0 %v91
    %v144 = vpop.f32.mrf.mxu0
    %v145 = vadd.f32 %v50, %v144
    %v146 = vpop.f32.mrf.mxu0
    %v147 = vpop.f32.mrf.mxu0
    %v148 = vadd.f32 %v50, %v147
    %v149 = vpop.f32.mrf.mxu0
    %150 = vmatprep.mubr.bf16.mxu0 0
    %151 = vmatmul.mubr.bf16.gmra.mxu0 %v94
    %v152 = vpop.f32.mrf.mxu0
    %v153 = vadd.f32 %v50, %v152
    %v154 = vpop.f32.mrf.mxu0
    %v155 = vpop.f32.mrf.mxu0
    %v156 = vadd.f32 %v50, %v155
    %v157 = vpop.f32.mrf.mxu0
    %158 = vmatprep.mubr.bf16.mxu0 0
    %159 = vmatmul.mubr.bf16.gmra.mxu0 %v97
    %v160 = vpop.f32.mrf.mxu0
    %v161 = vadd.f32 %v50, %v160
    %v162 = vpop.f32.mrf.mxu0
    %v163 = vpop.f32.mrf.mxu0
    %v164 = vadd.f32 %v50, %v163
    %v165 = vpop.f32.mrf.mxu0
    %166 = vmatprep.mubr.bf16.mxu0 0
    %167 = vmatmul.mubr.bf16.gmra.mxu0 %v100
    %v168 = vpop.f32.mrf.mxu0
    %v169 = vadd.f32 %v50, %v168
    %v170 = vpop.f32.mrf.mxu0
    %v171 = vpop.f32.mrf.mxu0
    %v172 = vpop.f32.mrf.mxu0
    %173 = vdwg.mxu0
    %174 = vst [vmem:[#allocation2] sm:$0xff] %v137
    %175 = vst [vmem:[#allocation2 + $0x8] sm:$0xff] %v140
    %176 = vst [vmem:[#allocation2 + $0x10] sm:$0xff] %v145
    %177 = vst [vmem:[#allocation2 + $0x18] sm:$0xff] %v148
    %178 = vst [vmem:[#allocation2 + $0x20] sm:$0xff] %v153
    %179 = vst [vmem:[#allocation2 + $0x28] sm:$0xff] %v156
    %180 = vst [vmem:[#allocation2 + $0x30] sm:$0xff] %v161
    %181 = vst [vmem:[#allocation2 + $0x38] sm:$0xff] %v164
    %182 = vst [vmem:[#allocation2 + $0x40] sm:$0xff] %v169
    %v183 = vld [vmem:[%s3 + $0x20] sm:$0xf]
    %v184 = vld [vmem:[%s3 + $0x28] sm:$0xf]
    %v185 = vld [vmem:[%s3 + $0x30] sm:$0xf]
    %v186 = vld [vmem:[%s3 + $0x38] sm:$0xf]
    %v187 = vld [vmem:[%s4 + $0x1] ss:$0 sm:$0xff]
    %v188 = vld [vmem:[#allocation2] sm:$0xff]
    %v193 = vunpack.c.l.b16 %v183
    %v194 = vunpack.c.l.b16 %v184
    %v195 = vunpack.c.l.b16 %v185
    %v196 = vunpack.c.l.b16 %v186
    %v197 = vpack.c.b16 %v194, %v193
    %v198 = vpack.c.b16 %v196, %v195
    %v202 = vsel %vm86, 0, 0
    %204 = vmatprep.subr.bf16.mxu0 0
    %205 = vmatpush1.bf16.msra.mxu0 0
    %206 = vmatprep.subr.bf16.mxu0 0
    %207 = vmatpush1.bf16.msra.mxu0 0
    %208 = vmatprep.subr.bf16.mxu0 0
    %209 = vmatpush1.bf16.msra.mxu0 0
    %210 = vmatprep.subr.bf16.mxu0 0
    %211 = vmatpush1.bf16.msra.mxu0 0
    %212 = vmatprep.subr.bf16.mxu0 0
    %213 = vmatpush1.bf16.msra.mxu0 0
    %214 = vmatprep.subr.bf16.mxu0 0
    %215 = vmatpush1.bf16.msra.mxu0 0
    %216 = vmatprep.subr.bf16.mxu0 0
    %217 = vmatpush1.bf16.msra.mxu0 %v198
    %218 = vmatprep.subr.bf16.mxu0 0
    %219 = vmatpush1.bf16.msra.mxu0 %v197
    %220 = vmatprep.subr.bf16.mxu0 0
    %221 = vmatpush2.bf16.msra.mxu0 0
    %222 = vmatprep.subr.bf16.mxu0 0
    %223 = vmatpush2.bf16.msra.mxu0 0
    %224 = vmatprep.subr.bf16.mxu0 0
    %225 = vmatpush2.bf16.msra.mxu0 0
    %226 = vmatprep.subr.bf16.mxu0 0
    %227 = vmatpush2.bf16.msra.mxu0 0
    %228 = vmatprep.subr.bf16.mxu0 0
    %229 = vmatpush2.bf16.msra.mxu0 0
    %230 = vmatprep.subr.bf16.mxu0 0
    %231 = vmatpush2.bf16.msra.mxu0 0
    %232 = vmatprep.subr.bf16.mxu0 0
    %233 = vmatpush2.bf16.msra.mxu0 0
    %234 = vmatprep.subr.bf16.mxu0 0
    %235 = vmatpush2.bf16.msra.mxu0 0
    %236 = vmatprep.mubr.bf16.mxu0 0
    %237 = vmatmul.mubr.bf16.gmra.mxu0 %v202
    %v238 = vpop.f32.mrf.mxu0
    %v239 = vadd.f32 %v187, %v238
    %v240 = vpop.f32.mrf.mxu0
    %v241 = vpop.f32.mrf.mxu0
    %v242 = vpop.f32.mrf.mxu0
    %243 = vdwg.mxu0
    %v244 = vadd.f32 %v188, %v239
    %v245 = vxor.u32 %v244, 2147483648
    %v246 = vmul.f32 %v245, 1.442695
    %v247 = vpow.pop %v246
    %v248 = vadd.f32 %v247, 1.0
    %v249 = vrcp.pop %v248
    %v250 = vmul.f32 1.0, %v249
    %252 = vrot.lane.b32.xlu0 %v239, 64
    %v253 = vpop.permute.xlu0 %252
    %v255 = vmul.f32 %v250, %v253
    %257 = vrot.lane.b32.xlu0 %v255, 64
    %v258 = vpop.permute.xlu0 %257
    %v260 = vadd.f32 %v188, %v258
    %v261 = vtanh.pop %v260
    %v262 = vsub.f32 1.0, %v250
    %264 = vrot.lane.b32.xlu0 %v261, 96
    %v265 = vpop.permute.xlu0 %264
    %v267 = vmul.f32 %v262, %v265
    %v268 = vmul.f32 %v250, 0.0
    %v269 = vadd.f32 %v267, %v268
    %s270 = scalar_lea.vmem [#allocation2], 8
    %v271 = vld [vmem:[%s270] sm:$0xff]
    %v272 = vpack.c.bf16 %v269, %v269
    %274 = vrot.lane.b32.xlu0 %v272, 96
    %v275 = vpop.permute.xlu0 %274
    %v277 = vsel %vm86, %v275, 0
    %279 = vmatprep.subr.bf16.mxu0 0
    %280 = vmatpush1.bf16.msra.mxu0 0
    %281 = vmatprep.subr.bf16.mxu0 0
    %282 = vmatpush1.bf16.msra.mxu0 0
    %283 = vmatprep.subr.bf16.mxu0 0
    %284 = vmatpush1.bf16.msra.mxu0 0
    %285 = vmatprep.subr.bf16.mxu0 0
    %286 = vmatpush1.bf16.msra.mxu0 0
    %287 = vmatprep.subr.bf16.mxu0 0
    %288 = vmatpush1.bf16.msra.mxu0 0
    %289 = vmatprep.subr.bf16.mxu0 0
    %290 = vmatpush1.bf16.msra.mxu0 0
    %291 = vmatprep.subr.bf16.mxu0 0
    %292 = vmatpush1.bf16.msra.mxu0 %v198
    %293 = vmatprep.subr.bf16.mxu0 0
    %294 = vmatpush1.bf16.msra.mxu0 %v197
    %295 = vmatprep.subr.bf16.mxu0 0
    %296 = vmatpush2.bf16.msra.mxu0 0
    %297 = vmatprep.subr.bf16.mxu0 0
    %298 = vmatpush2.bf16.msra.mxu0 0
    %299 = vmatprep.subr.bf16.mxu0 0
    %300 = vmatpush2.bf16.msra.mxu0 0
    %301 = vmatprep.subr.bf16.mxu0 0
    %302 = vmatpush2.bf16.msra.mxu0 0
    %303 = vmatprep.subr.bf16.mxu0 0
    %304 = vmatpush2.bf16.msra.mxu0 0
    %305 = vmatprep.subr.bf16.mxu0 0
    %306 = vmatpush2.bf16.msra.mxu0 0
    %307 = vmatprep.subr.bf16.mxu0 0
    %308 = vmatpush2.bf16.msra.mxu0 0
    %309 = vmatprep.subr.bf16.mxu0 0
    %310 = vmatpush2.bf16.msra.mxu0 0
    %311 = vmatprep.mubr.bf16.mxu0 0
    %312 = vmatmul.mubr.bf16.gmra.mxu0 %v277
    %v313 = vpop.f32.mrf.mxu0
    %v314 = vadd.f32 %v187, %v313
    %v315 = vpop.f32.mrf.mxu0
    %v316 = vpop.f32.mrf.mxu0
    %v317 = vpop.f32.mrf.mxu0
    %318 = vdwg.mxu0
    %v319 = vadd.f32 %v271, %v314
    %v320 = vxor.u32 %v319, 2147483648
    %v321 = vmul.f32 %v320, 1.442695
    %v322 = vpow.pop %v321
    %v323 = vadd.f32 %v322, 1.0
    %v324 = vrcp.pop %v323
    %v325 = vmul.f32 1.0, %v324
    %327 = vrot.lane.b32.xlu0 %v314, 64
    %v328 = vpop.permute.xlu0 %327
    %v330 = vmul.f32 %v325, %v328
    %332 = vrot.lane.b32.xlu0 %v330, 64
    %v333 = vpop.permute.xlu0 %332
    %v335 = vadd.f32 %v271, %v333
    %v336 = vtanh.pop %v335
    %v337 = vsub.f32 1.0, %v325
    %339 = vrot.lane.b32.xlu0 %v336, 96
    %v340 = vpop.permute.xlu0 %339
    %v342 = vmul.f32 %v337, %v340
    %v343 = vmul.f32 %v325, %v269
    %v344 = vadd.f32 %v342, %v343
    %s345 = scalar_lea.vmem [#allocation2], 16
    %v346 = vld [vmem:[%s345] sm:$0xff]
    %v347 = vpack.c.bf16 %v344, %v344
    %349 = vrot.lane.b32.xlu0 %v347, 96
    %v350 = vpop.permute.xlu0 %349
    %v352 = vsel %vm86, %v350, 0
    %354 = vmatprep.subr.bf16.mxu0 0
    %355 = vmatpush1.bf16.msra.mxu0 0
    %356 = vmatprep.subr.bf16.mxu0 0
    %357 = vmatpush1.bf16.msra.mxu0 0
    %358 = vmatprep.subr.bf16.mxu0 0
    %359 = vmatpush1.bf16.msra.mxu0 0
    %360 = vmatprep.subr.bf16.mxu0 0
    %361 = vmatpush1.bf16.msra.mxu0 0
    %362 = vmatprep.subr.bf16.mxu0 0
    %363 = vmatpush1.bf16.msra.mxu0 0
    %364 = vmatprep.subr.bf16.mxu0 0
    %365 = vmatpush1.bf16.msra.mxu0 0
    %366 = vmatprep.subr.bf16.mxu0 0
    %367 = vmatpush1.bf16.msra.mxu0 %v198
    %368 = vmatprep.subr.bf16.mxu0 0
    %369 = vmatpush1.bf16.msra.mxu0 %v197
    %370 = vmatprep.subr.bf16.mxu0 0
    %371 = vmatpush2.bf16.msra.mxu0 0
    %372 = vmatprep.subr.bf16.mxu0 0
    %373 = vmatpush2.bf16.msra.mxu0 0
    %374 = vmatprep.subr.bf16.mxu0 0
    %375 = vmatpush2.bf16.msra.mxu0 0
    %376 = vmatprep.subr.bf16.mxu0 0
    %377 = vmatpush2.bf16.msra.mxu0 0
    %378 = vmatprep.subr.bf16.mxu0 0
    %379 = vmatpush2.bf16.msra.mxu0 0
    %380 = vmatprep.subr.bf16.mxu0 0
    %381 = vmatpush2.bf16.msra.mxu0 0
    %382 = vmatprep.subr.bf16.mxu0 0
    %383 = vmatpush2.bf16.msra.mxu0 0
    %384 = vmatprep.subr.bf16.mxu0 0
    %385 = vmatpush2.bf16.msra.mxu0 0
    %386 = vmatprep.mubr.bf16.mxu0 0
    %387 = vmatmul.mubr.bf16.gmra.mxu0 %v352
    %v388 = vpop.f32.mrf.mxu0
    %v389 = vadd.f32 %v187, %v388
    %v390 = vpop.f32.mrf.mxu0
    %v391 = vpop.f32.mrf.mxu0
    %v392 = vpop.f32.mrf.mxu0
    %393 = vdwg.mxu0
    %v394 = vadd.f32 %v346, %v389
    %v395 = vxor.u32 %v394, 2147483648
    %v396 = vmul.f32 %v395, 1.442695
    %v397 = vpow.pop %v396
    %v398 = vadd.f32 %v397, 1.0
    %v399 = vrcp.pop %v398
    %v400 = vmul.f32 1.0, %v399
    %402 = vrot.lane.b32.xlu0 %v389, 64
    %v403 = vpop.permute.xlu0 %402
    %v405 = vmul.f32 %v400, %v403
    %407 = vrot.lane.b32.xlu0 %v405, 64
    %v408 = vpop.permute.xlu0 %407
    %v410 = vadd.f32 %v346, %v408
    %v411 = vtanh.pop %v410
    %v412 = vsub.f32 1.0, %v400
    %414 = vrot.lane.b32.xlu0 %v411, 96
    %v415 = vpop.permute.xlu0 %414
    %v417 = vmul.f32 %v412, %v415
    %v418 = vmul.f32 %v400, %v344
    %v419 = vadd.f32 %v417, %v418
    %s420 = scalar_lea.vmem [#allocation2], 24
    %v421 = vld [vmem:[%s420] sm:$0xff]
    %v422 = vpack.c.bf16 %v419, %v419
    %424 = vrot.lane.b32.xlu0 %v422, 96
    %v425 = vpop.permute.xlu0 %424
    %v427 = vsel %vm86, %v425, 0
    %429 = vmatprep.subr.bf16.mxu0 0
    %430 = vmatpush1.bf16.msra.mxu0 0
    %431 = vmatprep.subr.bf16.mxu0 0
    %432 = vmatpush1.bf16.msra.mxu0 0
    %433 = vmatprep.subr.bf16.mxu0 0
    %434 = vmatpush1.bf16.msra.mxu0 0
    %435 = vmatprep.subr.bf16.mxu0 0
    %436 = vmatpush1.bf16.msra.mxu0 0
    %437 = vmatprep.subr.bf16.mxu0 0
    %438 = vmatpush1.bf16.msra.mxu0 0
    %439 = vmatprep.subr.bf16.mxu0 0
    %440 = vmatpush1.bf16.msra.mxu0 0
    %441 = vmatprep.subr.bf16.mxu0 0
    %442 = vmatpush1.bf16.msra.mxu0 %v198
    %443 = vmatprep.subr.bf16.mxu0 0
    %444 = vmatpush1.bf16.msra.mxu0 %v197
    %445 = vmatprep.subr.bf16.mxu0 0
    %446 = vmatpush2.bf16.msra.mxu0 0
    %447 = vmatprep.subr.bf16.mxu0 0
    %448 = vmatpush2.bf16.msra.mxu0 0
    %449 = vmatprep.subr.bf16.mxu0 0
    %450 = vmatpush2.bf16.msra.mxu0 0
    %451 = vmatprep.subr.bf16.mxu0 0
    %452 = vmatpush2.bf16.msra.mxu0 0
    %453 = vmatprep.subr.bf16.mxu0 0
    %454 = vmatpush2.bf16.msra.mxu0 0
    %455 = vmatprep.subr.bf16.mxu0 0
    %456 = vmatpush2.bf16.msra.mxu0 0
    %457 = vmatprep.subr.bf16.mxu0 0
    %458 = vmatpush2.bf16.msra.mxu0 0
    %459 = vmatprep.subr.bf16.mxu0 0
    %460 = vmatpush2.bf16.msra.mxu0 0
    %461 = vmatprep.mubr.bf16.mxu0 0
    %462 = vmatmul.mubr.bf16.gmra.mxu0 %v427
    %v463 = vpop.f32.mrf.mxu0
    %v464 = vadd.f32 %v187, %v463
    %v465 = vpop.f32.mrf.mxu0
    %v466 = vpop.f32.mrf.mxu0
    %v467 = vpop.f32.mrf.mxu0
    %468 = vdwg.mxu0
    %v469 = vadd.f32 %v421, %v464
    %v470 = vxor.u32 %v469, 2147483648
    %v471 = vmul.f32 %v470, 1.442695
    %v472 = vpow.pop %v471
    %v473 = vadd.f32 %v472, 1.0
    %v474 = vrcp.pop %v473
    %v475 = vmul.f32 1.0, %v474
    %477 = vrot.lane.b32.xlu0 %v464, 64
    %v478 = vpop.permute.xlu0 %477
    %v480 = vmul.f32 %v475, %v478
    %482 = vrot.lane.b32.xlu0 %v480, 64
    %v483 = vpop.permute.xlu0 %482
    %v485 = vadd.f32 %v421, %v483
    %v486 = vtanh.pop %v485
    %v487 = vsub.f32 1.0, %v475
    %489 = vrot.lane.b32.xlu0 %v486, 96
    %v490 = vpop.permute.xlu0 %489
    %v492 = vmul.f32 %v487, %v490
    %v493 = vmul.f32 %v475, %v419
    %v494 = vadd.f32 %v492, %v493
    %s495 = scalar_lea.vmem [#allocation2], 32
    %v496 = vld [vmem:[%s495] sm:$0xff]
    %v497 = vpack.c.bf16 %v494, %v494
    %499 = vrot.lane.b32.xlu0 %v497, 96
    %v500 = vpop.permute.xlu0 %499
    %v502 = vsel %vm86, %v500, 0
    %504 = vmatprep.subr.bf16.mxu0 0
    %505 = vmatpush1.bf16.msra.mxu0 0
    %506 = vmatprep.subr.bf16.mxu0 0
    %507 = vmatpush1.bf16.msra.mxu0 0
    %508 = vmatprep.subr.bf16.mxu0 0
    %509 = vmatpush1.bf16.msra.mxu0 0
    %510 = vmatprep.subr.bf16.mxu0 0
    %511 = vmatpush1.bf16.msra.mxu0 0
    %512 = vmatprep.subr.bf16.mxu0 0
    %513 = vmatpush1.bf16.msra.mxu0 0
    %514 = vmatprep.subr.bf16.mxu0 0
    %515 = vmatpush1.bf16.msra.mxu0 0
    %516 = vmatprep.subr.bf16.mxu0 0
    %517 = vmatpush1.bf16.msra.mxu0 %v198
    %518 = vmatprep.subr.bf16.mxu0 0
    %519 = vmatpush1.bf16.msra.mxu0 %v197
    %520 = vmatprep.subr.bf16.mxu0 0
    %521 = vmatpush2.bf16.msra.mxu0 0
    %522 = vmatprep.subr.bf16.mxu0 0
    %523 = vmatpush2.bf16.msra.mxu0 0
    %524 = vmatprep.subr.bf16.mxu0 0
    %525 = vmatpush2.bf16.msra.mxu0 0
    %526 = vmatprep.subr.bf16.mxu0 0
    %527 = vmatpush2.bf16.msra.mxu0 0
    %528 = vmatprep.subr.bf16.mxu0 0
    %529 = vmatpush2.bf16.msra.mxu0 0
    %530 = vmatprep.subr.bf16.mxu0 0
    %531 = vmatpush2.bf16.msra.mxu0 0
    %532 = vmatprep.subr.bf16.mxu0 0
    %533 = vmatpush2.bf16.msra.mxu0 0
    %534 = vmatprep.subr.bf16.mxu0 0
    %535 = vmatpush2.bf16.msra.mxu0 0
    %536 = vmatprep.mubr.bf16.mxu0 0
    %537 = vmatmul.mubr.bf16.gmra.mxu0 %v502
    %v538 = vpop.f32.mrf.mxu0
    %v539 = vadd.f32 %v187, %v538
    %v540 = vpop.f32.mrf.mxu0
    %v541 = vpop.f32.mrf.mxu0
    %v542 = vpop.f32.mrf.mxu0
    %543 = vdwg.mxu0
    %v544 = vadd.f32 %v496, %v539
    %v545 = vxor.u32 %v544, 2147483648
    %v546 = vmul.f32 %v545, 1.442695
    %v547 = vpow.pop %v546
    %v548 = vadd.f32 %v547, 1.0
    %v549 = vrcp.pop %v548
    %v550 = vmul.f32 1.0, %v549
    %552 = vrot.lane.b32.xlu0 %v539, 64
    %v553 = vpop.permute.xlu0 %552
    %v555 = vmul.f32 %v550, %v553
    %557 = vrot.lane.b32.xlu0 %v555, 64
    %v558 = vpop.permute.xlu0 %557
    %v560 = vadd.f32 %v496, %v558
    %v561 = vtanh.pop %v560
    %v562 = vsub.f32 1.0, %v550
    %564 = vrot.lane.b32.xlu0 %v561, 96
    %v565 = vpop.permute.xlu0 %564
    %v567 = vmul.f32 %v562, %v565
    %v568 = vmul.f32 %v550, %v494
    %v569 = vadd.f32 %v567, %v568
    %s570 = scalar_lea.vmem [#allocation2], 40
    %v571 = vld [vmem:[%s570] sm:$0xff]
    %v572 = vpack.c.bf16 %v569, %v569
    %574 = vrot.lane.b32.xlu0 %v572, 96
    %v575 = vpop.permute.xlu0 %574
    %v577 = vsel %vm86, %v575, 0
    %579 = vmatprep.subr.bf16.mxu0 0
    %580 = vmatpush1.bf16.msra.mxu0 0
    %581 = vmatprep.subr.bf16.mxu0 0
    %582 = vmatpush1.bf16.msra.mxu0 0
    %583 = vmatprep.subr.bf16.mxu0 0
    %584 = vmatpush1.bf16.msra.mxu0 0
    %585 = vmatprep.subr.bf16.mxu0 0
    %586 = vmatpush1.bf16.msra.mxu0 0
    %587 = vmatprep.subr.bf16.mxu0 0
    %588 = vmatpush1.bf16.msra.mxu0 0
    %589 = vmatprep.subr.bf16.mxu0 0
    %590 = vmatpush1.bf16.msra.mxu0 0
    %591 = vmatprep.subr.bf16.mxu0 0
    %592 = vmatpush1.bf16.msra.mxu0 %v198
    %593 = vmatprep.subr.bf16.mxu0 0
    %594 = vmatpush1.bf16.msra.mxu0 %v197
    %595 = vmatprep.subr.bf16.mxu0 0
    %596 = vmatpush2.bf16.msra.mxu0 0
    %597 = vmatprep.subr.bf16.mxu0 0
    %598 = vmatpush2.bf16.msra.mxu0 0
    %599 = vmatprep.subr.bf16.mxu0 0
    %600 = vmatpush2.bf16.msra.mxu0 0
    %601 = vmatprep.subr.bf16.mxu0 0
    %602 = vmatpush2.bf16.msra.mxu0 0
    %603 = vmatprep.subr.bf16.mxu0 0
    %604 = vmatpush2.bf16.msra.mxu0 0
    %605 = vmatprep.subr.bf16.mxu0 0
    %606 = vmatpush2.bf16.msra.mxu0 0
    %607 = vmatprep.subr.bf16.mxu0 0
    %608 = vmatpush2.bf16.msra.mxu0 0
    %609 = vmatprep.subr.bf16.mxu0 0
    %610 = vmatpush2.bf16.msra.mxu0 0
    %611 = vmatprep.mubr.bf16.mxu0 0
    %612 = vmatmul.mubr.bf16.gmra.mxu0 %v577
    %v613 = vpop.f32.mrf.mxu0
    %v614 = vadd.f32 %v187, %v613
    %v615 = vpop.f32.mrf.mxu0
    %v616 = vpop.f32.mrf.mxu0
    %v617 = vpop.f32.mrf.mxu0
    %618 = vdwg.mxu0
    %v619 = vadd.f32 %v571, %v614
    %v620 = vxor.u32 %v619, 2147483648
    %v621 = vmul.f32 %v620, 1.442695
    %v622 = vpow.pop %v621
    %v623 = vadd.f32 %v622, 1.0
    %v624 = vrcp.pop %v623
    %v625 = vmul.f32 1.0, %v624
    %627 = vrot.lane.b32.xlu0 %v614, 64
    %v628 = vpop.permute.xlu0 %627
    %v630 = vmul.f32 %v625, %v628
    %632 = vrot.lane.b32.xlu0 %v630, 64
    %v633 = vpop.permute.xlu0 %632
    %v635 = vadd.f32 %v571, %v633
    %v636 = vtanh.pop %v635
    %v637 = vsub.f32 1.0, %v625
    %639 = vrot.lane.b32.xlu0 %v636, 96
    %v640 = vpop.permute.xlu0 %639
    %v642 = vmul.f32 %v637, %v640
    %v643 = vmul.f32 %v625, %v569
    %v644 = vadd.f32 %v642, %v643
    %s645 = scalar_lea.vmem [#allocation2], 48
    %v646 = vld [vmem:[%s645] sm:$0xff]
    %v647 = vpack.c.bf16 %v644, %v644
    %649 = vrot.lane.b32.xlu0 %v647, 96
    %v650 = vpop.permute.xlu0 %649
    %v652 = vsel %vm86, %v650, 0
    %654 = vmatprep.subr.bf16.mxu0 0
    %655 = vmatpush1.bf16.msra.mxu0 0
    %656 = vmatprep.subr.bf16.mxu0 0
    %657 = vmatpush1.bf16.msra.mxu0 0
    %658 = vmatprep.subr.bf16.mxu0 0
    %659 = vmatpush1.bf16.msra.mxu0 0
    %660 = vmatprep.subr.bf16.mxu0 0
    %661 = vmatpush1.bf16.msra.mxu0 0
    %662 = vmatprep.subr.bf16.mxu0 0
    %663 = vmatpush1.bf16.msra.mxu0 0
    %664 = vmatprep.subr.bf16.mxu0 0
    %665 = vmatpush1.bf16.msra.mxu0 0
    %666 = vmatprep.subr.bf16.mxu0 0
    %667 = vmatpush1.bf16.msra.mxu0 %v198
    %668 = vmatprep.subr.bf16.mxu0 0
    %669 = vmatpush1.bf16.msra.mxu0 %v197
    %670 = vmatprep.subr.bf16.mxu0 0
    %671 = vmatpush2.bf16.msra.mxu0 0
    %672 = vmatprep.subr.bf16.mxu0 0
    %673 = vmatpush2.bf16.msra.mxu0 0
    %674 = vmatprep.subr.bf16.mxu0 0
    %675 = vmatpush2.bf16.msra.mxu0 0
    %676 = vmatprep.subr.bf16.mxu0 0
    %677 = vmatpush2.bf16.msra.mxu0 0
    %678 = vmatprep.subr.bf16.mxu0 0
    %679 = vmatpush2.bf16.msra.mxu0 0
    %680 = vmatprep.subr.bf16.mxu0 0
    %681 = vmatpush2.bf16.msra.mxu0 0
    %682 = vmatprep.subr.bf16.mxu0 0
    %683 = vmatpush2.bf16.msra.mxu0 0
    %684 = vmatprep.subr.bf16.mxu0 0
    %685 = vmatpush2.bf16.msra.mxu0 0
    %686 = vmatprep.mubr.bf16.mxu0 0
    %687 = vmatmul.mubr.bf16.gmra.mxu0 %v652
    %v688 = vpop.f32.mrf.mxu0
    %v689 = vadd.f32 %v187, %v688
    %v690 = vpop.f32.mrf.mxu0
    %v691 = vpop.f32.mrf.mxu0
    %v692 = vpop.f32.mrf.mxu0
    %693 = vdwg.mxu0
    %v694 = vadd.f32 %v646, %v689
    %v695 = vxor.u32 %v694, 2147483648
    %v696 = vmul.f32 %v695, 1.442695
    %v697 = vpow.pop %v696
    %v698 = vadd.f32 %v697, 1.0
    %v699 = vrcp.pop %v698
    %v700 = vmul.f32 1.0, %v699
    %702 = vrot.lane.b32.xlu0 %v689, 64
    %v703 = vpop.permute.xlu0 %702
    %v705 = vmul.f32 %v700, %v703
    %707 = vrot.lane.b32.xlu0 %v705, 64
    %v708 = vpop.permute.xlu0 %707
    %v710 = vadd.f32 %v646, %v708
    %v711 = vtanh.pop %v710
    %v712 = vsub.f32 1.0, %v700
    %714 = vrot.lane.b32.xlu0 %v711, 96
    %v715 = vpop.permute.xlu0 %714
    %v717 = vmul.f32 %v712, %v715
    %v718 = vmul.f32 %v700, %v644
    %v719 = vadd.f32 %v717, %v718
    %s720 = scalar_lea.vmem [#allocation2], 56
    %v721 = vld [vmem:[%s720] sm:$0xff]
    %v722 = vpack.c.bf16 %v719, %v719
    %724 = vrot.lane.b32.xlu0 %v722, 96
    %v725 = vpop.permute.xlu0 %724
    %v727 = vsel %vm86, %v725, 0
    %729 = vmatprep.subr.bf16.mxu0 0
    %730 = vmatpush1.bf16.msra.mxu0 0
    %731 = vmatprep.subr.bf16.mxu0 0
    %732 = vmatpush1.bf16.msra.mxu0 0
    %733 = vmatprep.subr.bf16.mxu0 0
    %734 = vmatpush1.bf16.msra.mxu0 0
    %735 = vmatprep.subr.bf16.mxu0 0
    %736 = vmatpush1.bf16.msra.mxu0 0
    %737 = vmatprep.subr.bf16.mxu0 0
    %738 = vmatpush1.bf16.msra.mxu0 0
    %739 = vmatprep.subr.bf16.mxu0 0
    %740 = vmatpush1.bf16.msra.mxu0 0
    %741 = vmatprep.subr.bf16.mxu0 0
    %742 = vmatpush1.bf16.msra.mxu0 %v198
    %743 = vmatprep.subr.bf16.mxu0 0
    %744 = vmatpush1.bf16.msra.mxu0 %v197
    %745 = vmatprep.subr.bf16.mxu0 0
    %746 = vmatpush2.bf16.msra.mxu0 0
    %747 = vmatprep.subr.bf16.mxu0 0
    %748 = vmatpush2.bf16.msra.mxu0 0
    %749 = vmatprep.subr.bf16.mxu0 0
    %750 = vmatpush2.bf16.msra.mxu0 0
    %751 = vmatprep.subr.bf16.mxu0 0
    %752 = vmatpush2.bf16.msra.mxu0 0
    %753 = vmatprep.subr.bf16.mxu0 0
    %754 = vmatpush2.bf16.msra.mxu0 0
    %755 = vmatprep.subr.bf16.mxu0 0
    %756 = vmatpush2.bf16.msra.mxu0 0
    %757 = vmatprep.subr.bf16.mxu0 0
    %758 = vmatpush2.bf16.msra.mxu0 0
    %759 = vmatprep.subr.bf16.mxu0 0
    %760 = vmatpush2.bf16.msra.mxu0 0
    %761 = vmatprep.mubr.bf16.mxu0 0
    %762 = vmatmul.mubr.bf16.gmra.mxu0 %v727
    %v763 = vpop.f32.mrf.mxu0
    %v764 = vadd.f32 %v187, %v763
    %v765 = vpop.f32.mrf.mxu0
    %v766 = vpop.f32.mrf.mxu0
    %v767 = vpop.f32.mrf.mxu0
    %768 = vdwg.mxu0
    %v769 = vadd.f32 %v721, %v764
    %v770 = vxor.u32 %v769, 2147483648
    %v771 = vmul.f32 %v770, 1.442695
    %v772 = vpow.pop %v771
    %v773 = vadd.f32 %v772, 1.0
    %v774 = vrcp.pop %v773
    %v775 = vmul.f32 1.0, %v774
    %777 = vrot.lane.b32.xlu0 %v764, 64
    %v778 = vpop.permute.xlu0 %777
    %v780 = vmul.f32 %v775, %v778
    %782 = vrot.lane.b32.xlu0 %v780, 64
    %v783 = vpop.permute.xlu0 %782
    %v785 = vadd.f32 %v721, %v783
    %v786 = vtanh.pop %v785
    %v787 = vsub.f32 1.0, %v775
    %789 = vrot.lane.b32.xlu0 %v786, 96
    %v790 = vpop.permute.xlu0 %789
    %v792 = vmul.f32 %v787, %v790
    %v793 = vmul.f32 %v775, %v719
    %v794 = vadd.f32 %v792, %v793
    %s795 = scalar_lea.vmem [#allocation2], 64
    %v796 = vld [vmem:[%s795] sm:$0xff]
    %v797 = vpack.c.bf16 %v794, %v794
    %799 = vrot.lane.b32.xlu0 %v797, 96
    %v800 = vpop.permute.xlu0 %799
    %v802 = vsel %vm86, %v800, 0
    %804 = vmatprep.subr.bf16.mxu0 0
    %805 = vmatpush1.bf16.msra.mxu0 0
    %806 = vmatprep.subr.bf16.mxu0 0
    %807 = vmatpush1.bf16.msra.mxu0 0
    %808 = vmatprep.subr.bf16.mxu0 0
    %809 = vmatpush1.bf16.msra.mxu0 0
    %810 = vmatprep.subr.bf16.mxu0 0
    %811 = vmatpush1.bf16.msra.mxu0 0
    %812 = vmatprep.subr.bf16.mxu0 0
    %813 = vmatpush1.bf16.msra.mxu0 0
    %814 = vmatprep.subr.bf16.mxu0 0
    %815 = vmatpush1.bf16.msra.mxu0 0
    %816 = vmatprep.subr.bf16.mxu0 0
    %817 = vmatpush1.bf16.msra.mxu0 %v198
    %818 = vmatprep.subr.bf16.mxu0 0
    %819 = vmatpush1.bf16.msra.mxu0 %v197
    %820 = vmatprep.subr.bf16.mxu0 0
    %821 = vmatpush2.bf16.msra.mxu0 0
    %822 = vmatprep.subr.bf16.mxu0 0
    %823 = vmatpush2.bf16.msra.mxu0 0
    %824 = vmatprep.subr.bf16.mxu0 0
    %825 = vmatpush2.bf16.msra.mxu0 0
    %826 = vmatprep.subr.bf16.mxu0 0
    %827 = vmatpush2.bf16.msra.mxu0 0
    %828 = vmatprep.subr.bf16.mxu0 0
    %829 = vmatpush2.bf16.msra.mxu0 0
    %830 = vmatprep.subr.bf16.mxu0 0
    %831 = vmatpush2.bf16.msra.mxu0 0
    %832 = vmatprep.subr.bf16.mxu0 0
    %833 = vmatpush2.bf16.msra.mxu0 0
    %834 = vmatprep.subr.bf16.mxu0 0
    %835 = vmatpush2.bf16.msra.mxu0 0
    %836 = vmatprep.mubr.bf16.mxu0 0
    %837 = vmatmul.mubr.bf16.gmra.mxu0 %v802
    %v838 = vpop.f32.mrf.mxu0
    %v839 = vadd.f32 %v187, %v838
    %v840 = vpop.f32.mrf.mxu0
    %v841 = vpop.f32.mrf.mxu0
    %v842 = vpop.f32.mrf.mxu0
    %843 = vdwg.mxu0
    %v844 = vadd.f32 %v796, %v839
    %v845 = vxor.u32 %v844, 2147483648
    %v846 = vmul.f32 %v845, 1.442695
    %v847 = vpow.pop %v846
    %v848 = vadd.f32 %v847, 1.0
    %v849 = vrcp.pop %v848
    %v850 = vmul.f32 1.0, %v849
    %852 = vrot.lane.b32.xlu0 %v839, 64
    %v853 = vpop.permute.xlu0 %852
    %v855 = vmul.f32 %v850, %v853
    %857 = vrot.lane.b32.xlu0 %v855, 64
    %v858 = vpop.permute.xlu0 %857
    %v860 = vadd.f32 %v796, %v858
    %v861 = vtanh.pop %v860
    %v862 = vsub.f32 1.0, %v850
    %864 = vrot.lane.b32.xlu0 %v861, 96
    %v865 = vpop.permute.xlu0 %864
    %v867 = vmul.f32 %v862, %v865
    %v868 = vmul.f32 %v850, %v794
    %v869 = vadd.f32 %v867, %v868
    %v870 = vpack.c.bf16 %v869, %v869
    %v871 = vld [vmem:[%s3 + $0x40] sm:$0xff]
    %v872 = vld [vmem:[%s3 + $0x48] sm:$0xff]
    %v873 = vld [vmem:[%s3 + $0x50] sm:$0xff]
    %v874 = vld [vmem:[%s3 + $0x58] sm:$0xff]
    %v875 = vld [vmem:[%s3 + $0x60] sm:$0xff]
    %v876 = vld [vmem:[%s3 + $0x68] sm:$0xff]
    %v877 = vld [vmem:[%s3 + $0x70] sm:$0xff]
    %v878 = vld [vmem:[%s3 + $0x78] sm:$0xff]
    %v879 = vld [vmem:[%s3 + $0x80] sm:$0xff]
    %v880 = vld [vmem:[%s3 + $0x88] sm:$0xff]
    %v881 = vld [vmem:[%s3 + $0x90] sm:$0xff]
    %v882 = vld [vmem:[%s3 + $0x98] sm:$0xff]
    %v883 = vld [vmem:[%s4 + $0x2] ss:$0 sm:$0xff]
    %s884 = scalar_lea.vmem %s4, 3
    %v885 = vld [vmem:[%s884] ss:$8 sm:$0x3]
    %v887 = vlaneseq
    %v888 = vshrl.u32 %v887, 7
    %v889 = vsub.s32 0, %v888
    %v890 = vrot.slane %v885, %v889
    %v891 = vlaneseq
    %v892 = vshrl.u32 %v891, 7
    %v893 = vsub.s32 1, %v892
    %v894 = vrot.slane %v885, %v893
    %898 = vrot.lane.b32.xlu0 %v870, 96
    %v899 = vpop.permute.xlu0 %898
    %v904 = vunpack.c.l.b16 %v875
    %v905 = vunpack.c.h.b16 %v875
    %v906 = vunpack.c.l.b16 %v876
    %v907 = vunpack.c.h.b16 %v876
    %v908 = vunpack.c.l.b16 %v877
    %v909 = vunpack.c.h.b16 %v877
    %v910 = vunpack.c.l.b16 %v878
    %v911 = vunpack.c.h.b16 %v878
    %v912 = vpack.c.b16 %v906, %v904
    %v913 = vpack.c.b16 %v907, %v905
    %v914 = vpack.c.b16 %v910, %v908
    %v915 = vpack.c.b16 %v911, %v909
    %v921 = vsel %vm86, %v899, 0
    %923 = vmatprep.subr.bf16.mxu0 0
    %924 = vmatpush1.bf16.msra.mxu0 0
    %925 = vmatprep.subr.bf16.mxu0 0
    %926 = vmatpush1.bf16.msra.mxu0 0
    %927 = vmatprep.subr.bf16.mxu0 0
    %928 = vmatpush1.bf16.msra.mxu0 0
    %929 = vmatprep.subr.bf16.mxu0 0
    %930 = vmatpush1.bf16.msra.mxu0 0
    %931 = vmatprep.subr.bf16.mxu0 0
    %932 = vmatpush1.bf16.msra.mxu0 0
    %933 = vmatprep.subr.bf16.mxu0 0
    %934 = vmatpush1.bf16.msra.mxu0 0
    %935 = vmatprep.subr.bf16.mxu0 %v915
    %936 = vmatpush1.bf16.msra.mxu0 %v914
    %937 = vmatprep.subr.bf16.mxu0 %v913
    %938 = vmatpush1.bf16.msra.mxu0 %v912
    %939 = vmatprep.subr.bf16.mxu0 0
    %940 = vmatpush2.bf16.msra.mxu0 0
    %941 = vmatprep.subr.bf16.mxu0 0
    %942 = vmatpush2.bf16.msra.mxu0 0
    %943 = vmatprep.subr.bf16.mxu0 0
    %944 = vmatpush2.bf16.msra.mxu0 0
    %945 = vmatprep.subr.bf16.mxu0 0
    %946 = vmatpush2.bf16.msra.mxu0 0
    %947 = vmatprep.subr.bf16.mxu0 0
    %948 = vmatpush2.bf16.msra.mxu0 0
    %949 = vmatprep.subr.bf16.mxu0 0
    %950 = vmatpush2.bf16.msra.mxu0 0
    %951 = vmatprep.subr.bf16.mxu0 0
    %952 = vmatpush2.bf16.msra.mxu0 0
    %953 = vmatprep.subr.bf16.mxu0 0
    %954 = vmatpush2.bf16.msra.mxu0 0
    %955 = vmatprep.mubr.bf16.mxu0 0
    %956 = vmatmul.mubr.bf16.gmra.mxu0 %v921
    %v957 = vpop.f32.mrf.mxu0
    %v958 = vadd.f32 %v890, %v957
    %v959 = vpop.f32.mrf.mxu0
    %v960 = vadd.f32 %v894, %v959
    %v961 = vpop.f32.mrf.mxu0
    %v962 = vpop.f32.mrf.mxu0
    %963 = vdwg.mxu0
    %v964 = vld [vmem:[%s1] sm:$0xf]
    %v965 = vld [vmem:[%s1 + $0x4] sm:$0xf]
    %v966 = vld [vmem:[%s1 + $0x8] sm:$0xf]
    %v967 = vld [vmem:[%s1 + $0xc] sm:$0xf]
    %v968 = vld [vmem:[%s1 + $0x10] sm:$0xf]
    %v969 = vld [vmem:[%s1 + $0x14] sm:$0xf]
    %v970 = vld [vmem:[%s1 + $0x18] sm:$0xf]
    %v971 = vld [vmem:[%s1 + $0x1c] sm:$0xf]
    %v980 = vunpack.c.l.b16 %v964
    %v981 = vunpack.c.l.b16 %v965
    %v982 = vunpack.c.l.b16 %v966
    %v983 = vunpack.c.l.b16 %v967
    %v984 = vunpack.c.l.b16 %v968
    %v985 = vunpack.c.l.b16 %v969
    %v986 = vunpack.c.l.b16 %v970
    %v987 = vunpack.c.l.b16 %v971
    %v988 = vpack.c.b16 %v981, %v980
    %v989 = vpack.c.b16 %v983, %v982
    %v990 = vpack.c.b16 %v985, %v984
    %v991 = vpack.c.b16 %v987, %v986
    %v996 = vunpack.c.l.b16 %v871
    %v997 = vunpack.c.h.b16 %v871
    %v998 = vunpack.c.l.b16 %v872
    %v999 = vunpack.c.h.b16 %v872
    %v1000 = vunpack.c.l.b16 %v873
    %v1001 = vunpack.c.h.b16 %v873
    %v1002 = vunpack.c.l.b16 %v874
    %v1003 = vunpack.c.h.b16 %v874
    %v1004 = vpack.c.b16 %v998, %v996
    %v1005 = vpack.c.b16 %v999, %v997
    %v1006 = vpack.c.b16 %v1002, %v1000
    %v1007 = vpack.c.b16 %v1003, %v1001
    %v1013 = vsel %vm86, %v988, 0
    %v1016 = vsel %vm86, %v989, 0
    %v1019 = vsel %vm86, %v990, 0
    %v1022 = vsel %vm86, %v991, 0
    %1024 = vmatprep.subr.bf16.mxu0 0
    %1025 = vmatpush1.bf16.msra.mxu0 0
    %1026 = vmatprep.subr.bf16.mxu0 0
    %1027 = vmatpush1.bf16.msra.mxu0 0
    %1028 = vmatprep.subr.bf16.mxu0 0
    %1029 = vmatpush1.bf16.msra.mxu0 0
    %1030 = vmatprep.subr.bf16.mxu0 0
    %1031 = vmatpush1.bf16.msra.mxu0 0
    %1032 = vmatprep.subr.bf16.mxu0 0
    %1033 = vmatpush1.bf16.msra.mxu0 0
    %1034 = vmatprep.subr.bf16.mxu0 0
    %1035 = vmatpush1.bf16.msra.mxu0 0
    %1036 = vmatprep.subr.bf16.mxu0 %v1007
    %1037 = vmatpush1.bf16.msra.mxu0 %v1006
    %1038 = vmatprep.subr.bf16.mxu0 %v1005
    %1039 = vmatpush1.bf16.msra.mxu0 %v1004
    %1040 = vmatprep.subr.bf16.mxu0 0
    %1041 = vmatpush2.bf16.msra.mxu0 0
    %1042 = vmatprep.subr.bf16.mxu0 0
    %1043 = vmatpush2.bf16.msra.mxu0 0
    %1044 = vmatprep.subr.bf16.mxu0 0
    %1045 = vmatpush2.bf16.msra.mxu0 0
    %1046 = vmatprep.subr.bf16.mxu0 0
    %1047 = vmatpush2.bf16.msra.mxu0 0
    %1048 = vmatprep.subr.bf16.mxu0 0
    %1049 = vmatpush2.bf16.msra.mxu0 0
    %1050 = vmatprep.subr.bf16.mxu0 0
    %1051 = vmatpush2.bf16.msra.mxu0 0
    %1052 = vmatprep.subr.bf16.mxu0 0
    %1053 = vmatpush2.bf16.msra.mxu0 0
    %1054 = vmatprep.subr.bf16.mxu0 0
    %1055 = vmatpush2.bf16.msra.mxu0 0
    %1056 = vmatprep.mubr.bf16.mxu0 0
    %1057 = vmatmul.mubr.bf16.gmra.mxu0 %v1013
    %v1058 = vpop.f32.mrf.mxu0
    %v1059 = vadd.f32 0.0, %v1058
    %v1060 = vpop.f32.mrf.mxu0
    %v1061 = vadd.f32 0.0, %v1060
    %v1062 = vpop.f32.mrf.mxu0
    %v1063 = vadd.f32 0.0, %v1062
    %v1064 = vpop.f32.mrf.mxu0
    %v1065 = vadd.f32 0.0, %v1064
    %1066 = vmatprep.mubr.bf16.mxu0 0
    %1067 = vmatmul.mubr.bf16.gmra.mxu0 %v1016
    %v1068 = vpop.f32.mrf.mxu0
    %v1069 = vadd.f32 0.0, %v1068
    %v1070 = vpop.f32.mrf.mxu0
    %v1071 = vadd.f32 0.0, %v1070
    %v1072 = vpop.f32.mrf.mxu0
    %v1073 = vadd.f32 0.0, %v1072
    %v1074 = vpop.f32.mrf.mxu0
    %v1075 = vadd.f32 0.0, %v1074
    %1076 = vmatprep.mubr.bf16.mxu0 0
    %1077 = vmatmul.mubr.bf16.gmra.mxu0 %v1019
    %v1078 = vpop.f32.mrf.mxu0
    %v1079 = vadd.f32 0.0, %v1078
    %v1080 = vpop.f32.mrf.mxu0
    %v1081 = vadd.f32 0.0, %v1080
    %v1082 = vpop.f32.mrf.mxu0
    %v1083 = vadd.f32 0.0, %v1082
    %v1084 = vpop.f32.mrf.mxu0
    %v1085 = vadd.f32 0.0, %v1084
    %1086 = vmatprep.mubr.bf16.mxu0 0
    %1087 = vmatmul.mubr.bf16.gmra.mxu0 %v1022
    %v1088 = vpop.f32.mrf.mxu0
    %v1089 = vadd.f32 0.0, %v1088
    %v1090 = vpop.f32.mrf.mxu0
    %v1091 = vadd.f32 0.0, %v1090
    %v1092 = vpop.f32.mrf.mxu0
    %v1093 = vadd.f32 0.0, %v1092
    %v1094 = vpop.f32.mrf.mxu0
    %v1095 = vadd.f32 0.0, %v1094
    %1096 = vdwg.mxu0
    %v1097 = vadd.f32 %v1059, %v958
    %v1098 = vadd.f32 %v1061, %v960
    %v1099 = vadd.f32 %v1063, %v958
    %v1100 = vadd.f32 %v1065, %v960
    %v1101 = vadd.f32 %v1069, %v958
    %v1102 = vadd.f32 %v1071, %v960
    %v1103 = vadd.f32 %v1073, %v958
    %v1104 = vadd.f32 %v1075, %v960
    %v1105 = vadd.f32 %v1079, %v958
    %v1106 = vadd.f32 %v1081, %v960
    %v1107 = vadd.f32 %v1083, %v958
    %v1108 = vadd.f32 %v1085, %v960
    %v1109 = vadd.f32 %v1089, %v958
    %v1110 = vadd.f32 %v1091, %v960
    %v1111 = vadd.f32 %v1093, %v958
    %v1112 = vadd.f32 %v1095, %v960
    %1113 = vst [vmem:[#allocation3] sm:$0xff] %v1097
    %1114 = vst [vmem:[#allocation3 + $0x8] sm:$0xff] %v1098
    %1115 = vst [vmem:[#allocation3 + $0x10] sm:$0xff] %v1099
    %1116 = vst [vmem:[#allocation3 + $0x18] sm:$0xff] %v1100
    %1117 = vst [vmem:[#allocation3 + $0x20] sm:$0xff] %v1101
    %1118 = vst [vmem:[#allocation3 + $0x28] sm:$0xff] %v1102
    %1119 = vst [vmem:[#allocation3 + $0x30] sm:$0xff] %v1103
    %1120 = vst [vmem:[#allocation3 + $0x38] sm:$0xff] %v1104
    %1121 = vst [vmem:[#allocation3 + $0x40] sm:$0xff] %v1105
    %1122 = vst [vmem:[#allocation3 + $0x48] sm:$0xff] %v1106
    %1123 = vst [vmem:[#allocation3 + $0x50] sm:$0xff] %v1107
    %1124 = vst [vmem:[#allocation3 + $0x58] sm:$0xff] %v1108
    %1125 = vst [vmem:[#allocation3 + $0x60] sm:$0xff] %v1109
    %1126 = vst [vmem:[#allocation3 + $0x68] sm:$0xff] %v1110
    %1127 = vst [vmem:[#allocation3 + $0x70] sm:$0xff] %v1111
    %1128 = vst [vmem:[#allocation3 + $0x78] sm:$0xff] %v1112
    %v1133 = vunpack.c.l.b16 %v879
    %v1134 = vunpack.c.h.b16 %v879
    %v1135 = vunpack.c.l.b16 %v880
    %v1136 = vunpack.c.h.b16 %v880
    %v1137 = vunpack.c.l.b16 %v881
    %v1138 = vunpack.c.h.b16 %v881
    %v1139 = vunpack.c.l.b16 %v882
    %v1140 = vunpack.c.h.b16 %v882
    %v1141 = vpack.c.b16 %v1135, %v1133
    %v1142 = vpack.c.b16 %v1136, %v1134
    %v1143 = vpack.c.b16 %v1139, %v1137
    %v1144 = vpack.c.b16 %v1140, %v1138
    %1149 = vmatprep.subr.bf16.mxu0 0
    %1150 = vmatpush1.bf16.msra.mxu0 0
    %1151 = vmatprep.subr.bf16.mxu0 0
    %1152 = vmatpush1.bf16.msra.mxu0 0
    %1153 = vmatprep.subr.bf16.mxu0 0
    %1154 = vmatpush1.bf16.msra.mxu0 0
    %1155 = vmatprep.subr.bf16.mxu0 0
    %1156 = vmatpush1.bf16.msra.mxu0 0
    %1157 = vmatprep.subr.bf16.mxu0 0
    %1158 = vmatpush1.bf16.msra.mxu0 0
    %1159 = vmatprep.subr.bf16.mxu0 0
    %1160 = vmatpush1.bf16.msra.mxu0 0
    %1161 = vmatprep.subr.bf16.mxu0 %v1144
    %1162 = vmatpush1.bf16.msra.mxu0 %v1143
    %1163 = vmatprep.subr.bf16.mxu0 %v1142
    %1164 = vmatpush1.bf16.msra.mxu0 %v1141
    %1165 = vmatprep.subr.bf16.mxu0 0
    %1166 = vmatpush2.bf16.msra.mxu0 0
    %1167 = vmatprep.subr.bf16.mxu0 0
    %1168 = vmatpush2.bf16.msra.mxu0 0
    %1169 = vmatprep.subr.bf16.mxu0 0
    %1170 = vmatpush2.bf16.msra.mxu0 0
    %1171 = vmatprep.subr.bf16.mxu0 0
    %1172 = vmatpush2.bf16.msra.mxu0 0
    %1173 = vmatprep.subr.bf16.mxu0 0
    %1174 = vmatpush2.bf16.msra.mxu0 0
    %1175 = vmatprep.subr.bf16.mxu0 0
    %1176 = vmatpush2.bf16.msra.mxu0 0
    %1177 = vmatprep.subr.bf16.mxu0 0
    %1178 = vmatpush2.bf16.msra.mxu0 0
    %1179 = vmatprep.subr.bf16.mxu0 0
    %1180 = vmatpush2.bf16.msra.mxu0 0
    %1181 = vmatprep.mubr.bf16.mxu0 0
    %1182 = vmatmul.mubr.bf16.gmra.mxu0 %v921
    %v1183 = vpop.f32.mrf.mxu0
    %v1184 = vadd.f32 0.0, %v1183
    %v1185 = vpop.f32.mrf.mxu0
    %v1186 = vpop.f32.mrf.mxu0
    %v1187 = vpop.f32.mrf.mxu0
    %1188 = vdwg.mxu0
    %v1189 = vadd.f32 %v1184, %v883
    %v1190 = vld [vmem:[#allocation3] sm:$0xff]
    %v1191 = vld [vmem:[#allocation3 + $0x8] sm:$0xff]
    %v1192 = vadd.f32 %v1190, %v1189
    %v1193 = vxor.u32 %v1192, 2147483648
    %v1194 = vmul.f32 %v1193, 1.442695
    %v1195 = vpow.pop %v1194
    %v1196 = vadd.f32 %v1195, 1.0
    %v1197 = vrcp.pop %v1196
    %v1198 = vmul.f32 1.0, %v1197
    %1200 = vrot.lane.b32.xlu0 %v1189, 64
    %v1201 = vpop.permute.xlu0 %1200
    %v1203 = vmul.f32 %v1198, %v1201
    %1205 = vrot.lane.b32.xlu0 %v1203, 64
    %v1206 = vpop.permute.xlu0 %1205
    %v1208 = vadd.f32 %v1190, %v1206
    %v1209 = vtanh.pop %v1208
    %v1210 = vsub.f32 1.0, %v1198
    %1212 = vrot.lane.b32.xlu0 %v1209, 96
    %v1213 = vpop.permute.xlu0 %1212
    %v1215 = vmul.f32 %v1210, %v1213
    %v1216 = vmul.f32 %v1198, %v869
    %v1217 = vadd.f32 %v1215, %v1216
    %v1218 = vpack.c.bf16 %v1217, %v1217
    %1220 = vrot.lane.b32.xlu0 %v1218, 96
    %v1221 = vpop.permute.xlu0 %1220
    %v1223 = vsel %vm86, %v1221, 0
    %1225 = vmatprep.subr.bf16.mxu0 0
    %1226 = vmatpush1.bf16.msra.mxu0 0
    %1227 = vmatprep.subr.bf16.mxu0 0
    %1228 = vmatpush1.bf16.msra.mxu0 0
    %1229 = vmatprep.subr.bf16.mxu0 0
    %1230 = vmatpush1.bf16.msra.mxu0 0
    %1231 = vmatprep.subr.bf16.mxu0 0
    %1232 = vmatpush1.bf16.msra.mxu0 0
    %1233 = vmatprep.subr.bf16.mxu0 0
    %1234 = vmatpush1.bf16.msra.mxu0 0
    %1235 = vmatprep.subr.bf16.mxu0 0
    %1236 = vmatpush1.bf16.msra.mxu0 0
    %1237 = vmatprep.subr.bf16.mxu0 %v1144
    %1238 = vmatpush1.bf16.msra.mxu0 %v1143
    %1239 = vmatprep.subr.bf16.mxu0 %v1142
    %1240 = vmatpush1.bf16.msra.mxu0 %v1141
    %1241 = vmatprep.subr.bf16.mxu0 0
    %1242 = vmatpush2.bf16.msra.mxu0 0
    %1243 = vmatprep.subr.bf16.mxu0 0
    %1244 = vmatpush2.bf16.msra.mxu0 0
    %1245 = vmatprep.subr.bf16.mxu0 0
    %1246 = vmatpush2.bf16.msra.mxu0 0
    %1247 = vmatprep.subr.bf16.mxu0 0
    %1248 = vmatpush2.bf16.msra.mxu0 0
    %1249 = vmatprep.subr.bf16.mxu0 0
    %1250 = vmatpush2.bf16.msra.mxu0 0
    %1251 = vmatprep.subr.bf16.mxu0 0
    %1252 = vmatpush2.bf16.msra.mxu0 0
    %1253 = vmatprep.subr.bf16.mxu0 0
    %1254 = vmatpush2.bf16.msra.mxu0 0
    %1255 = vmatprep.subr.bf16.mxu0 0
    %1256 = vmatpush2.bf16.msra.mxu0 0
    %1257 = vmatprep.mubr.bf16.mxu0 0
    %1258 = vmatmul.mubr.bf16.gmra.mxu0 %v1223
    %v1259 = vpop.f32.mrf.mxu0
    %v1260 = vadd.f32 0.0, %v1259
    %v1261 = vpop.f32.mrf.mxu0
    %v1262 = vadd.f32 0.0, %v1261
    %v1263 = vpop.f32.mrf.mxu0
    %v1264 = vpop.f32.mrf.mxu0
    %1265 = vdwg.mxu0
    %v1266 = vadd.f32 %v1191, %v1262
    %1267 = vst [vmem:[%s5] sm:$0xff] %v1266
    %v1268 = vadd.f32 %v1260, %v883
    %s1269 = sld [smem:[#allocation4]]
    %p1270 = scmp.eq.s32.totalorder %s1269, 0
    // Predicated region
    $region26: #{seq2seq_forward.1} parent=1 // pred_check
      %p1271 = pneg %p1270
    $region27: #{seq2seq_forward.1} parent=1 // pred_check_branch
      %1273 = sbr.rel (%p1271) target = $region29
    $region28: #{seq2seq_forward.1} parent=1 // pred_region
      %1274 = vmax.xlane.f32.xlu0 %v1266
      %v1275 = vpop.xlane.xlu0 %1274
      %vm1276 = vcmp.eq.f32.partialorder %v1266, %v1275
      %v1277 = vsel %vm1276, %v36, 128.0
      %1278 = vmin.xlane.f32.xlu0 %v1277
      %v1279 = vpop.xlane.xlu0 %1278
      %vm1280 = vcmp.eq.f32.partialorder %v36, %v1279
      %v1281 = vsel %vm1280, 1, 0
      %v1282 = vcvt.s32.f32 %v1281
      %v1283 = vpack.c.bf16 %v1282, %v1282
      %v1285 = vsel %vm86, %v1283, 0
      %1287 = vmatprep.subr.bf16.mxu0 0
      %1288 = vmatpush1.bf16.msra.mxu0 0
      %1289 = vmatprep.subr.bf16.mxu0 0
      %1290 = vmatpush1.bf16.msra.mxu0 0
      %1291 = vmatprep.subr.bf16.mxu0 0
      %1292 = vmatpush1.bf16.msra.mxu0 0
      %1293 = vmatprep.subr.bf16.mxu0 0
      %1294 = vmatpush1.bf16.msra.mxu0 0
      %1295 = vmatprep.subr.bf16.mxu0 0
      %1296 = vmatpush1.bf16.msra.mxu0 0
      %1297 = vmatprep.subr.bf16.mxu0 0
      %1298 = vmatpush1.bf16.msra.mxu0 0
      %1299 = vmatprep.subr.bf16.mxu0 %v1007
      %1300 = vmatpush1.bf16.msra.mxu0 %v1006
      %1301 = vmatprep.subr.bf16.mxu0 %v1005
      %1302 = vmatpush1.bf16.msra.mxu0 %v1004
      %1303 = vmatprep.subr.bf16.mxu0 0
      %1304 = vmatpush2.bf16.msra.mxu0 0
      %1305 = vmatprep.subr.bf16.mxu0 0
      %1306 = vmatpush2.bf16.msra.mxu0 0
      %1307 = vmatprep.subr.bf16.mxu0 0
      %1308 = vmatpush2.bf16.msra.mxu0 0
      %1309 = vmatprep.subr.bf16.mxu0 0
      %1310 = vmatpush2.bf16.msra.mxu0 0
      %1311 = vmatprep.subr.bf16.mxu0 0
      %1312 = vmatpush2.bf16.msra.mxu0 0
      %1313 = vmatprep.subr.bf16.mxu0 0
      %1314 = vmatpush2.bf16.msra.mxu0 0
      %1315 = vmatprep.subr.bf16.mxu0 0
      %1316 = vmatpush2.bf16.msra.mxu0 0
      %1317 = vmatprep.subr.bf16.mxu0 0
      %1318 = vmatpush2.bf16.msra.mxu0 0
      %1319 = vmatprep.mubr.bf16.mxu0 0
      %1320 = vmatmul.mubr.bf16.gmra.mxu0 %v1285
      %v1321 = vpop.f32.mrf.mxu0
      %v1322 = vadd.f32 %v958, %v1321
      %v1323 = vpop.f32.mrf.mxu0
      %v1324 = vadd.f32 %v960, %v1323
      %v1325 = vpop.f32.mrf.mxu0
      %v1326 = vpop.f32.mrf.mxu0
      %1327 = vdwg.mxu0
      %s1328 = scalar_lea.vmem [#allocation3], 16
      %1329 = vst [vmem:[%s1328] sm:$0xff] %v1322
      %1330 = vst [vmem:[%s1328 + $0x8] sm:$0xff] %v1324
    $region29: #{seq2seq_forward.1} parent=1 // pred_fallthru
      _
    %s1331 = scalar_lea.vmem [#allocation3], 16
    %v1332 = vld [vmem:[%s1331] sm:$0xff]
    %v1333 = vld [vmem:[%s1331 + $0x8] sm:$0xff]
    %v1334 = vadd.f32 %v1332, %v1268
    %v1335 = vxor.u32 %v1334, 2147483648
    %v1336 = vmul.f32 %v1335, 1.442695
    %v1337 = vpow.pop %v1336
    %v1338 = vadd.f32 %v1337, 1.0
    %v1339 = vrcp.pop %v1338
    %v1340 = vmul.f32 1.0, %v1339
    %1342 = vrot.lane.b32.xlu0 %v1268, 64
    %v1343 = vpop.permute.xlu0 %1342
    %v1345 = vmul.f32 %v1340, %v1343
    %1347 = vrot.lane.b32.xlu0 %v1345, 64
    %v1348 = vpop.permute.xlu0 %1347
    %v1350 = vadd.f32 %v1332, %v1348
    %v1351 = vtanh.pop %v1350
    %v1352 = vsub.f32 1.0, %v1340
    %1354 = vrot.lane.b32.xlu0 %v1351, 96
    %v1355 = vpop.permute.xlu0 %1354
    %v1357 = vmul.f32 %v1352, %v1355
    %v1358 = vmul.f32 %v1340, %v1217
    %v1359 = vadd.f32 %v1357, %v1358
    %v1360 = vpack.c.bf16 %v1359, %v1359
    %1362 = vrot.lane.b32.xlu0 %v1360, 96
    %v1363 = vpop.permute.xlu0 %1362
    %v1365 = vsel %vm86, %v1363, 0
    %1367 = vmatprep.subr.bf16.mxu0 0
    %1368 = vmatpush1.bf16.msra.mxu0 0
    %1369 = vmatprep.subr.bf16.mxu0 0
    %1370 = vmatpush1.bf16.msra.mxu0 0
    %1371 = vmatprep.subr.bf16.mxu0 0
    %1372 = vmatpush1.bf16.msra.mxu0 0
    %1373 = vmatprep.subr.bf16.mxu0 0
    %1374 = vmatpush1.bf16.msra.mxu0 0
    %1375 = vmatprep.subr.bf16.mxu0 0
    %1376 = vmatpush1.bf16.msra.mxu0 0
    %1377 = vmatprep.subr.bf16.mxu0 0
    %1378 = vmatpush1.bf16.msra.mxu0 0
    %1379 = vmatprep.subr.bf16.mxu0 %v1144
    %1380 = vmatpush1.bf16.msra.mxu0 %v1143
    %1381 = vmatprep.subr.bf16.mxu0 %v1142
    %1382 = vmatpush1.bf16.msra.mxu0 %v1141
    %1383 = vmatprep.subr.bf16.mxu0 0
    %1384 = vmatpush2.bf16.msra.mxu0 0
    %1385 = vmatprep.subr.bf16.mxu0 0
    %1386 = vmatpush2.bf16.msra.mxu0 0
    %1387 = vmatprep.subr.bf16.mxu0 0
    %1388 = vmatpush2.bf16.msra.mxu0 0
    %1389 = vmatprep.subr.bf16.mxu0 0
    %1390 = vmatpush2.bf16.msra.mxu0 0
    %1391 = vmatprep.subr.bf16.mxu0 0
    %1392 = vmatpush2.bf16.msra.mxu0 0
    %1393 = vmatprep.subr.bf16.mxu0 0
    %1394 = vmatpush2.bf16.msra.mxu0 0
    %1395 = vmatprep.subr.bf16.mxu0 0
    %1396 = vmatpush2.bf16.msra.mxu0 0
    %1397 = vmatprep.subr.bf16.mxu0 0
    %1398 = vmatpush2.bf16.msra.mxu0 0
    %1399 = vmatprep.mubr.bf16.mxu0 0
    %1400 = vmatmul.mubr.bf16.gmra.mxu0 %v1365
    %v1401 = vpop.f32.mrf.mxu0
    %v1402 = vadd.f32 0.0, %v1401
    %v1403 = vpop.f32.mrf.mxu0
    %v1404 = vadd.f32 0.0, %v1403
    %v1405 = vpop.f32.mrf.mxu0
    %v1406 = vpop.f32.mrf.mxu0
    %1407 = vdwg.mxu0
    %v1408 = vadd.f32 %v1333, %v1404
    %s1409 = scalar_lea.vmem %s5, 8
    %1410 = vst [vmem:[%s1409] sm:$0xff] %v1408
    %v1411 = vadd.f32 %v1402, %v883
    %s1412 = sld [smem:[#allocation4 + $0x1]]
    %p1413 = scmp.eq.s32.totalorder %s1412, 0
    // Predicated region
    $region30: #{seq2seq_forward.1} parent=1 // pred_check
      %p1414 = pneg %p1413
    $region31: #{seq2seq_forward.1} parent=1 // pred_check_branch
      %1416 = sbr.rel (%p1414) target = $region33
    $region32: #{seq2seq_forward.1} parent=1 // pred_region
      %1417 = vmax.xlane.f32.xlu0 %v1408
      %v1418 = vpop.xlane.xlu0 %1417
      %vm1419 = vcmp.eq.f32.partialorder %v1408, %v1418
      %v1420 = vsel %vm1419, %v36, 128.0
      %1421 = vmin.xlane.f32.xlu0 %v1420
      %v1422 = vpop.xlane.xlu0 %1421
      %vm1423 = vcmp.eq.f32.partialorder %v36, %v1422
      %v1424 = vsel %vm1423, 1, 0
      %v1425 = vcvt.s32.f32 %v1424
      %v1426 = vpack.c.bf16 %v1425, %v1425
      %v1428 = vsel %vm86, %v1426, 0
      %1430 = vmatprep.subr.bf16.mxu0 0
      %1431 = vmatpush1.bf16.msra.mxu0 0
      %1432 = vmatprep.subr.bf16.mxu0 0
      %1433 = vmatpush1.bf16.msra.mxu0 0
      %1434 = vmatprep.subr.bf16.mxu0 0
      %1435 = vmatpush1.bf16.msra.mxu0 0
      %1436 = vmatprep.subr.bf16.mxu0 0
      %1437 = vmatpush1.bf16.msra.mxu0 0
      %1438 = vmatprep.subr.bf16.mxu0 0
      %1439 = vmatpush1.bf16.msra.mxu0 0
      %1440 = vmatprep.subr.bf16.mxu0 0
      %1441 = vmatpush1.bf16.msra.mxu0 0
      %1442 = vmatprep.subr.bf16.mxu0 %v1007
      %1443 = vmatpush1.bf16.msra.mxu0 %v1006
      %1444 = vmatprep.subr.bf16.mxu0 %v1005
      %1445 = vmatpush1.bf16.msra.mxu0 %v1004
      %1446 = vmatprep.subr.bf16.mxu0 0
      %1447 = vmatpush2.bf16.msra.mxu0 0
      %1448 = vmatprep.subr.bf16.mxu0 0
      %1449 = vmatpush2.bf16.msra.mxu0 0
      %1450 = vmatprep.subr.bf16.mxu0 0
      %1451 = vmatpush2.bf16.msra.mxu0 0
      %1452 = vmatprep.subr.bf16.mxu0 0
      %1453 = vmatpush2.bf16.msra.mxu0 0
      %1454 = vmatprep.subr.bf16.mxu0 0
      %1455 = vmatpush2.bf16.msra.mxu0 0
      %1456 = vmatprep.subr.bf16.mxu0 0
      %1457 = vmatpush2.bf16.msra.mxu0 0
      %1458 = vmatprep.subr.bf16.mxu0 0
      %1459 = vmatpush2.bf16.msra.mxu0 0
      %1460 = vmatprep.subr.bf16.mxu0 0
      %1461 = vmatpush2.bf16.msra.mxu0 0
      %1462 = vmatprep.mubr.bf16.mxu0 0
      %1463 = vmatmul.mubr.bf16.gmra.mxu0 %v1428
      %v1464 = vpop.f32.mrf.mxu0
      %v1465 = vadd.f32 %v958, %v1464
      %v1466 = vpop.f32.mrf.mxu0
      %v1467 = vadd.f32 %v960, %v1466
      %v1468 = vpop.f32.mrf.mxu0
      %v1469 = vpop.f32.mrf.mxu0
      %1470 = vdwg.mxu0
      %s1471 = scalar_lea.vmem [#allocation3], 32
      %1472 = vst [vmem:[%s1471] sm:$0xff] %v1465
      %1473 = vst [vmem:[%s1471 + $0x8] sm:$0xff] %v1467
    $region33: #{seq2seq_forward.1} parent=1 // pred_fallthru
      _
    %s1474 = scalar_lea.vmem [#allocation3], 32
    %v1475 = vld [vmem:[%s1474] sm:$0xff]
    %v1476 = vld [vmem:[%s1474 + $0x8] sm:$0xff]
    %v1477 = vadd.f32 %v1475, %v1411
    %v1478 = vxor.u32 %v1477, 2147483648
    %v1479 = vmul.f32 %v1478, 1.442695
    %v1480 = vpow.pop %v1479
    %v1481 = vadd.f32 %v1480, 1.0
    %v1482 = vrcp.pop %v1481
    %v1483 = vmul.f32 1.0, %v1482
    %1485 = vrot.lane.b32.xlu0 %v1411, 64
    %v1486 = vpop.permute.xlu0 %1485
    %v1488 = vmul.f32 %v1483, %v1486
    %1490 = vrot.lane.b32.xlu0 %v1488, 64
    %v1491 = vpop.permute.xlu0 %1490
    %v1493 = vadd.f32 %v1475, %v1491
    %v1494 = vtanh.pop %v1493
    %v1495 = vsub.f32 1.0, %v1483
    %1497 = vrot.lane.b32.xlu0 %v1494, 96
    %v1498 = vpop.permute.xlu0 %1497
    %v1500 = vmul.f32 %v1495, %v1498
    %v1501 = vmul.f32 %v1483, %v1359
    %v1502 = vadd.f32 %v1500, %v1501
    %v1503 = vpack.c.bf16 %v1502, %v1502
    %1505 = vrot.lane.b32.xlu0 %v1503, 96
    %v1506 = vpop.permute.xlu0 %1505
    %v1508 = vsel %vm86, %v1506, 0
    %1510 = vmatprep.subr.bf16.mxu0 0
    %1511 = vmatpush1.bf16.msra.mxu0 0
    %1512 = vmatprep.subr.bf16.mxu0 0
    %1513 = vmatpush1.bf16.msra.mxu0 0
    %1514 = vmatprep.subr.bf16.mxu0 0
    %1515 = vmatpush1.bf16.msra.mxu0 0
    %1516 = vmatprep.subr.bf16.mxu0 0
    %1517 = vmatpush1.bf16.msra.mxu0 0
    %1518 = vmatprep.subr.bf16.mxu0 0
    %1519 = vmatpush1.bf16.msra.mxu0 0
    %1520 = vmatprep.subr.bf16.mxu0 0
    %1521 = vmatpush1.bf16.msra.mxu0 0
    %1522 = vmatprep.subr.bf16.mxu0 %v1144
    %1523 = vmatpush1.bf16.msra.mxu0 %v1143
    %1524 = vmatprep.subr.bf16.mxu0 %v1142
    %1525 = vmatpush1.bf16.msra.mxu0 %v1141
    %1526 = vmatprep.subr.bf16.mxu0 0
    %1527 = vmatpush2.bf16.msra.mxu0 0
    %1528 = vmatprep.subr.bf16.mxu0 0
    %1529 = vmatpush2.bf16.msra.mxu0 0
    %1530 = vmatprep.subr.bf16.mxu0 0
    %1531 = vmatpush2.bf16.msra.mxu0 0
    %1532 = vmatprep.subr.bf16.mxu0 0
    %1533 = vmatpush2.bf16.msra.mxu0 0
    %1534 = vmatprep.subr.bf16.mxu0 0
    %1535 = vmatpush2.bf16.msra.mxu0 0
    %1536 = vmatprep.subr.bf16.mxu0 0
    %1537 = vmatpush2.bf16.msra.mxu0 0
    %1538 = vmatprep.subr.bf16.mxu0 0
    %1539 = vmatpush2.bf16.msra.mxu0 0
    %1540 = vmatprep.subr.bf16.mxu0 0
    %1541 = vmatpush2.bf16.msra.mxu0 0
    %1542 = vmatprep.mubr.bf16.mxu0 0
    %1543 = vmatmul.mubr.bf16.gmra.mxu0 %v1508
    %v1544 = vpop.f32.mrf.mxu0
    %v1545 = vadd.f32 0.0, %v1544
    %v1546 = vpop.f32.mrf.mxu0
    %v1547 = vadd.f32 0.0, %v1546
    %v1548 = vpop.f32.mrf.mxu0
    %v1549 = vpop.f32.mrf.mxu0
    %1550 = vdwg.mxu0
    %v1551 = vadd.f32 %v1476, %v1547
    %s1552 = scalar_lea.vmem %s5, 16
    %1553 = vst [vmem:[%s1552] sm:$0xff] %v1551
    %v1554 = vadd.f32 %v1545, %v883
    %s1555 = sld [smem:[#allocation4 + $0x2]]
    %p1556 = scmp.eq.s32.totalorder %s1555, 0
    // Predicated region
    $region34: #{seq2seq_forward.1} parent=1 // pred_check
      %p1557 = pneg %p1556
    $region35: #{seq2seq_forward.1} parent=1 // pred_check_branch
      %1559 = sbr.rel (%p1557) target = $region37
    $region36: #{seq2seq_forward.1} parent=1 // pred_region
      %1560 = vmax.xlane.f32.xlu0 %v1551
      %v1561 = vpop.xlane.xlu0 %1560
      %vm1562 = vcmp.eq.f32.partialorder %v1551, %v1561
      %v1563 = vsel %vm1562, %v36, 128.0
      %1564 = vmin.xlane.f32.xlu0 %v1563
      %v1565 = vpop.xlane.xlu0 %1564
      %vm1566 = vcmp.eq.f32.partialorder %v36, %v1565
      %v1567 = vsel %vm1566, 1, 0
      %v1568 = vcvt.s32.f32 %v1567
      %v1569 = vpack.c.bf16 %v1568, %v1568
      %v1571 = vsel %vm86, %v1569, 0
      %1573 = vmatprep.subr.bf16.mxu0 0
      %1574 = vmatpush1.bf16.msra.mxu0 0
      %1575 = vmatprep.subr.bf16.mxu0 0
      %1576 = vmatpush1.bf16.msra.mxu0 0
      %1577 = vmatprep.subr.bf16.mxu0 0
      %1578 = vmatpush1.bf16.msra.mxu0 0
      %1579 = vmatprep.subr.bf16.mxu0 0
      %1580 = vmatpush1.bf16.msra.mxu0 0
      %1581 = vmatprep.subr.bf16.mxu0 0
      %1582 = vmatpush1.bf16.msra.mxu0 0
      %1583 = vmatprep.subr.bf16.mxu0 0
      %1584 = vmatpush1.bf16.msra.mxu0 0
      %1585 = vmatprep.subr.bf16.mxu0 %v1007
      %1586 = vmatpush1.bf16.msra.mxu0 %v1006
      %1587 = vmatprep.subr.bf16.mxu0 %v1005
      %1588 = vmatpush1.bf16.msra.mxu0 %v1004
      %1589 = vmatprep.subr.bf16.mxu0 0
      %1590 = vmatpush2.bf16.msra.mxu0 0
      %1591 = vmatprep.subr.bf16.mxu0 0
      %1592 = vmatpush2.bf16.msra.mxu0 0
      %1593 = vmatprep.subr.bf16.mxu0 0
      %1594 = vmatpush2.bf16.msra.mxu0 0
      %1595 = vmatprep.subr.bf16.mxu0 0
      %1596 = vmatpush2.bf16.msra.mxu0 0
      %1597 = vmatprep.subr.bf16.mxu0 0
      %1598 = vmatpush2.bf16.msra.mxu0 0
      %1599 = vmatprep.subr.bf16.mxu0 0
      %1600 = vmatpush2.bf16.msra.mxu0 0
      %1601 = vmatprep.subr.bf16.mxu0 0
      %1602 = vmatpush2.bf16.msra.mxu0 0
      %1603 = vmatprep.subr.bf16.mxu0 0
      %1604 = vmatpush2.bf16.msra.mxu0 0
      %1605 = vmatprep.mubr.bf16.mxu0 0
      %1606 = vmatmul.mubr.bf16.gmra.mxu0 %v1571
      %v1607 = vpop.f32.mrf.mxu0
      %v1608 = vadd.f32 %v958, %v1607
      %v1609 = vpop.f32.mrf.mxu0
      %v1610 = vadd.f32 %v960, %v1609
      %v1611 = vpop.f32.mrf.mxu0
      %v1612 = vpop.f32.mrf.mxu0
      %1613 = vdwg.mxu0
      %s1614 = scalar_lea.vmem [#allocation3], 48
      %1615 = vst [vmem:[%s1614] sm:$0xff] %v1608
      %1616 = vst [vmem:[%s1614 + $0x8] sm:$0xff] %v1610
    $region37: #{seq2seq_forward.1} parent=1 // pred_fallthru
      _
    %s1617 = scalar_lea.vmem [#allocation3], 48
    %v1618 = vld [vmem:[%s1617] sm:$0xff]
    %v1619 = vld [vmem:[%s1617 + $0x8] sm:$0xff]
    %v1620 = vadd.f32 %v1618, %v1554
    %v1621 = vxor.u32 %v1620, 2147483648
    %v1622 = vmul.f32 %v1621, 1.442695
    %v1623 = vpow.pop %v1622
    %v1624 = vadd.f32 %v1623, 1.0
    %v1625 = vrcp.pop %v1624
    %v1626 = vmul.f32 1.0, %v1625
    %1628 = vrot.lane.b32.xlu0 %v1554, 64
    %v1629 = vpop.permute.xlu0 %1628
    %v1631 = vmul.f32 %v1626, %v1629
    %1633 = vrot.lane.b32.xlu0 %v1631, 64
    %v1634 = vpop.permute.xlu0 %1633
    %v1636 = vadd.f32 %v1618, %v1634
    %v1637 = vtanh.pop %v1636
    %v1638 = vsub.f32 1.0, %v1626
    %1640 = vrot.lane.b32.xlu0 %v1637, 96
    %v1641 = vpop.permute.xlu0 %1640
    %v1643 = vmul.f32 %v1638, %v1641
    %v1644 = vmul.f32 %v1626, %v1502
    %v1645 = vadd.f32 %v1643, %v1644
    %v1646 = vpack.c.bf16 %v1645, %v1645
    %1648 = vrot.lane.b32.xlu0 %v1646, 96
    %v1649 = vpop.permute.xlu0 %1648
    %v1651 = vsel %vm86, %v1649, 0
    %1653 = vmatprep.subr.bf16.mxu0 0
    %1654 = vmatpush1.bf16.msra.mxu0 0
    %1655 = vmatprep.subr.bf16.mxu0 0
    %1656 = vmatpush1.bf16.msra.mxu0 0
    %1657 = vmatprep.subr.bf16.mxu0 0
    %1658 = vmatpush1.bf16.msra.mxu0 0
    %1659 = vmatprep.subr.bf16.mxu0 0
    %1660 = vmatpush1.bf16.msra.mxu0 0
    %1661 = vmatprep.subr.bf16.mxu0 0
    %1662 = vmatpush1.bf16.msra.mxu0 0
    %1663 = vmatprep.subr.bf16.mxu0 0
    %1664 = vmatpush1.bf16.msra.mxu0 0
    %1665 = vmatprep.subr.bf16.mxu0 %v1144
    %1666 = vmatpush1.bf16.msra.mxu0 %v1143
    %1667 = vmatprep.subr.bf16.mxu0 %v1142
    %1668 = vmatpush1.bf16.msra.mxu0 %v1141
    %1669 = vmatprep.subr.bf16.mxu0 0
    %1670 = vmatpush2.bf16.msra.mxu0 0
    %1671 = vmatprep.subr.bf16.mxu0 0
    %1672 = vmatpush2.bf16.msra.mxu0 0
    %1673 = vmatprep.subr.bf16.mxu0 0
    %1674 = vmatpush2.bf16.msra.mxu0 0
    %1675 = vmatprep.subr.bf16.mxu0 0
    %1676 = vmatpush2.bf16.msra.mxu0 0
    %1677 = vmatprep.subr.bf16.mxu0 0
    %1678 = vmatpush2.bf16.msra.mxu0 0
    %1679 = vmatprep.subr.bf16.mxu0 0
    %1680 = vmatpush2.bf16.msra.mxu0 0
    %1681 = vmatprep.subr.bf16.mxu0 0
    %1682 = vmatpush2.bf16.msra.mxu0 0
    %1683 = vmatprep.subr.bf16.mxu0 0
    %1684 = vmatpush2.bf16.msra.mxu0 0
    %1685 = vmatprep.mubr.bf16.mxu0 0
    %1686 = vmatmul.mubr.bf16.gmra.mxu0 %v1651
    %v1687 = vpop.f32.mrf.mxu0
    %v1688 = vadd.f32 0.0, %v1687
    %v1689 = vpop.f32.mrf.mxu0
    %v1690 = vadd.f32 0.0, %v1689
    %v1691 = vpop.f32.mrf.mxu0
    %v1692 = vpop.f32.mrf.mxu0
    %1693 = vdwg.mxu0
    %v1694 = vadd.f32 %v1619, %v1690
    %s1695 = scalar_lea.vmem %s5, 24
    %1696 = vst [vmem:[%s1695] sm:$0xff] %v1694
    %v1697 = vadd.f32 %v1688, %v883
    %s1698 = sld [smem:[#allocation4 + $0x3]]
    %p1699 = scmp.eq.s32.totalorder %s1698, 0
    // Predicated region
    $region38: #{seq2seq_forward.1} parent=1 // pred_check
      %p1700 = pneg %p1699
    $region39: #{seq2seq_forward.1} parent=1 // pred_check_branch
      %1702 = sbr.rel (%p1700) target = $region41
    $region40: #{seq2seq_forward.1} parent=1 // pred_region
      %1703 = vmax.xlane.f32.xlu0 %v1694
      %v1704 = vpop.xlane.xlu0 %1703
      %vm1705 = vcmp.eq.f32.partialorder %v1694, %v1704
      %v1706 = vsel %vm1705, %v36, 128.0
      %1707 = vmin.xlane.f32.xlu0 %v1706
      %v1708 = vpop.xlane.xlu0 %1707
      %vm1709 = vcmp.eq.f32.partialorder %v36, %v1708
      %v1710 = vsel %vm1709, 1, 0
      %v1711 = vcvt.s32.f32 %v1710
      %v1712 = vpack.c.bf16 %v1711, %v1711
      %v1714 = vsel %vm86, %v1712, 0
      %1716 = vmatprep.subr.bf16.mxu0 0
      %1717 = vmatpush1.bf16.msra.mxu0 0
      %1718 = vmatprep.subr.bf16.mxu0 0
      %1719 = vmatpush1.bf16.msra.mxu0 0
      %1720 = vmatprep.subr.bf16.mxu0 0
      %1721 = vmatpush1.bf16.msra.mxu0 0
      %1722 = vmatprep.subr.bf16.mxu0 0
      %1723 = vmatpush1.bf16.msra.mxu0 0
      %1724 = vmatprep.subr.bf16.mxu0 0
      %1725 = vmatpush1.bf16.msra.mxu0 0
      %1726 = vmatprep.subr.bf16.mxu0 0
      %1727 = vmatpush1.bf16.msra.mxu0 0
      %1728 = vmatprep.subr.bf16.mxu0 %v1007
      %1729 = vmatpush1.bf16.msra.mxu0 %v1006
      %1730 = vmatprep.subr.bf16.mxu0 %v1005
      %1731 = vmatpush1.bf16.msra.mxu0 %v1004
      %1732 = vmatprep.subr.bf16.mxu0 0
      %1733 = vmatpush2.bf16.msra.mxu0 0
      %1734 = vmatprep.subr.bf16.mxu0 0
      %1735 = vmatpush2.bf16.msra.mxu0 0
      %1736 = vmatprep.subr.bf16.mxu0 0
      %1737 = vmatpush2.bf16.msra.mxu0 0
      %1738 = vmatprep.subr.bf16.mxu0 0
      %1739 = vmatpush2.bf16.msra.mxu0 0
      %1740 = vmatprep.subr.bf16.mxu0 0
      %1741 = vmatpush2.bf16.msra.mxu0 0
      %1742 = vmatprep.subr.bf16.mxu0 0
      %1743 = vmatpush2.bf16.msra.mxu0 0
      %1744 = vmatprep.subr.bf16.mxu0 0
      %1745 = vmatpush2.bf16.msra.mxu0 0
      %1746 = vmatprep.subr.bf16.mxu0 0
      %1747 = vmatpush2.bf16.msra.mxu0 0
      %1748 = vmatprep.mubr.bf16.mxu0 0
      %1749 = vmatmul.mubr.bf16.gmra.mxu0 %v1714
      %v1750 = vpop.f32.mrf.mxu0
      %v1751 = vadd.f32 %v958, %v1750
      %v1752 = vpop.f32.mrf.mxu0
      %v1753 = vadd.f32 %v960, %v1752
      %v1754 = vpop.f32.mrf.mxu0
      %v1755 = vpop.f32.mrf.mxu0
      %1756 = vdwg.mxu0
      %s1757 = scalar_lea.vmem [#allocation3], 64
      %1758 = vst [vmem:[%s1757] sm:$0xff] %v1751
      %1759 = vst [vmem:[%s1757 + $0x8] sm:$0xff] %v1753
    $region41: #{seq2seq_forward.1} parent=1 // pred_fallthru
      _
    %s1760 = scalar_lea.vmem [#allocation3], 64
    %v1761 = vld [vmem:[%s1760] sm:$0xff]
    %v1762 = vld [vmem:[%s1760 + $0x8] sm:$0xff]
    %v1763 = vadd.f32 %v1761, %v1697
    %v1764 = vxor.u32 %v1763, 2147483648
    %v1765 = vmul.f32 %v1764, 1.442695
    %v1766 = vpow.pop %v1765
    %v1767 = vadd.f32 %v1766, 1.0
    %v1768 = vrcp.pop %v1767
    %v1769 = vmul.f32 1.0, %v1768
    %1771 = vrot.lane.b32.xlu0 %v1697, 64
    %v1772 = vpop.permute.xlu0 %1771
    %v1774 = vmul.f32 %v1769, %v1772
    %1776 = vrot.lane.b32.xlu0 %v1774, 64
    %v1777 = vpop.permute.xlu0 %1776
    %v1779 = vadd.f32 %v1761, %v1777
    %v1780 = vtanh.pop %v1779
    %v1781 = vsub.f32 1.0, %v1769
    %1783 = vrot.lane.b32.xlu0 %v1780, 96
    %v1784 = vpop.permute.xlu0 %1783
    %v1786 = vmul.f32 %v1781, %v1784
    %v1787 = vmul.f32 %v1769, %v1645
    %v1788 = vadd.f32 %v1786, %v1787
    %v1789 = vpack.c.bf16 %v1788, %v1788
    %1791 = vrot.lane.b32.xlu0 %v1789, 96
    %v1792 = vpop.permute.xlu0 %1791
    %v1794 = vsel %vm86, %v1792, 0
    %1796 = vmatprep.subr.bf16.mxu0 0
    %1797 = vmatpush1.bf16.msra.mxu0 0
    %1798 = vmatprep.subr.bf16.mxu0 0
    %1799 = vmatpush1.bf16.msra.mxu0 0
    %1800 = vmatprep.subr.bf16.mxu0 0
    %1801 = vmatpush1.bf16.msra.mxu0 0
    %1802 = vmatprep.subr.bf16.mxu0 0
    %1803 = vmatpush1.bf16.msra.mxu0 0
    %1804 = vmatprep.subr.bf16.mxu0 0
    %1805 = vmatpush1.bf16.msra.mxu0 0
    %1806 = vmatprep.subr.bf16.mxu0 0
    %1807 = vmatpush1.bf16.msra.mxu0 0
    %1808 = vmatprep.subr.bf16.mxu0 %v1144
    %1809 = vmatpush1.bf16.msra.mxu0 %v1143
    %1810 = vmatprep.subr.bf16.mxu0 %v1142
    %1811 = vmatpush1.bf16.msra.mxu0 %v1141
    %1812 = vmatprep.subr.bf16.mxu0 0
    %1813 = vmatpush2.bf16.msra.mxu0 0
    %1814 = vmatprep.subr.bf16.mxu0 0
    %1815 = vmatpush2.bf16.msra.mxu0 0
    %1816 = vmatprep.subr.bf16.mxu0 0
    %1817 = vmatpush2.bf16.msra.mxu0 0
    %1818 = vmatprep.subr.bf16.mxu0 0
    %1819 = vmatpush2.bf16.msra.mxu0 0
    %1820 = vmatprep.subr.bf16.mxu0 0
    %1821 = vmatpush2.bf16.msra.mxu0 0
    %1822 = vmatprep.subr.bf16.mxu0 0
    %1823 = vmatpush2.bf16.msra.mxu0 0
    %1824 = vmatprep.subr.bf16.mxu0 0
    %1825 = vmatpush2.bf16.msra.mxu0 0
    %1826 = vmatprep.subr.bf16.mxu0 0
    %1827 = vmatpush2.bf16.msra.mxu0 0
    %1828 = vmatprep.mubr.bf16.mxu0 0
    %1829 = vmatmul.mubr.bf16.gmra.mxu0 %v1794
    %v1830 = vpop.f32.mrf.mxu0
    %v1831 = vadd.f32 0.0, %v1830
    %v1832 = vpop.f32.mrf.mxu0
    %v1833 = vadd.f32 0.0, %v1832
    %v1834 = vpop.f32.mrf.mxu0
    %v1835 = vpop.f32.mrf.mxu0
    %1836 = vdwg.mxu0
    %v1837 = vadd.f32 %v1762, %v1833
    %s1838 = scalar_lea.vmem %s5, 32
    %1839 = vst [vmem:[%s1838] sm:$0xff] %v1837
    %v1840 = vadd.f32 %v1831, %v883
    %s1841 = sld [smem:[#allocation4 + $0x4]]
    %p1842 = scmp.eq.s32.totalorder %s1841, 0
    // Predicated region
    $region42: #{seq2seq_forward.1} parent=1 // pred_check
      %p1843 = pneg %p1842
    $region43: #{seq2seq_forward.1} parent=1 // pred_check_branch
      %1845 = sbr.rel (%p1843) target = $region45
    $region44: #{seq2seq_forward.1} parent=1 // pred_region
      %1846 = vmax.xlane.f32.xlu0 %v1837
      %v1847 = vpop.xlane.xlu0 %1846
      %vm1848 = vcmp.eq.f32.partialorder %v1837, %v1847
      %v1849 = vsel %vm1848, %v36, 128.0
      %1850 = vmin.xlane.f32.xlu0 %v1849
      %v1851 = vpop.xlane.xlu0 %1850
      %vm1852 = vcmp.eq.f32.partialorder %v36, %v1851
      %v1853 = vsel %vm1852, 1, 0
      %v1854 = vcvt.s32.f32 %v1853
      %v1855 = vpack.c.bf16 %v1854, %v1854
      %v1857 = vsel %vm86, %v1855, 0
      %1859 = vmatprep.subr.bf16.mxu0 0
      %1860 = vmatpush1.bf16.msra.mxu0 0
      %1861 = vmatprep.subr.bf16.mxu0 0
      %1862 = vmatpush1.bf16.msra.mxu0 0
      %1863 = vmatprep.subr.bf16.mxu0 0
      %1864 = vmatpush1.bf16.msra.mxu0 0
      %1865 = vmatprep.subr.bf16.mxu0 0
      %1866 = vmatpush1.bf16.msra.mxu0 0
      %1867 = vmatprep.subr.bf16.mxu0 0
      %1868 = vmatpush1.bf16.msra.mxu0 0
      %1869 = vmatprep.subr.bf16.mxu0 0
      %1870 = vmatpush1.bf16.msra.mxu0 0
      %1871 = vmatprep.subr.bf16.mxu0 %v1007
      %1872 = vmatpush1.bf16.msra.mxu0 %v1006
      %1873 = vmatprep.subr.bf16.mxu0 %v1005
      %1874 = vmatpush1.bf16.msra.mxu0 %v1004
      %1875 = vmatprep.subr.bf16.mxu0 0
      %1876 = vmatpush2.bf16.msra.mxu0 0
      %1877 = vmatprep.subr.bf16.mxu0 0
      %1878 = vmatpush2.bf16.msra.mxu0 0
      %1879 = vmatprep.subr.bf16.mxu0 0
      %1880 = vmatpush2.bf16.msra.mxu0 0
      %1881 = vmatprep.subr.bf16.mxu0 0
      %1882 = vmatpush2.bf16.msra.mxu0 0
      %1883 = vmatprep.subr.bf16.mxu0 0
      %1884 = vmatpush2.bf16.msra.mxu0 0
      %1885 = vmatprep.subr.bf16.mxu0 0
      %1886 = vmatpush2.bf16.msra.mxu0 0
      %1887 = vmatprep.subr.bf16.mxu0 0
      %1888 = vmatpush2.bf16.msra.mxu0 0
      %1889 = vmatprep.subr.bf16.mxu0 0
      %1890 = vmatpush2.bf16.msra.mxu0 0
      %1891 = vmatprep.mubr.bf16.mxu0 0
      %1892 = vmatmul.mubr.bf16.gmra.mxu0 %v1857
      %v1893 = vpop.f32.mrf.mxu0
      %v1894 = vadd.f32 %v958, %v1893
      %v1895 = vpop.f32.mrf.mxu0
      %v1896 = vadd.f32 %v960, %v1895
      %v1897 = vpop.f32.mrf.mxu0
      %v1898 = vpop.f32.mrf.mxu0
      %1899 = vdwg.mxu0
      %s1900 = scalar_lea.vmem [#allocation3], 80
      %1901 = vst [vmem:[%s1900] sm:$0xff] %v1894
      %1902 = vst [vmem:[%s1900 + $0x8] sm:$0xff] %v1896
    $region45: #{seq2seq_forward.1} parent=1 // pred_fallthru
      _
    %s1903 = scalar_lea.vmem [#allocation3], 80
    %v1904 = vld [vmem:[%s1903] sm:$0xff]
    %v1905 = vld [vmem:[%s1903 + $0x8] sm:$0xff]
    %v1906 = vadd.f32 %v1904, %v1840
    %v1907 = vxor.u32 %v1906, 2147483648
    %v1908 = vmul.f32 %v1907, 1.442695
    %v1909 = vpow.pop %v1908
    %v1910 = vadd.f32 %v1909, 1.0
    %v1911 = vrcp.pop %v1910
    %v1912 = vmul.f32 1.0, %v1911
    %1914 = vrot.lane.b32.xlu0 %v1840, 64
    %v1915 = vpop.permute.xlu0 %1914
    %v1917 = vmul.f32 %v1912, %v1915
    %1919 = vrot.lane.b32.xlu0 %v1917, 64
    %v1920 = vpop.permute.xlu0 %1919
    %v1922 = vadd.f32 %v1904, %v1920
    %v1923 = vtanh.pop %v1922
    %v1924 = vsub.f32 1.0, %v1912
    %1926 = vrot.lane.b32.xlu0 %v1923, 96
    %v1927 = vpop.permute.xlu0 %1926
    %v1929 = vmul.f32 %v1924, %v1927
    %v1930 = vmul.f32 %v1912, %v1788
    %v1931 = vadd.f32 %v1929, %v1930
    %v1932 = vpack.c.bf16 %v1931, %v1931
    %1934 = vrot.lane.b32.xlu0 %v1932, 96
    %v1935 = vpop.permute.xlu0 %1934
    %v1937 = vsel %vm86, %v1935, 0
    %1939 = vmatprep.subr.bf16.mxu0 0
    %1940 = vmatpush1.bf16.msra.mxu0 0
    %1941 = vmatprep.subr.bf16.mxu0 0
    %1942 = vmatpush1.bf16.msra.mxu0 0
    %1943 = vmatprep.subr.bf16.mxu0 0
    %1944 = vmatpush1.bf16.msra.mxu0 0
    %1945 = vmatprep.subr.bf16.mxu0 0
    %1946 = vmatpush1.bf16.msra.mxu0 0
    %1947 = vmatprep.subr.bf16.mxu0 0
    %1948 = vmatpush1.bf16.msra.mxu0 0
    %1949 = vmatprep.subr.bf16.mxu0 0
    %1950 = vmatpush1.bf16.msra.mxu0 0
    %1951 = vmatprep.subr.bf16.mxu0 %v1144
    %1952 = vmatpush1.bf16.msra.mxu0 %v1143
    %1953 = vmatprep.subr.bf16.mxu0 %v1142
    %1954 = vmatpush1.bf16.msra.mxu0 %v1141
    %1955 = vmatprep.subr.bf16.mxu0 0
    %1956 = vmatpush2.bf16.msra.mxu0 0
    %1957 = vmatprep.subr.bf16.mxu0 0
    %1958 = vmatpush2.bf16.msra.mxu0 0
    %1959 = vmatprep.subr.bf16.mxu0 0
    %1960 = vmatpush2.bf16.msra.mxu0 0
    %1961 = vmatprep.subr.bf16.mxu0 0
    %1962 = vmatpush2.bf16.msra.mxu0 0
    %1963 = vmatprep.subr.bf16.mxu0 0
    %1964 = vmatpush2.bf16.msra.mxu0 0
    %1965 = vmatprep.subr.bf16.mxu0 0
    %1966 = vmatpush2.bf16.msra.mxu0 0
    %1967 = vmatprep.subr.bf16.mxu0 0
    %1968 = vmatpush2.bf16.msra.mxu0 0
    %1969 = vmatprep.subr.bf16.mxu0 0
    %1970 = vmatpush2.bf16.msra.mxu0 0
    %1971 = vmatprep.mubr.bf16.mxu0 0
    %1972 = vmatmul.mubr.bf16.gmra.mxu0 %v1937
    %v1973 = vpop.f32.mrf.mxu0
    %v1974 = vadd.f32 0.0, %v1973
    %v1975 = vpop.f32.mrf.mxu0
    %v1976 = vadd.f32 0.0, %v1975
    %v1977 = vpop.f32.mrf.mxu0
    %v1978 = vpop.f32.mrf.mxu0
    %1979 = vdwg.mxu0
    %v1980 = vadd.f32 %v1905, %v1976
    %s1981 = scalar_lea.vmem %s5, 40
    %1982 = vst [vmem:[%s1981] sm:$0xff] %v1980
    %v1983 = vadd.f32 %v1974, %v883
    %s1984 = sld [smem:[#allocation4 + $0x5]]
    %p1985 = scmp.eq.s32.totalorder %s1984, 0
    // Predicated region
    $region46: #{seq2seq_forward.1} parent=1 // pred_check
      %p1986 = pneg %p1985
    $region47: #{seq2seq_forward.1} parent=1 // pred_check_branch
      %1988 = sbr.rel (%p1986) target = $region49
    $region48: #{seq2seq_forward.1} parent=1 // pred_region
      %1989 = vmax.xlane.f32.xlu0 %v1980
      %v1990 = vpop.xlane.xlu0 %1989
      %vm1991 = vcmp.eq.f32.partialorder %v1980, %v1990
      %v1992 = vsel %vm1991, %v36, 128.0
      %1993 = vmin.xlane.f32.xlu0 %v1992
      %v1994 = vpop.xlane.xlu0 %1993
      %vm1995 = vcmp.eq.f32.partialorder %v36, %v1994
      %v1996 = vsel %vm1995, 1, 0
      %v1997 = vcvt.s32.f32 %v1996
      %v1998 = vpack.c.bf16 %v1997, %v1997
      %v2000 = vsel %vm86, %v1998, 0
      %2002 = vmatprep.subr.bf16.mxu0 0
      %2003 = vmatpush1.bf16.msra.mxu0 0
      %2004 = vmatprep.subr.bf16.mxu0 0
      %2005 = vmatpush1.bf16.msra.mxu0 0
      %2006 = vmatprep.subr.bf16.mxu0 0
      %2007 = vmatpush1.bf16.msra.mxu0 0
      %2008 = vmatprep.subr.bf16.mxu0 0
      %2009 = vmatpush1.bf16.msra.mxu0 0
      %2010 = vmatprep.subr.bf16.mxu0 0
      %2011 = vmatpush1.bf16.msra.mxu0 0
      %2012 = vmatprep.subr.bf16.mxu0 0
      %2013 = vmatpush1.bf16.msra.mxu0 0
      %2014 = vmatprep.subr.bf16.mxu0 %v1007
      %2015 = vmatpush1.bf16.msra.mxu0 %v1006
      %2016 = vmatprep.subr.bf16.mxu0 %v1005
      %2017 = vmatpush1.bf16.msra.mxu0 %v1004
      %2018 = vmatprep.subr.bf16.mxu0 0
      %2019 = vmatpush2.bf16.msra.mxu0 0
      %2020 = vmatprep.subr.bf16.mxu0 0
      %2021 = vmatpush2.bf16.msra.mxu0 0
      %2022 = vmatprep.subr.bf16.mxu0 0
      %2023 = vmatpush2.bf16.msra.mxu0 0
      %2024 = vmatprep.subr.bf16.mxu0 0
      %2025 = vmatpush2.bf16.msra.mxu0 0
      %2026 = vmatprep.subr.bf16.mxu0 0
      %2027 = vmatpush2.bf16.msra.mxu0 0
      %2028 = vmatprep.subr.bf16.mxu0 0
      %2029 = vmatpush2.bf16.msra.mxu0 0
      %2030 = vmatprep.subr.bf16.mxu0 0
      %2031 = vmatpush2.bf16.msra.mxu0 0
      %2032 = vmatprep.subr.bf16.mxu0 0
      %2033 = vmatpush2.bf16.msra.mxu0 0
      %2034 = vmatprep.mubr.bf16.mxu0 0
      %2035 = vmatmul.mubr.bf16.gmra.mxu0 %v2000
      %v2036 = vpop.f32.mrf.mxu0
      %v2037 = vadd.f32 %v958, %v2036
      %v2038 = vpop.f32.mrf.mxu0
      %v2039 = vadd.f32 %v960, %v2038
      %v2040 = vpop.f32.mrf.mxu0
      %v2041 = vpop.f32.mrf.mxu0
      %2042 = vdwg.mxu0
      %s2043 = scalar_lea.vmem [#allocation3], 96
      %2044 = vst [vmem:[%s2043] sm:$0xff] %v2037
      %2045 = vst [vmem:[%s2043 + $0x8] sm:$0xff] %v2039
    $region49: #{seq2seq_forward.1} parent=1 // pred_fallthru
      _
    %s2046 = scalar_lea.vmem [#allocation3], 96
    %v2047 = vld [vmem:[%s2046] sm:$0xff]
    %v2048 = vld [vmem:[%s2046 + $0x8] sm:$0xff]
    %v2049 = vadd.f32 %v2047, %v1983
    %v2050 = vxor.u32 %v2049, 2147483648
    %v2051 = vmul.f32 %v2050, 1.442695
    %v2052 = vpow.pop %v2051
    %v2053 = vadd.f32 %v2052, 1.0
    %v2054 = vrcp.pop %v2053
    %v2055 = vmul.f32 1.0, %v2054
    %2057 = vrot.lane.b32.xlu0 %v1983, 64
    %v2058 = vpop.permute.xlu0 %2057
    %v2060 = vmul.f32 %v2055, %v2058
    %2062 = vrot.lane.b32.xlu0 %v2060, 64
    %v2063 = vpop.permute.xlu0 %2062
    %v2065 = vadd.f32 %v2047, %v2063
    %v2066 = vtanh.pop %v2065
    %v2067 = vsub.f32 1.0, %v2055
    %2069 = vrot.lane.b32.xlu0 %v2066, 96
    %v2070 = vpop.permute.xlu0 %2069
    %v2072 = vmul.f32 %v2067, %v2070
    %v2073 = vmul.f32 %v2055, %v1931
    %v2074 = vadd.f32 %v2072, %v2073
    %v2075 = vpack.c.bf16 %v2074, %v2074
    %2077 = vrot.lane.b32.xlu0 %v2075, 96
    %v2078 = vpop.permute.xlu0 %2077
    %v2080 = vsel %vm86, %v2078, 0
    %2082 = vmatprep.subr.bf16.mxu0 0
    %2083 = vmatpush1.bf16.msra.mxu0 0
    %2084 = vmatprep.subr.bf16.mxu0 0
    %2085 = vmatpush1.bf16.msra.mxu0 0
    %2086 = vmatprep.subr.bf16.mxu0 0
    %2087 = vmatpush1.bf16.msra.mxu0 0
    %2088 = vmatprep.subr.bf16.mxu0 0
    %2089 = vmatpush1.bf16.msra.mxu0 0
    %2090 = vmatprep.subr.bf16.mxu0 0
    %2091 = vmatpush1.bf16.msra.mxu0 0
    %2092 = vmatprep.subr.bf16.mxu0 0
    %2093 = vmatpush1.bf16.msra.mxu0 0
    %2094 = vmatprep.subr.bf16.mxu0 %v1144
    %2095 = vmatpush1.bf16.msra.mxu0 %v1143
    %2096 = vmatprep.subr.bf16.mxu0 %v1142
    %2097 = vmatpush1.bf16.msra.mxu0 %v1141
    %2098 = vmatprep.subr.bf16.mxu0 0
    %2099 = vmatpush2.bf16.msra.mxu0 0
    %2100 = vmatprep.subr.bf16.mxu0 0
    %2101 = vmatpush2.bf16.msra.mxu0 0
    %2102 = vmatprep.subr.bf16.mxu0 0
    %2103 = vmatpush2.bf16.msra.mxu0 0
    %2104 = vmatprep.subr.bf16.mxu0 0
    %2105 = vmatpush2.bf16.msra.mxu0 0
    %2106 = vmatprep.subr.bf16.mxu0 0
    %2107 = vmatpush2.bf16.msra.mxu0 0
    %2108 = vmatprep.subr.bf16.mxu0 0
    %2109 = vmatpush2.bf16.msra.mxu0 0
    %2110 = vmatprep.subr.bf16.mxu0 0
    %2111 = vmatpush2.bf16.msra.mxu0 0
    %2112 = vmatprep.subr.bf16.mxu0 0
    %2113 = vmatpush2.bf16.msra.mxu0 0
    %2114 = vmatprep.mubr.bf16.mxu0 0
    %2115 = vmatmul.mubr.bf16.gmra.mxu0 %v2080
    %v2116 = vpop.f32.mrf.mxu0
    %v2117 = vadd.f32 0.0, %v2116
    %v2118 = vpop.f32.mrf.mxu0
    %v2119 = vadd.f32 0.0, %v2118
    %v2120 = vpop.f32.mrf.mxu0
    %v2121 = vpop.f32.mrf.mxu0
    %2122 = vdwg.mxu0
    %v2123 = vadd.f32 %v2048, %v2119
    %s2124 = scalar_lea.vmem %s5, 48
    %2125 = vst [vmem:[%s2124] sm:$0xff] %v2123
    %v2126 = vadd.f32 %v2117, %v883
    %s2127 = sld [smem:[#allocation4 + $0x6]]
    %p2128 = scmp.eq.s32.totalorder %s2127, 0
    // Predicated region
    $region50: #{seq2seq_forward.1} parent=1 // pred_check
      %p2129 = pneg %p2128
    $region51: #{seq2seq_forward.1} parent=1 // pred_check_branch
      %2131 = sbr.rel (%p2129) target = $region53
    $region52: #{seq2seq_forward.1} parent=1 // pred_region
      %2132 = vmax.xlane.f32.xlu0 %v2123
      %v2133 = vpop.xlane.xlu0 %2132
      %vm2134 = vcmp.eq.f32.partialorder %v2123, %v2133
      %v2135 = vsel %vm2134, %v36, 128.0
      %2136 = vmin.xlane.f32.xlu0 %v2135
      %v2137 = vpop.xlane.xlu0 %2136
      %vm2138 = vcmp.eq.f32.partialorder %v36, %v2137
      %v2139 = vsel %vm2138, 1, 0
      %v2140 = vcvt.s32.f32 %v2139
      %v2141 = vpack.c.bf16 %v2140, %v2140
      %v2143 = vsel %vm86, %v2141, 0
      %2145 = vmatprep.subr.bf16.mxu0 0
      %2146 = vmatpush1.bf16.msra.mxu0 0
      %2147 = vmatprep.subr.bf16.mxu0 0
      %2148 = vmatpush1.bf16.msra.mxu0 0
      %2149 = vmatprep.subr.bf16.mxu0 0
      %2150 = vmatpush1.bf16.msra.mxu0 0
      %2151 = vmatprep.subr.bf16.mxu0 0
      %2152 = vmatpush1.bf16.msra.mxu0 0
      %2153 = vmatprep.subr.bf16.mxu0 0
      %2154 = vmatpush1.bf16.msra.mxu0 0
      %2155 = vmatprep.subr.bf16.mxu0 0
      %2156 = vmatpush1.bf16.msra.mxu0 0
      %2157 = vmatprep.subr.bf16.mxu0 %v1007
      %2158 = vmatpush1.bf16.msra.mxu0 %v1006
      %2159 = vmatprep.subr.bf16.mxu0 %v1005
      %2160 = vmatpush1.bf16.msra.mxu0 %v1004
      %2161 = vmatprep.subr.bf16.mxu0 0
      %2162 = vmatpush2.bf16.msra.mxu0 0
      %2163 = vmatprep.subr.bf16.mxu0 0
      %2164 = vmatpush2.bf16.msra.mxu0 0
      %2165 = vmatprep.subr.bf16.mxu0 0
      %2166 = vmatpush2.bf16.msra.mxu0 0
      %2167 = vmatprep.subr.bf16.mxu0 0
      %2168 = vmatpush2.bf16.msra.mxu0 0
      %2169 = vmatprep.subr.bf16.mxu0 0
      %2170 = vmatpush2.bf16.msra.mxu0 0
      %2171 = vmatprep.subr.bf16.mxu0 0
      %2172 = vmatpush2.bf16.msra.mxu0 0
      %2173 = vmatprep.subr.bf16.mxu0 0
      %2174 = vmatpush2.bf16.msra.mxu0 0
      %2175 = vmatprep.subr.bf16.mxu0 0
      %2176 = vmatpush2.bf16.msra.mxu0 0
      %2177 = vmatprep.mubr.bf16.mxu0 0
      %2178 = vmatmul.mubr.bf16.gmra.mxu0 %v2143
      %v2179 = vpop.f32.mrf.mxu0
      %v2180 = vadd.f32 %v958, %v2179
      %v2181 = vpop.f32.mrf.mxu0
      %v2182 = vadd.f32 %v960, %v2181
      %v2183 = vpop.f32.mrf.mxu0
      %v2184 = vpop.f32.mrf.mxu0
      %2185 = vdwg.mxu0
      %s2186 = scalar_lea.vmem [#allocation3], 112
      %2187 = vst [vmem:[%s2186] sm:$0xff] %v2180
      %2188 = vst [vmem:[%s2186 + $0x8] sm:$0xff] %v2182
    $region53: #{seq2seq_forward.1} parent=1 // pred_fallthru
      _
    %s2189 = scalar_lea.vmem [#allocation3], 112
    %v2190 = vld [vmem:[%s2189] sm:$0xff]
    %v2191 = vld [vmem:[%s2189 + $0x8] sm:$0xff]
    %v2192 = vadd.f32 %v2190, %v2126
    %v2193 = vxor.u32 %v2192, 2147483648
    %v2194 = vmul.f32 %v2193, 1.442695
    %v2195 = vpow.pop %v2194
    %v2196 = vadd.f32 %v2195, 1.0
    %v2197 = vrcp.pop %v2196
    %v2198 = vmul.f32 1.0, %v2197
    %2200 = vrot.lane.b32.xlu0 %v2126, 64
    %v2201 = vpop.permute.xlu0 %2200
    %v2203 = vmul.f32 %v2198, %v2201
    %2205 = vrot.lane.b32.xlu0 %v2203, 64
    %v2206 = vpop.permute.xlu0 %2205
    %v2208 = vadd.f32 %v2190, %v2206
    %v2209 = vtanh.pop %v2208
    %v2210 = vsub.f32 1.0, %v2198
    %2212 = vrot.lane.b32.xlu0 %v2209, 96
    %v2213 = vpop.permute.xlu0 %2212
    %v2215 = vmul.f32 %v2210, %v2213
    %v2216 = vmul.f32 %v2198, %v2074
    %v2217 = vadd.f32 %v2215, %v2216
    %v2218 = vpack.c.bf16 %v2217, %v2217
    %2220 = vrot.lane.b32.xlu0 %v2218, 96
    %v2221 = vpop.permute.xlu0 %2220
    %v2223 = vsel %vm86, %v2221, 0
    %2225 = vmatprep.subr.bf16.mxu0 0
    %2226 = vmatpush1.bf16.msra.mxu0 0
    %2227 = vmatprep.subr.bf16.mxu0 0
    %2228 = vmatpush1.bf16.msra.mxu0 0
    %2229 = vmatprep.subr.bf16.mxu0 0
    %2230 = vmatpush1.bf16.msra.mxu0 0
    %2231 = vmatprep.subr.bf16.mxu0 0
    %2232 = vmatpush1.bf16.msra.mxu0 0
    %2233 = vmatprep.subr.bf16.mxu0 0
    %2234 = vmatpush1.bf16.msra.mxu0 0
    %2235 = vmatprep.subr.bf16.mxu0 0
    %2236 = vmatpush1.bf16.msra.mxu0 0
    %2237 = vmatprep.subr.bf16.mxu0 %v1144
    %2238 = vmatpush1.bf16.msra.mxu0 %v1143
    %2239 = vmatprep.subr.bf16.mxu0 %v1142
    %2240 = vmatpush1.bf16.msra.mxu0 %v1141
    %2241 = vmatprep.subr.bf16.mxu0 0
    %2242 = vmatpush2.bf16.msra.mxu0 0
    %2243 = vmatprep.subr.bf16.mxu0 0
    %2244 = vmatpush2.bf16.msra.mxu0 0
    %2245 = vmatprep.subr.bf16.mxu0 0
    %2246 = vmatpush2.bf16.msra.mxu0 0
    %2247 = vmatprep.subr.bf16.mxu0 0
    %2248 = vmatpush2.bf16.msra.mxu0 0
    %2249 = vmatprep.subr.bf16.mxu0 0
    %2250 = vmatpush2.bf16.msra.mxu0 0
    %2251 = vmatprep.subr.bf16.mxu0 0
    %2252 = vmatpush2.bf16.msra.mxu0 0
    %2253 = vmatprep.subr.bf16.mxu0 0
    %2254 = vmatpush2.bf16.msra.mxu0 0
    %2255 = vmatprep.subr.bf16.mxu0 0
    %2256 = vmatpush2.bf16.msra.mxu0 0
    %2257 = vmatprep.mubr.bf16.mxu0 0
    %2258 = vmatmul.mubr.bf16.gmra.mxu0 %v2223
    %v2259 = vpop.f32.mrf.mxu0
    %v2260 = vpop.f32.mrf.mxu0
    %v2261 = vadd.f32 0.0, %v2260
    %v2262 = vpop.f32.mrf.mxu0
    %v2263 = vpop.f32.mrf.mxu0
    %2264 = vdwg.mxu0
    %v2265 = vadd.f32 %v2191, %v2261
    %s2266 = scalar_lea.vmem %s5, 56
    %2267 = vst [vmem:[%s2266] sm:$0xff] %v2265
    // Predicated region
    $region54: #{seq2seq_forward.1} parent=1 // pred_check
      _
    $region55: #{seq2seq_forward.1} parent=1 // pred_check_branch
      %2269 = sbr.rel (0) target = $region57
    $region56: #{seq2seq_forward.1} parent=1 // pred_region
      _
    $region57: #{seq2seq_forward.1} parent=1 // pred_fallthru
      _
    // Predicated region
    $region58: #{seq2seq_forward.1} parent=1 // pred_check
      _
    $region59: #{seq2seq_forward.1} parent=1 // pred_check_branch
      %2271 = sbr.rel (0) target = $region61
    $region60: #{seq2seq_forward.1} parent=1 // pred_region
      _
    $region61: #{seq2seq_forward.1} parent=1 // pred_fallthru
      _
    %2272 = vsyncpa [#allocation5], 1

</llo_original>
